<compile_context>
chip_gen: v7x
topology: tpu7x:2x2x1
jax: 0.10.0
libtpu: 0.0.40
codegen_flags: <defaults>
</compile_context>

<pallas_src>
import jax
import jax.numpy as jnp
from jax.experimental import pallas as pl
from jax.experimental.pallas import tpu as pltpu

# Logical dims of the MLP.
D_IN, D_H1, D_H2, D_H3, D_OUT = 28 * 28, 1024, 512, 256, 1
D_OUT_PAD = 128       # classifier output padded to one full lane group
TB_MAX = 256          # batch tile: fills the 256x256 MXU on v6e/v7x, fine on v5e


def _leaky_relu(v):
    # nn.LeakyReLU() default negative_slope = 0.01
    return jnp.where(v >= 0, v, 0.01 * v)


def disc_kernel(x_ref, w1_ref, b1_ref, w2_ref, b2_ref,
                w3_ref, b3_ref, w4_ref, b4_ref, o_ref):
    """Fused 4-layer MLP for one batch tile.

    bf16 operands feed the MXU, accumulation is f32, bias/LeakyReLU run in f32
    vregs on the VPU. Weights are VMEM-resident across all grid steps.
    """
    h = jnp.dot(x_ref[...], w1_ref[...],
                preferred_element_type=jnp.float32) + b1_ref[...]
    h = _leaky_relu(h)
    # dropout1: identity (eval mode)
    h = jnp.dot(h.astype(jnp.bfloat16), w2_ref[...],
                preferred_element_type=jnp.float32) + b2_ref[...]
    h = _leaky_relu(h)
    # dropout2: identity (eval mode)
    h = jnp.dot(h.astype(jnp.bfloat16), w3_ref[...],
                preferred_element_type=jnp.float32) + b3_ref[...]
    h = _leaky_relu(h)
    # dropout3: identity (eval mode)
    o_ref[...] = jnp.dot(h.astype(jnp.bfloat16), w4_ref[...],
                         preferred_element_type=jnp.float32) + b4_ref[...]


def init_params(key):
    """Deterministic init matching PyTorch Linear shapes (stored as (in, out))."""
    dims = [(D_IN, D_H1), (D_H1, D_H2), (D_H2, D_H3), (D_H3, D_OUT)]
    params = {}
    for i, (fin, fout) in enumerate(dims, start=1):
        key, kw, kb = jax.random.split(key, 3)
        bound = 1.0 / jnp.sqrt(jnp.float32(fin))
        params[f"w{i}"] = jax.random.uniform(
            kw, (fin, fout), jnp.float32, -bound, bound)
        params[f"b{i}"] = jax.random.uniform(
            kb, (1, fout), jnp.float32, -bound, bound)
    return params


def prepare_params(params):
    """One-time prep (outside the per-call path): bf16 weights, pad classifier."""
    w4 = jnp.zeros((D_H3, D_OUT_PAD), jnp.float32).at[:, :D_OUT].set(params["w4"])
    b4 = jnp.zeros((1, D_OUT_PAD), jnp.float32).at[:, :D_OUT].set(params["b4"])
    return dict(
        w1=params["w1"].astype(jnp.bfloat16), b1=params["b1"],
        w2=params["w2"].astype(jnp.bfloat16), b2=params["b2"],
        w3=params["w3"].astype(jnp.bfloat16), b3=params["b3"],
        w4=w4.astype(jnp.bfloat16), b4=b4,
    )


@jax.jit
def discriminator_forward(x, prep):
    """x: (B, 1, 28, 28) float32 (NCHW, like PyTorch). Returns (B, 1) float32."""
    B = x.shape[0]
    xf = x.reshape(B, -1).astype(jnp.bfloat16)          # (B, 784)

    # Pad only the batch dim: to a sublane multiple, then to a tile multiple.
    b_pad = max(8, -(-B // 8) * 8)
    tb = min(TB_MAX, b_pad)
    b_pad = -(-b_pad // tb) * tb
    if b_pad > B:
        xf = jnp.pad(xf, ((0, b_pad - B), (0, 0)))
    n_tiles = b_pad // tb

    tile_spec = lambda shape: pl.BlockSpec(shape, lambda i: (i, 0))
    const_spec = lambda shape: pl.BlockSpec(shape, lambda i: (0, 0))

    out = pl.pallas_call(
        disc_kernel,
        out_shape=jax.ShapeDtypeStruct((b_pad, D_OUT_PAD), jnp.float32),
        grid=(n_tiles,),
        in_specs=[
            tile_spec((tb, D_IN)),                          # x: streamed per tile
            const_spec((D_IN, D_H1)), const_spec((1, D_H1)),
            const_spec((D_H1, D_H2)), const_spec((1, D_H2)),
            const_spec((D_H2, D_H3)), const_spec((1, D_H3)),
            const_spec((D_H3, D_OUT_PAD)), const_spec((1, D_OUT_PAD)),
        ],
        out_specs=tile_spec((tb, D_OUT_PAD)),
        compiler_params=pltpu.CompilerParams(
            dimension_semantics=("parallel",),
            vmem_limit_bytes=40 << 20,
        ),
    )(xf, prep["w1"], prep["b1"], prep["w2"], prep["b2"],
      prep["w3"], prep["b3"], prep["w4"], prep["b4"])

    return out[:B, :D_OUT]                                 # (B, 1)


def _reference_forward(x, params):
    """Plain-JAX f32 reference for a correctness check."""
    h = x.reshape(x.shape[0], -1)
    h = _leaky_relu(h @ params["w1"] + params["b1"])
    h = _leaky_relu(h @ params["w2"] + params["b2"])
    h = _leaky_relu(h @ params["w3"] + params["b3"])
    return h @ params["w4"] + params["b4"]


if __name__ == "__main__":
    key = jax.random.PRNGKey(0)
    kp, kx1, kx2 = jax.random.split(key, 3)
    params = init_params(kp)
    prep = prepare_params(params)

    # Small deterministic input, NCHW like the PyTorch module expects.
    x = jax.random.normal(kx1, (2, 1, 28, 28), jnp.float32)
    out = jax.block_until_ready(discriminator_forward(x, prep))
    ref = _reference_forward(x, params)
    assert out.shape == (2, 1), out.shape
    # bf16 weights/activations vs f32 reference -> loosened tolerance.
    assert jnp.allclose(out, ref, atol=3e-2, rtol=3e-2), (out, ref)

    # Also exercise the multi-tile (batch-padded) path.
    xb = jax.random.normal(kx2, (300, 1, 28, 28), jnp.float32)
    outb = jax.block_until_ready(discriminator_forward(xb, prep))
    refb = _reference_forward(xb, params)
    assert outb.shape == (300, 1), outb.shape
    assert jnp.allclose(outb, refb, atol=3e-2, rtol=3e-2)

    print("KERNEL_OK")
</pallas_src>

<mosaic_0001>
module attributes {stable_mosaic.version = 11 : i64} {
  func.func @disc_kernel(%arg0: i32, %arg1: memref<8x784xbf16, #tpu.memory_space<vmem>>, %arg2: memref<784x1024xbf16, #tpu.memory_space<vmem>>, %arg3: memref<1x1024xf32, #tpu.memory_space<vmem>>, %arg4: memref<1024x512xbf16, #tpu.memory_space<vmem>>, %arg5: memref<1x512xf32, #tpu.memory_space<vmem>>, %arg6: memref<512x256xbf16, #tpu.memory_space<vmem>>, %arg7: memref<1x256xf32, #tpu.memory_space<vmem>>, %arg8: memref<256x128xbf16, #tpu.memory_space<vmem>>, %arg9: memref<1x128xf32, #tpu.memory_space<vmem>>, %arg10: memref<8x128xf32, #tpu.memory_space<vmem>>) attributes {dimension_semantics = [#tpu.dimension_semantics<parallel>], iteration_bounds = array<i64: 1>, scalar_prefetch = 0 : i64, scratch_operands = 0 : i64, tpu.core_type = #tpu.core_type<tc>, window_params = [{transform_indices = @transform_0, window_bounds = array<i64: 8, 784>}, {pipeline_mode = #tpu.pipeline_mode<synchronous>, transform_indices = @transform_1, window_bounds = array<i64: 784, 1024>}, {pipeline_mode = #tpu.pipeline_mode<synchronous>, transform_indices = @transform_2, window_bounds = array<i64: 1, 1024>}, {pipeline_mode = #tpu.pipeline_mode<synchronous>, transform_indices = @transform_3, window_bounds = array<i64: 1024, 512>}, {pipeline_mode = #tpu.pipeline_mode<synchronous>, transform_indices = @transform_4, window_bounds = array<i64: 1, 512>}, {pipeline_mode = #tpu.pipeline_mode<synchronous>, transform_indices = @transform_5, window_bounds = array<i64: 512, 256>}, {pipeline_mode = #tpu.pipeline_mode<synchronous>, transform_indices = @transform_6, window_bounds = array<i64: 1, 256>}, {pipeline_mode = #tpu.pipeline_mode<synchronous>, transform_indices = @transform_7, window_bounds = array<i64: 256, 128>}, {pipeline_mode = #tpu.pipeline_mode<synchronous>, transform_indices = @transform_8, window_bounds = array<i64: 1, 128>}, {transform_indices = @transform_9, window_bounds = array<i64: 8, 128>}]} {
    %c0 = arith.constant 0 : index
    %c0_0 = arith.constant 0 : index
    %0 = vector.load %arg1[%c0, %c0_0] : memref<8x784xbf16, #tpu.memory_space<vmem>>, vector<8x784xbf16>
    %c0_1 = arith.constant 0 : index
    %c0_2 = arith.constant 0 : index
    %1 = vector.load %arg2[%c0_1, %c0_2] : memref<784x1024xbf16, #tpu.memory_space<vmem>>, vector<784x1024xbf16>
    %cst = arith.constant dense<0.000000e+00> : vector<8x1024xf32>
    %2 = tpu.matmul %0, %1, %cst {dimension_numbers = #tpu.dot_dimension_numbers<[1], [0], [0], [1], [0, 0, 1, 1], [], []>} : vector<8x784xbf16>, vector<784x1024xbf16>, vector<8x1024xf32> -> vector<8x1024xf32>
    %c0_3 = arith.constant 0 : index
    %c0_4 = arith.constant 0 : index
    %3 = vector.load %arg3[%c0_3, %c0_4] : memref<1x1024xf32, #tpu.memory_space<vmem>>, vector<1x1024xf32>
    %4 = vector.broadcast %3 : vector<1x1024xf32> to vector<8x1024xf32>
    %5 = arith.addf %2, %4 : vector<8x1024xf32>
    %cst_5 = arith.constant 0.000000e+00 : f32
    %6 = vector.broadcast %cst_5 : f32 to vector<8x1024xf32>
    %7 = arith.cmpf oge, %5, %6 : vector<8x1024xf32>
    %cst_6 = arith.constant 0.00999999977 : f32
    %8 = vector.broadcast %cst_6 : f32 to vector<8x1024xf32>
    %9 = arith.mulf %8, %5 : vector<8x1024xf32>
    %10 = arith.select %7, %5, %9 : vector<8x1024xi1>, vector<8x1024xf32>
    %11 = arith.truncf %10 : vector<8x1024xf32> to vector<8x1024xbf16>
    %c0_7 = arith.constant 0 : index
    %c0_8 = arith.constant 0 : index
    %12 = vector.load %arg4[%c0_7, %c0_8] : memref<1024x512xbf16, #tpu.memory_space<vmem>>, vector<1024x512xbf16>
    %cst_9 = arith.constant dense<0.000000e+00> : vector<8x512xf32>
    %13 = tpu.matmul %11, %12, %cst_9 {dimension_numbers = #tpu.dot_dimension_numbers<[1], [0], [0], [1], [0, 0, 1, 1], [], []>} : vector<8x1024xbf16>, vector<1024x512xbf16>, vector<8x512xf32> -> vector<8x512xf32>
    %c0_10 = arith.constant 0 : index
    %c0_11 = arith.constant 0 : index
    %14 = vector.load %arg5[%c0_10, %c0_11] : memref<1x512xf32, #tpu.memory_space<vmem>>, vector<1x512xf32>
    %15 = vector.broadcast %14 : vector<1x512xf32> to vector<8x512xf32>
    %16 = arith.addf %13, %15 : vector<8x512xf32>
    %cst_12 = arith.constant 0.000000e+00 : f32
    %17 = vector.broadcast %cst_12 : f32 to vector<8x512xf32>
    %18 = arith.cmpf oge, %16, %17 : vector<8x512xf32>
    %cst_13 = arith.constant 0.00999999977 : f32
    %19 = vector.broadcast %cst_13 : f32 to vector<8x512xf32>
    %20 = arith.mulf %19, %16 : vector<8x512xf32>
    %21 = arith.select %18, %16, %20 : vector<8x512xi1>, vector<8x512xf32>
    %22 = arith.truncf %21 : vector<8x512xf32> to vector<8x512xbf16>
    %c0_14 = arith.constant 0 : index
    %c0_15 = arith.constant 0 : index
    %23 = vector.load %arg6[%c0_14, %c0_15] : memref<512x256xbf16, #tpu.memory_space<vmem>>, vector<512x256xbf16>
    %cst_16 = arith.constant dense<0.000000e+00> : vector<8x256xf32>
    %24 = tpu.matmul %22, %23, %cst_16 {dimension_numbers = #tpu.dot_dimension_numbers<[1], [0], [0], [1], [0, 0, 1, 1], [], []>} : vector<8x512xbf16>, vector<512x256xbf16>, vector<8x256xf32> -> vector<8x256xf32>
    %c0_17 = arith.constant 0 : index
    %c0_18 = arith.constant 0 : index
    %25 = vector.load %arg7[%c0_17, %c0_18] : memref<1x256xf32, #tpu.memory_space<vmem>>, vector<1x256xf32>
    %26 = vector.broadcast %25 : vector<1x256xf32> to vector<8x256xf32>
    %27 = arith.addf %24, %26 : vector<8x256xf32>
    %cst_19 = arith.constant 0.000000e+00 : f32
    %28 = vector.broadcast %cst_19 : f32 to vector<8x256xf32>
    %29 = arith.cmpf oge, %27, %28 : vector<8x256xf32>
    %cst_20 = arith.constant 0.00999999977 : f32
    %30 = vector.broadcast %cst_20 : f32 to vector<8x256xf32>
    %31 = arith.mulf %30, %27 : vector<8x256xf32>
    %32 = arith.select %29, %27, %31 : vector<8x256xi1>, vector<8x256xf32>
    %33 = arith.truncf %32 : vector<8x256xf32> to vector<8x256xbf16>
    %c0_21 = arith.constant 0 : index
    %c0_22 = arith.constant 0 : index
    %34 = vector.load %arg8[%c0_21, %c0_22] : memref<256x128xbf16, #tpu.memory_space<vmem>>, vector<256x128xbf16>
    %cst_23 = arith.constant dense<0.000000e+00> : vector<8x128xf32>
    %35 = tpu.matmul %33, %34, %cst_23 {dimension_numbers = #tpu.dot_dimension_numbers<[1], [0], [0], [1], [0, 0, 1, 1], [], []>} : vector<8x256xbf16>, vector<256x128xbf16>, vector<8x128xf32> -> vector<8x128xf32>
    %c0_24 = arith.constant 0 : index
    %c0_25 = arith.constant 0 : index
    %36 = vector.load %arg9[%c0_24, %c0_25] : memref<1x128xf32, #tpu.memory_space<vmem>>, vector<1x128xf32>
    %37 = vector.broadcast %36 : vector<1x128xf32> to vector<8x128xf32>
    %38 = arith.addf %35, %37 : vector<8x128xf32>
    %c0_26 = arith.constant 0 : index
    %c0_27 = arith.constant 0 : index
    %39 = vector.load %arg10[%c0_26, %c0_27] : memref<8x128xf32, #tpu.memory_space<vmem>>, vector<8x128xf32>
    tpu.vector_store %arg10[%c0_26, %c0_27], %38 {strides = array<i32>} : memref<8x128xf32, #tpu.memory_space<vmem>>, vector<8x128xf32>,
    return
  }
  func.func @transform_0(%arg0: i32) -> (i32, i32) {
    %c0_i32 = arith.constant 0 : i32
    %c0_i32_0 = arith.constant 0 : i32
    return %arg0, %c0_i32 : i32, i32
  }
  func.func @transform_1(%arg0: i32) -> (i32, i32) {
    %c0_i32 = arith.constant 0 : i32
    %c0_i32_0 = arith.constant 0 : i32
    %c0_i32_1 = arith.constant 0 : i32
    return %c0_i32, %c0_i32_0 : i32, i32
  }
  func.func @transform_2(%arg0: i32) -> (i32, i32) {
    %c0_i32 = arith.constant 0 : i32
    %c0_i32_0 = arith.constant 0 : i32
    %c0_i32_1 = arith.constant 0 : i32
    return %c0_i32, %c0_i32_0 : i32, i32
  }
  func.func @transform_3(%arg0: i32) -> (i32, i32) {
    %c0_i32 = arith.constant 0 : i32
    %c0_i32_0 = arith.constant 0 : i32
    %c0_i32_1 = arith.constant 0 : i32
    return %c0_i32, %c0_i32_0 : i32, i32
  }
  func.func @transform_4(%arg0: i32) -> (i32, i32) {
    %c0_i32 = arith.constant 0 : i32
    %c0_i32_0 = arith.constant 0 : i32
    %c0_i32_1 = arith.constant 0 : i32
    return %c0_i32, %c0_i32_0 : i32, i32
  }
  func.func @transform_5(%arg0: i32) -> (i32, i32) {
    %c0_i32 = arith.constant 0 : i32
    %c0_i32_0 = arith.constant 0 : i32
    %c0_i32_1 = arith.constant 0 : i32
    return %c0_i32, %c0_i32_0 : i32, i32
  }
  func.func @transform_6(%arg0: i32) -> (i32, i32) {
    %c0_i32 = arith.constant 0 : i32
    %c0_i32_0 = arith.constant 0 : i32
    %c0_i32_1 = arith.constant 0 : i32
    return %c0_i32, %c0_i32_0 : i32, i32
  }
  func.func @transform_7(%arg0: i32) -> (i32, i32) {
    %c0_i32 = arith.constant 0 : i32
    %c0_i32_0 = arith.constant 0 : i32
    %c0_i32_1 = arith.constant 0 : i32
    return %c0_i32, %c0_i32_0 : i32, i32
  }
  func.func @transform_8(%arg0: i32) -> (i32, i32) {
    %c0_i32 = arith.constant 0 : i32
    %c0_i32_0 = arith.constant 0 : i32
    %c0_i32_1 = arith.constant 0 : i32
    return %c0_i32, %c0_i32_0 : i32, i32
  }
  func.func @transform_9(%arg0: i32) -> (i32, i32) {
    %c0_i32 = arith.constant 0 : i32
    %c0_i32_0 = arith.constant 0 : i32
    return %arg0, %c0_i32 : i32, i32
  }
}

</mosaic_0001>

<llo_original>
// kernel: discriminator_forward.1
$region0: #{discriminator_forward.1}
  #allocation0 [shape = 'u32[]', space=smem, size = 0x4, offset = 0x4, fixed_abs, tag = 'smem constant byte address 0x4 - core index']
  #allocation1 [shape = 'u32[144,128]{1,0:T(1,128)}', space=vmem, size = 0x12000, scoped, tag = 'internal scratch']
  %s0 = inlined_call_operand.vmem [shape: bf16[8,784], index: 0, kind: input, shape index: {}]
  %s1 = inlined_call_operand.hbm [shape: bf16[784,1024], index: 1, kind: input, shape index: {}]
  %s2 = inlined_call_operand.hbm [shape: f32[1,1024], index: 2, kind: input, shape index: {}]
  %s3 = inlined_call_operand.hbm [shape: bf16[1024,512], index: 3, kind: input, shape index: {}]
  %s4 = inlined_call_operand.hbm [shape: f32[1,512], index: 4, kind: input, shape index: {}]
  %s5 = inlined_call_operand.hbm [shape: bf16[512,256], index: 5, kind: input, shape index: {}]
  %s6 = inlined_call_operand.hbm [shape: f32[1,256], index: 6, kind: input, shape index: {}]
  %s7 = inlined_call_operand.hbm [shape: bf16[256,128], index: 7, kind: input, shape index: {}]
  %s8 = inlined_call_operand.hbm [shape: f32[1,128], index: 8, kind: input, shape index: {}]
  %s9 = inlined_call_operand.vmem [shape: f32[8,128], index: 9, kind: output, shape index: {}]
  %s10 = sld [smem:[#allocation0]]
  $region78: #{discriminator_forward.1} parent=0
    _
  %s12 = ssub.s32 1, %s10
  %s13 = scalar_select 0, %s12, %s10
  $region1: #{discriminator_forward.1} parent=0
    #allocation2 [shape = 'u8[1605632]{0}', space=vmem, size = 0x188000, scoped, tag = 'input window, operand 1, single buffered']
    #allocation3 [shape = 's32[1]{0}', space=sflag, size = 0x4, scoped, tag = 'scoped memory for discriminator_forward.1']
    #allocation4 [shape = 'u8[4096]{0}', space=vmem, size = 0x1000, scoped, tag = 'input window, operand 2, single buffered']
    #allocation5 [shape = 's32[1]{0}', space=sflag, size = 0x4, scoped, tag = 'scoped memory for discriminator_forward.1']
    #allocation6 [shape = 'u8[1048576]{0}', space=vmem, size = 0x100000, scoped, tag = 'input window, operand 3, single buffered']
    #allocation7 [shape = 'u8[2048]{0}', space=vmem, size = 0x800, scoped, tag = 'input window, operand 4, single buffered']
    #allocation8 [shape = 's32[1]{0}', space=sflag, size = 0x4, scoped, tag = 'scoped memory for discriminator_forward.1']
    #allocation9 [shape = 'u8[262144]{0}', space=vmem, size = 0x40000, scoped, tag = 'input window, operand 5, single buffered']
    #allocation10 [shape = 'u8[1024]{0}', space=vmem, size = 0x400, scoped, tag = 'input window, operand 6, single buffered']
    #allocation11 [shape = 's32[1]{0}', space=sflag, size = 0x4, scoped, tag = 'scoped memory for discriminator_forward.1']
    #allocation12 [shape = 'u8[65536]{0}', space=vmem, size = 0x10000, scoped, tag = 'input window, operand 7, single buffered']
    #allocation13 [shape = 'u8[512]{0}', space=vmem, size = 0x400, scoped, tag = 'input window, operand 8, single buffered']
    #allocation14 [shape = 's32[1]{0}', space=sflag, size = 0x4, scoped, tag = 'scoped memory for discriminator_forward.1']
    %14 = vsyncpa [#allocation3], 0
    %15 = vsyncpa [#allocation5], 0
    %16 = vsyncpa [#allocation8], 0
    %17 = vsyncpa [#allocation11], 0
    %18 = vsyncpa [#allocation14], 0
    // Predicated region
    $region2: #{discriminator_forward.1} parent=1 // pred_check
      _
    $region3: #{discriminator_forward.1} parent=1 // pred_check_branch
      %20 = sbr.rel (0) target = $region5
    $region4: #{discriminator_forward.1} parent=1 // pred_region
      _
    $region5: #{discriminator_forward.1} parent=1 // pred_fallthru
      _
    // Predicated region
    $region6: #{discriminator_forward.1} parent=1 // pred_check
      _
    $region7: #{discriminator_forward.1} parent=1 // pred_check_branch
      %22 = sbr.rel (0) target = $region9
    $region8: #{discriminator_forward.1} parent=1 // pred_region
      %s24 = ssub.s32 50176, 50176
      %25 = vsyncadd [#allocation3], %s24
      %s26 = sshll.u32 [#allocation2], 4
      %s27 = int_to_ptr.vmem [resolvable:$true] %s26
      %32 = dma.hbm_to_vmem [thread:$0]  %s1, 50176, %s27, [#allocation3], 512, 512, 32
    $region9: #{discriminator_forward.1} parent=1 // pred_fallthru
      _
    // Predicated region
    $region10: #{discriminator_forward.1} parent=1 // pred_check
      _
    $region11: #{discriminator_forward.1} parent=1 // pred_check_branch
      %34 = sbr.rel (0) target = $region13
    $region12: #{discriminator_forward.1} parent=1 // pred_region
      %s36 = ssub.s32 128, 128
      %37 = vsyncadd [#allocation5], %s36
      %s39 = sshll.u32 [#allocation4], 4
      %s40 = int_to_ptr.vmem [resolvable:$true] %s39
      %42 = dma.hbm_to_vmem [thread:$0]  %s2, 128, %s40, [#allocation5]
    $region13: #{discriminator_forward.1} parent=1 // pred_fallthru
      _
    // Predicated region
    $region14: #{discriminator_forward.1} parent=1 // pred_check
      _
    $region15: #{discriminator_forward.1} parent=1 // pred_check_branch
      %44 = sbr.rel (0) target = $region17
    $region16: #{discriminator_forward.1} parent=1 // pred_region
      %s46 = ssub.s32 32768, 32768
      %47 = vsyncadd [#allocation5], %s46
      %s48 = sshll.u32 [#allocation6], 4
      %s49 = int_to_ptr.vmem [resolvable:$true] %s48
      %54 = dma.hbm_to_vmem [thread:$0]  %s3, 32768, %s49, [#allocation5], 256, 256, 16
    $region17: #{discriminator_forward.1} parent=1 // pred_fallthru
      _
    // Predicated region
    $region18: #{discriminator_forward.1} parent=1 // pred_check
      _
    $region19: #{discriminator_forward.1} parent=1 // pred_check_branch
      %56 = sbr.rel (0) target = $region21
    $region20: #{discriminator_forward.1} parent=1 // pred_region
      %s58 = ssub.s32 64, 64
      %59 = vsyncadd [#allocation8], %s58
      %s61 = sshll.u32 [#allocation7], 4
      %s62 = int_to_ptr.vmem [resolvable:$true] %s61
      %64 = dma.hbm_to_vmem [thread:$0]  %s4, 64, %s62, [#allocation8]
    $region21: #{discriminator_forward.1} parent=1 // pred_fallthru
      _
    // Predicated region
    $region22: #{discriminator_forward.1} parent=1 // pred_check
      _
    $region23: #{discriminator_forward.1} parent=1 // pred_check_branch
      %66 = sbr.rel (0) target = $region25
    $region24: #{discriminator_forward.1} parent=1 // pred_region
      %s68 = ssub.s32 8192, 8192
      %69 = vsyncadd [#allocation8], %s68
      %s70 = sshll.u32 [#allocation9], 4
      %s71 = int_to_ptr.vmem [resolvable:$true] %s70
      %76 = dma.hbm_to_vmem [thread:$0]  %s5, 8192, %s71, [#allocation8], 128, 128, 8
    $region25: #{discriminator_forward.1} parent=1 // pred_fallthru
      _
    // Predicated region
    $region26: #{discriminator_forward.1} parent=1 // pred_check
      _
    $region27: #{discriminator_forward.1} parent=1 // pred_check_branch
      %78 = sbr.rel (0) target = $region29
    $region28: #{discriminator_forward.1} parent=1 // pred_region
      %s80 = ssub.s32 32, 32
      %81 = vsyncadd [#allocation11], %s80
      %s83 = sshll.u32 [#allocation10], 4
      %s84 = int_to_ptr.vmem [resolvable:$true] %s83
      %86 = dma.hbm_to_vmem [thread:$0]  %s6, 32, %s84, [#allocation11]
    $region29: #{discriminator_forward.1} parent=1 // pred_fallthru
      _
    // Predicated region
    $region30: #{discriminator_forward.1} parent=1 // pred_check
      _
    $region31: #{discriminator_forward.1} parent=1 // pred_check_branch
      %88 = sbr.rel (0) target = $region33
    $region32: #{discriminator_forward.1} parent=1 // pred_region
      %s90 = ssub.s32 2048, 2048
      %91 = vsyncadd [#allocation11], %s90
      %s92 = sshll.u32 [#allocation12], 4
      %s93 = int_to_ptr.vmem [resolvable:$true] %s92
      %98 = dma.hbm_to_vmem [thread:$0]  %s7, 2048, %s93, [#allocation11], 64, 64, 4
    $region33: #{discriminator_forward.1} parent=1 // pred_fallthru
      _
    // Predicated region
    $region34: #{discriminator_forward.1} parent=1 // pred_check
      _
    $region35: #{discriminator_forward.1} parent=1 // pred_check_branch
      %100 = sbr.rel (0) target = $region37
    $region36: #{discriminator_forward.1} parent=1 // pred_region
      %s102 = ssub.s32 16, 16
      %103 = vsyncadd [#allocation14], %s102
      %s105 = sshll.u32 [#allocation13], 4
      %s106 = int_to_ptr.vmem [resolvable:$true] %s105
      %108 = dma.hbm_to_vmem [thread:$0]  %s8, 16, %s106, [#allocation14]
    $region37: #{discriminator_forward.1} parent=1 // pred_fallthru
      _
    // Predicated region
    $region38: #{discriminator_forward.1} parent=1 // pred_check
      _
    $region39: #{discriminator_forward.1} parent=1 // pred_check_branch
      %110 = sbr.rel (0) target = $region41
    $region40: #{discriminator_forward.1} parent=1 // pred_region
      %111 = dma.done [#allocation3], 50176
    $region41: #{discriminator_forward.1} parent=1 // pred_fallthru
      _
    // Predicated region
    $region42: #{discriminator_forward.1} parent=1 // pred_check
      _
    $region43: #{discriminator_forward.1} parent=1 // pred_check_branch
      %113 = sbr.rel (0) target = $region45
    $region44: #{discriminator_forward.1} parent=1 // pred_region
      %114 = dma.done [#allocation5], 128
    $region45: #{discriminator_forward.1} parent=1 // pred_fallthru
      _
    // Predicated region
    $region46: #{discriminator_forward.1} parent=1 // pred_check
      _
    $region47: #{discriminator_forward.1} parent=1 // pred_check_branch
      %116 = sbr.rel (0) target = $region49
    $region48: #{discriminator_forward.1} parent=1 // pred_region
      %117 = dma.done [#allocation5], 32768
    $region49: #{discriminator_forward.1} parent=1 // pred_fallthru
      _
    // Predicated region
    $region50: #{discriminator_forward.1} parent=1 // pred_check
      _
    $region51: #{discriminator_forward.1} parent=1 // pred_check_branch
      %119 = sbr.rel (0) target = $region53
    $region52: #{discriminator_forward.1} parent=1 // pred_region
      %120 = dma.done [#allocation8], 64
    $region53: #{discriminator_forward.1} parent=1 // pred_fallthru
      _
    // Predicated region
    $region54: #{discriminator_forward.1} parent=1 // pred_check
      _
    $region55: #{discriminator_forward.1} parent=1 // pred_check_branch
      %122 = sbr.rel (0) target = $region57
    $region56: #{discriminator_forward.1} parent=1 // pred_region
      %123 = dma.done [#allocation8], 8192
    $region57: #{discriminator_forward.1} parent=1 // pred_fallthru
      _
    // Predicated region
    $region58: #{discriminator_forward.1} parent=1 // pred_check
      _
    $region59: #{discriminator_forward.1} parent=1 // pred_check_branch
      %125 = sbr.rel (0) target = $region61
    $region60: #{discriminator_forward.1} parent=1 // pred_region
      %126 = dma.done [#allocation11], 32
    $region61: #{discriminator_forward.1} parent=1 // pred_fallthru
      _
    // Predicated region
    $region62: #{discriminator_forward.1} parent=1 // pred_check
      _
    $region63: #{discriminator_forward.1} parent=1 // pred_check_branch
      %128 = sbr.rel (0) target = $region65
    $region64: #{discriminator_forward.1} parent=1 // pred_region
      %129 = dma.done [#allocation11], 2048
    $region65: #{discriminator_forward.1} parent=1 // pred_fallthru
      _
    // Predicated region
    $region66: #{discriminator_forward.1} parent=1 // pred_check
      _
    $region67: #{discriminator_forward.1} parent=1 // pred_check_branch
      %131 = sbr.rel (0) target = $region69
    $region68: #{discriminator_forward.1} parent=1 // pred_region
      %132 = dma.done [#allocation14], 16
    $region69: #{discriminator_forward.1} parent=1 // pred_fallthru
      _
    %v134 = vld [vmem:[%s0] sm:$0xff]
    %v135 = vld [vmem:[%s0 + $0x8] sm:$0xff]
    %v136 = vld [vmem:[%s0 + $0x10] sm:$0xff]
    %v137 = vld [vmem:[%s0 + $0x18] sm:$0xf]
    %v138 = vld [vmem:[#allocation2] sm:$0xff]
    %v139 = vld [vmem:[#allocation2 + $0x8] sm:$0xff]
    %v140 = vld [vmem:[#allocation2 + $0x10] sm:$0xff]
    %v141 = vld [vmem:[#allocation2 + $0x18] sm:$0xff]
    %v142 = vld [vmem:[#allocation2 + $0x20] sm:$0xff]
    %v143 = vld [vmem:[#allocation2 + $0x28] sm:$0xff]
    %v144 = vld [vmem:[#allocation2 + $0x30] sm:$0xff]
    %v145 = vld [vmem:[#allocation2 + $0x38] sm:$0xff]
    %v146 = vld [vmem:[#allocation2 + $0x40] sm:$0xff]
    %v147 = vld [vmem:[#allocation2 + $0x48] sm:$0xff]
    %v148 = vld [vmem:[#allocation2 + $0x50] sm:$0xff]
    %v149 = vld [vmem:[#allocation2 + $0x58] sm:$0xff]
    %v150 = vld [vmem:[#allocation2 + $0x60] sm:$0xff]
    %v151 = vld [vmem:[#allocation2 + $0x68] sm:$0xff]
    %v152 = vld [vmem:[#allocation2 + $0x70] sm:$0xff]
    %v153 = vld [vmem:[#allocation2 + $0x78] sm:$0xff]
    %v154 = vld [vmem:[#allocation2 + $0x80] sm:$0xff]
    %v155 = vld [vmem:[#allocation2 + $0x88] sm:$0xff]
    %v156 = vld [vmem:[#allocation2 + $0x90] sm:$0xff]
    %v157 = vld [vmem:[#allocation2 + $0x98] sm:$0xff]
    %v158 = vld [vmem:[#allocation2 + $0xa0] sm:$0xff]
    %v159 = vld [vmem:[#allocation2 + $0xa8] sm:$0xff]
    %v160 = vld [vmem:[#allocation2 + $0xb0] sm:$0xff]
    %v161 = vld [vmem:[#allocation2 + $0xb8] sm:$0xff]
    %v162 = vld [vmem:[#allocation2 + $0xc0] sm:$0xff]
    %v163 = vld [vmem:[#allocation2 + $0xc8] sm:$0xff]
    %v164 = vld [vmem:[#allocation2 + $0xd0] sm:$0xff]
    %v165 = vld [vmem:[#allocation2 + $0xd8] sm:$0xff]
    %v166 = vld [vmem:[#allocation2 + $0xe0] sm:$0xff]
    %v167 = vld [vmem:[#allocation2 + $0xe8] sm:$0xff]
    %v168 = vld [vmem:[#allocation2 + $0xf0] sm:$0xff]
    %v169 = vld [vmem:[#allocation2 + $0xf8] sm:$0xff]
    %v170 = vld [vmem:[#allocation2 + $0x100] sm:$0xff]
    %v171 = vld [vmem:[#allocation2 + $0x108] sm:$0xff]
    %v172 = vld [vmem:[#allocation2 + $0x110] sm:$0xff]
    %v173 = vld [vmem:[#allocation2 + $0x118] sm:$0xff]
    %v174 = vld [vmem:[#allocation2 + $0x120] sm:$0xff]
    %v175 = vld [vmem:[#allocation2 + $0x128] sm:$0xff]
    %v176 = vld [vmem:[#allocation2 + $0x130] sm:$0xff]
    %v177 = vld [vmem:[#allocation2 + $0x138] sm:$0xff]
    %v178 = vld [vmem:[#allocation2 + $0x140] sm:$0xff]
    %v179 = vld [vmem:[#allocation2 + $0x148] sm:$0xff]
    %v180 = vld [vmem:[#allocation2 + $0x150] sm:$0xff]
    %v181 = vld [vmem:[#allocation2 + $0x158] sm:$0xff]
    %v182 = vld [vmem:[#allocation2 + $0x160] sm:$0xff]
    %v183 = vld [vmem:[#allocation2 + $0x168] sm:$0xff]
    %v184 = vld [vmem:[#allocation2 + $0x170] sm:$0xff]
    %v185 = vld [vmem:[#allocation2 + $0x178] sm:$0xff]
    %v186 = vld [vmem:[#allocation2 + $0x180] sm:$0xff]
    %v187 = vld [vmem:[#allocation2 + $0x188] sm:$0xff]
    %v188 = vld [vmem:[#allocation2 + $0x190] sm:$0xff]
    %v189 = vld [vmem:[#allocation2 + $0x198] sm:$0xff]
    %v190 = vld [vmem:[#allocation2 + $0x1a0] sm:$0xff]
    %v191 = vld [vmem:[#allocation2 + $0x1a8] sm:$0xff]
    %v192 = vld [vmem:[#allocation2 + $0x1b0] sm:$0xff]
    %v193 = vld [vmem:[#allocation2 + $0x1b8] sm:$0xff]
    %v194 = vld [vmem:[#allocation2 + $0x1c0] sm:$0xff]
    %v195 = vld [vmem:[#allocation2 + $0x1c8] sm:$0xff]
    %v196 = vld [vmem:[#allocation2 + $0x1d0] sm:$0xff]
    %v197 = vld [vmem:[#allocation2 + $0x1d8] sm:$0xff]
    %v198 = vld [vmem:[#allocation2 + $0x1e0] sm:$0xff]
    %v199 = vld [vmem:[#allocation2 + $0x1e8] sm:$0xff]
    %v200 = vld [vmem:[#allocation2 + $0x1f0] sm:$0xff]
    %v201 = vld [vmem:[#allocation2 + $0x1f8] sm:$0xff]
    %v202 = vld [vmem:[#allocation2 + $0x200] sm:$0xff]
    %v203 = vld [vmem:[#allocation2 + $0x208] sm:$0xff]
    %v204 = vld [vmem:[#allocation2 + $0x210] sm:$0xff]
    %v205 = vld [vmem:[#allocation2 + $0x218] sm:$0xff]
    %v206 = vld [vmem:[#allocation2 + $0x220] sm:$0xff]
    %v207 = vld [vmem:[#allocation2 + $0x228] sm:$0xff]
    %v208 = vld [vmem:[#allocation2 + $0x230] sm:$0xff]
    %v209 = vld [vmem:[#allocation2 + $0x238] sm:$0xff]
    %v210 = vld [vmem:[#allocation2 + $0x240] sm:$0xff]
    %v211 = vld [vmem:[#allocation2 + $0x248] sm:$0xff]
    %v212 = vld [vmem:[#allocation2 + $0x250] sm:$0xff]
    %v213 = vld [vmem:[#allocation2 + $0x258] sm:$0xff]
    %v214 = vld [vmem:[#allocation2 + $0x260] sm:$0xff]
    %v215 = vld [vmem:[#allocation2 + $0x268] sm:$0xff]
    %v216 = vld [vmem:[#allocation2 + $0x270] sm:$0xff]
    %v217 = vld [vmem:[#allocation2 + $0x278] sm:$0xff]
    %v218 = vld [vmem:[#allocation2 + $0x280] sm:$0xff]
    %v219 = vld [vmem:[#allocation2 + $0x288] sm:$0xff]
    %v220 = vld [vmem:[#allocation2 + $0x290] sm:$0xff]
    %v221 = vld [vmem:[#allocation2 + $0x298] sm:$0xff]
    %v222 = vld [vmem:[#allocation2 + $0x2a0] sm:$0xff]
    %v223 = vld [vmem:[#allocation2 + $0x2a8] sm:$0xff]
    %v224 = vld [vmem:[#allocation2 + $0x2b0] sm:$0xff]
    %v225 = vld [vmem:[#allocation2 + $0x2b8] sm:$0xff]
    %v226 = vld [vmem:[#allocation2 + $0x2c0] sm:$0xff]
    %v227 = vld [vmem:[#allocation2 + $0x2c8] sm:$0xff]
    %v228 = vld [vmem:[#allocation2 + $0x2d0] sm:$0xff]
    %v229 = vld [vmem:[#allocation2 + $0x2d8] sm:$0xff]
    %v230 = vld [vmem:[#allocation2 + $0x2e0] sm:$0xff]
    %v231 = vld [vmem:[#allocation2 + $0x2e8] sm:$0xff]
    %v232 = vld [vmem:[#allocation2 + $0x2f0] sm:$0xff]
    %v233 = vld [vmem:[#allocation2 + $0x2f8] sm:$0xff]
    %v234 = vld [vmem:[#allocation2 + $0x300] sm:$0xff]
    %v235 = vld [vmem:[#allocation2 + $0x308] sm:$0xff]
    %v236 = vld [vmem:[#allocation2 + $0x310] sm:$0xff]
    %v237 = vld [vmem:[#allocation2 + $0x318] sm:$0xff]
    %v238 = vld [vmem:[#allocation2 + $0x320] sm:$0xff]
    %v239 = vld [vmem:[#allocation2 + $0x328] sm:$0xff]
    %v240 = vld [vmem:[#allocation2 + $0x330] sm:$0xff]
    %v241 = vld [vmem:[#allocation2 + $0x338] sm:$0xff]
    %v242 = vld [vmem:[#allocation2 + $0x340] sm:$0xff]
    %v243 = vld [vmem:[#allocation2 + $0x348] sm:$0xff]
    %v244 = vld [vmem:[#allocation2 + $0x350] sm:$0xff]
    %v245 = vld [vmem:[#allocation2 + $0x358] sm:$0xff]
    %v246 = vld [vmem:[#allocation2 + $0x360] sm:$0xff]
    %v247 = vld [vmem:[#allocation2 + $0x368] sm:$0xff]
    %v248 = vld [vmem:[#allocation2 + $0x370] sm:$0xff]
    %v249 = vld [vmem:[#allocation2 + $0x378] sm:$0xff]
    %v250 = vld [vmem:[#allocation2 + $0x380] sm:$0xff]
    %v251 = vld [vmem:[#allocation2 + $0x388] sm:$0xff]
    %v252 = vld [vmem:[#allocation2 + $0x390] sm:$0xff]
    %v253 = vld [vmem:[#allocation2 + $0x398] sm:$0xff]
    %v254 = vld [vmem:[#allocation2 + $0x3a0] sm:$0xff]
    %v255 = vld [vmem:[#allocation2 + $0x3a8] sm:$0xff]
    %v256 = vld [vmem:[#allocation2 + $0x3b0] sm:$0xff]
    %v257 = vld [vmem:[#allocation2 + $0x3b8] sm:$0xff]
    %v258 = vld [vmem:[#allocation2 + $0x3c0] sm:$0xff]
    %v259 = vld [vmem:[#allocation2 + $0x3c8] sm:$0xff]
    %v260 = vld [vmem:[#allocation2 + $0x3d0] sm:$0xff]
    %v261 = vld [vmem:[#allocation2 + $0x3d8] sm:$0xff]
    %v262 = vld [vmem:[#allocation2 + $0x3e0] sm:$0xff]
    %v263 = vld [vmem:[#allocation2 + $0x3e8] sm:$0xff]
    %v264 = vld [vmem:[#allocation2 + $0x3f0] sm:$0xff]
    %v265 = vld [vmem:[#allocation2 + $0x3f8] sm:$0xff]
    %v266 = vld [vmem:[#allocation2 + $0x400] sm:$0xff]
    %v267 = vld [vmem:[#allocation2 + $0x408] sm:$0xff]
    %v268 = vld [vmem:[#allocation2 + $0x410] sm:$0xff]
    %v269 = vld [vmem:[#allocation2 + $0x418] sm:$0xff]
    %v270 = vld [vmem:[#allocation2 + $0x420] sm:$0xff]
    %v271 = vld [vmem:[#allocation2 + $0x428] sm:$0xff]
    %v272 = vld [vmem:[#allocation2 + $0x430] sm:$0xff]
    %v273 = vld [vmem:[#allocation2 + $0x438] sm:$0xff]
    %v274 = vld [vmem:[#allocation2 + $0x440] sm:$0xff]
    %v275 = vld [vmem:[#allocation2 + $0x448] sm:$0xff]
    %v276 = vld [vmem:[#allocation2 + $0x450] sm:$0xff]
    %v277 = vld [vmem:[#allocation2 + $0x458] sm:$0xff]
    %v278 = vld [vmem:[#allocation2 + $0x460] sm:$0xff]
    %v279 = vld [vmem:[#allocation2 + $0x468] sm:$0xff]
    %v280 = vld [vmem:[#allocation2 + $0x470] sm:$0xff]
    %v281 = vld [vmem:[#allocation2 + $0x478] sm:$0xff]
    %v282 = vld [vmem:[#allocation2 + $0x480] sm:$0xff]
    %v283 = vld [vmem:[#allocation2 + $0x488] sm:$0xff]
    %v284 = vld [vmem:[#allocation2 + $0x490] sm:$0xff]
    %v285 = vld [vmem:[#allocation2 + $0x498] sm:$0xff]
    %v286 = vld [vmem:[#allocation2 + $0x4a0] sm:$0xff]
    %v287 = vld [vmem:[#allocation2 + $0x4a8] sm:$0xff]
    %v288 = vld [vmem:[#allocation2 + $0x4b0] sm:$0xff]
    %v289 = vld [vmem:[#allocation2 + $0x4b8] sm:$0xff]
    %v290 = vld [vmem:[#allocation2 + $0x4c0] sm:$0xff]
    %v291 = vld [vmem:[#allocation2 + $0x4c8] sm:$0xff]
    %v292 = vld [vmem:[#allocation2 + $0x4d0] sm:$0xff]
    %v293 = vld [vmem:[#allocation2 + $0x4d8] sm:$0xff]
    %v294 = vld [vmem:[#allocation2 + $0x4e0] sm:$0xff]
    %v295 = vld [vmem:[#allocation2 + $0x4e8] sm:$0xff]
    %v296 = vld [vmem:[#allocation2 + $0x4f0] sm:$0xff]
    %v297 = vld [vmem:[#allocation2 + $0x4f8] sm:$0xff]
    %v298 = vld [vmem:[#allocation2 + $0x500] sm:$0xff]
    %v299 = vld [vmem:[#allocation2 + $0x508] sm:$0xff]
    %v300 = vld [vmem:[#allocation2 + $0x510] sm:$0xff]
    %v301 = vld [vmem:[#allocation2 + $0x518] sm:$0xff]
    %v302 = vld [vmem:[#allocation2 + $0x520] sm:$0xff]
    %v303 = vld [vmem:[#allocation2 + $0x528] sm:$0xff]
    %v304 = vld [vmem:[#allocation2 + $0x530] sm:$0xff]
    %v305 = vld [vmem:[#allocation2 + $0x538] sm:$0xff]
    %v306 = vld [vmem:[#allocation2 + $0x540] sm:$0xff]
    %v307 = vld [vmem:[#allocation2 + $0x548] sm:$0xff]
    %v308 = vld [vmem:[#allocation2 + $0x550] sm:$0xff]
    %v309 = vld [vmem:[#allocation2 + $0x558] sm:$0xff]
    %v310 = vld [vmem:[#allocation2 + $0x560] sm:$0xff]
    %v311 = vld [vmem:[#allocation2 + $0x568] sm:$0xff]
    %v312 = vld [vmem:[#allocation2 + $0x570] sm:$0xff]
    %v313 = vld [vmem:[#allocation2 + $0x578] sm:$0xff]
    %v314 = vld [vmem:[#allocation2 + $0x580] sm:$0xff]
    %v315 = vld [vmem:[#allocation2 + $0x588] sm:$0xff]
    %v316 = vld [vmem:[#allocation2 + $0x590] sm:$0xff]
    %v317 = vld [vmem:[#allocation2 + $0x598] sm:$0xff]
    %v318 = vld [vmem:[#allocation2 + $0x5a0] sm:$0xff]
    %v319 = vld [vmem:[#allocation2 + $0x5a8] sm:$0xff]
    %v320 = vld [vmem:[#allocation2 + $0x5b0] sm:$0xff]
    %v321 = vld [vmem:[#allocation2 + $0x5b8] sm:$0xff]
    %v322 = vld [vmem:[#allocation2 + $0x5c0] sm:$0xff]
    %v323 = vld [vmem:[#allocation2 + $0x5c8] sm:$0xff]
    %v324 = vld [vmem:[#allocation2 + $0x5d0] sm:$0xff]
    %v325 = vld [vmem:[#allocation2 + $0x5d8] sm:$0xff]
    %v326 = vld [vmem:[#allocation2 + $0x5e0] sm:$0xff]
    %v327 = vld [vmem:[#allocation2 + $0x5e8] sm:$0xff]
    %v328 = vld [vmem:[#allocation2 + $0x5f0] sm:$0xff]
    %v329 = vld [vmem:[#allocation2 + $0x5f8] sm:$0xff]
    %v330 = vld [vmem:[#allocation2 + $0x600] sm:$0xff]
    %v331 = vld [vmem:[#allocation2 + $0x608] sm:$0xff]
    %v332 = vld [vmem:[#allocation2 + $0x610] sm:$0xff]
    %v333 = vld [vmem:[#allocation2 + $0x618] sm:$0xff]
    %v334 = vld [vmem:[#allocation2 + $0x620] sm:$0xff]
    %v335 = vld [vmem:[#allocation2 + $0x628] sm:$0xff]
    %v336 = vld [vmem:[#allocation2 + $0x630] sm:$0xff]
    %v337 = vld [vmem:[#allocation2 + $0x638] sm:$0xff]
    %v338 = vld [vmem:[#allocation2 + $0x640] sm:$0xff]
    %v339 = vld [vmem:[#allocation2 + $0x648] sm:$0xff]
    %v340 = vld [vmem:[#allocation2 + $0x650] sm:$0xff]
    %v341 = vld [vmem:[#allocation2 + $0x658] sm:$0xff]
    %v342 = vld [vmem:[#allocation2 + $0x660] sm:$0xff]
    %v343 = vld [vmem:[#allocation2 + $0x668] sm:$0xff]
    %v344 = vld [vmem:[#allocation2 + $0x670] sm:$0xff]
    %v345 = vld [vmem:[#allocation2 + $0x678] sm:$0xff]
    %v346 = vld [vmem:[#allocation2 + $0x680] sm:$0xff]
    %v347 = vld [vmem:[#allocation2 + $0x688] sm:$0xff]
    %v348 = vld [vmem:[#allocation2 + $0x690] sm:$0xff]
    %v349 = vld [vmem:[#allocation2 + $0x698] sm:$0xff]
    %v350 = vld [vmem:[#allocation2 + $0x6a0] sm:$0xff]
    %v351 = vld [vmem:[#allocation2 + $0x6a8] sm:$0xff]
    %v352 = vld [vmem:[#allocation2 + $0x6b0] sm:$0xff]
    %v353 = vld [vmem:[#allocation2 + $0x6b8] sm:$0xff]
    %v354 = vld [vmem:[#allocation2 + $0x6c0] sm:$0xff]
    %v355 = vld [vmem:[#allocation2 + $0x6c8] sm:$0xff]
    %v356 = vld [vmem:[#allocation2 + $0x6d0] sm:$0xff]
    %v357 = vld [vmem:[#allocation2 + $0x6d8] sm:$0xff]
    %v358 = vld [vmem:[#allocation2 + $0x6e0] sm:$0xff]
    %v359 = vld [vmem:[#allocation2 + $0x6e8] sm:$0xff]
    %v360 = vld [vmem:[#allocation2 + $0x6f0] sm:$0xff]
    %v361 = vld [vmem:[#allocation2 + $0x6f8] sm:$0xff]
    %v362 = vld [vmem:[#allocation2 + $0x700] sm:$0xff]
    %v363 = vld [vmem:[#allocation2 + $0x708] sm:$0xff]
    %v364 = vld [vmem:[#allocation2 + $0x710] sm:$0xff]
    %v365 = vld [vmem:[#allocation2 + $0x718] sm:$0xff]
    %v366 = vld [vmem:[#allocation2 + $0x720] sm:$0xff]
    %v367 = vld [vmem:[#allocation2 + $0x728] sm:$0xff]
    %v368 = vld [vmem:[#allocation2 + $0x730] sm:$0xff]
    %v369 = vld [vmem:[#allocation2 + $0x738] sm:$0xff]
    %v370 = vld [vmem:[#allocation2 + $0x740] sm:$0xff]
    %v371 = vld [vmem:[#allocation2 + $0x748] sm:$0xff]
    %v372 = vld [vmem:[#allocation2 + $0x750] sm:$0xff]
    %v373 = vld [vmem:[#allocation2 + $0x758] sm:$0xff]
    %v374 = vld [vmem:[#allocation2 + $0x760] sm:$0xff]
    %v375 = vld [vmem:[#allocation2 + $0x768] sm:$0xff]
    %v376 = vld [vmem:[#allocation2 + $0x770] sm:$0xff]
    %v377 = vld [vmem:[#allocation2 + $0x778] sm:$0xff]
    %v378 = vld [vmem:[#allocation2 + $0x780] sm:$0xff]
    %v379 = vld [vmem:[#allocation2 + $0x788] sm:$0xff]
    %v380 = vld [vmem:[#allocation2 + $0x790] sm:$0xff]
    %v381 = vld [vmem:[#allocation2 + $0x798] sm:$0xff]
    %v382 = vld [vmem:[#allocation2 + $0x7a0] sm:$0xff]
    %v383 = vld [vmem:[#allocation2 + $0x7a8] sm:$0xff]
    %v384 = vld [vmem:[#allocation2 + $0x7b0] sm:$0xff]
    %v385 = vld [vmem:[#allocation2 + $0x7b8] sm:$0xff]
    %v386 = vld [vmem:[#allocation2 + $0x7c0] sm:$0xff]
    %v387 = vld [vmem:[#allocation2 + $0x7c8] sm:$0xff]
    %v388 = vld [vmem:[#allocation2 + $0x7d0] sm:$0xff]
    %v389 = vld [vmem:[#allocation2 + $0x7d8] sm:$0xff]
    %v390 = vld [vmem:[#allocation2 + $0x7e0] sm:$0xff]
    %v391 = vld [vmem:[#allocation2 + $0x7e8] sm:$0xff]
    %v392 = vld [vmem:[#allocation2 + $0x7f0] sm:$0xff]
    %v393 = vld [vmem:[#allocation2 + $0x7f8] sm:$0xff]
    %v394 = vld [vmem:[#allocation2 + $0x800] sm:$0xff]
    %v395 = vld [vmem:[#allocation2 + $0x808] sm:$0xff]
    %v396 = vld [vmem:[#allocation2 + $0x810] sm:$0xff]
    %v397 = vld [vmem:[#allocation2 + $0x818] sm:$0xff]
    %v398 = vld [vmem:[#allocation2 + $0x820] sm:$0xff]
    %v399 = vld [vmem:[#allocation2 + $0x828] sm:$0xff]
    %v400 = vld [vmem:[#allocation2 + $0x830] sm:$0xff]
    %v401 = vld [vmem:[#allocation2 + $0x838] sm:$0xff]
    %v402 = vld [vmem:[#allocation2 + $0x840] sm:$0xff]
    %v403 = vld [vmem:[#allocation2 + $0x848] sm:$0xff]
    %v404 = vld [vmem:[#allocation2 + $0x850] sm:$0xff]
    %v405 = vld [vmem:[#allocation2 + $0x858] sm:$0xff]
    %v406 = vld [vmem:[#allocation2 + $0x860] sm:$0xff]
    %v407 = vld [vmem:[#allocation2 + $0x868] sm:$0xff]
    %v408 = vld [vmem:[#allocation2 + $0x870] sm:$0xff]
    %v409 = vld [vmem:[#allocation2 + $0x878] sm:$0xff]
    %v410 = vld [vmem:[#allocation2 + $0x880] sm:$0xff]
    %v411 = vld [vmem:[#allocation2 + $0x888] sm:$0xff]
    %v412 = vld [vmem:[#allocation2 + $0x890] sm:$0xff]
    %v413 = vld [vmem:[#allocation2 + $0x898] sm:$0xff]
    %v414 = vld [vmem:[#allocation2 + $0x8a0] sm:$0xff]
    %v415 = vld [vmem:[#allocation2 + $0x8a8] sm:$0xff]
    %v416 = vld [vmem:[#allocation2 + $0x8b0] sm:$0xff]
    %v417 = vld [vmem:[#allocation2 + $0x8b8] sm:$0xff]
    %v418 = vld [vmem:[#allocation2 + $0x8c0] sm:$0xff]
    %v419 = vld [vmem:[#allocation2 + $0x8c8] sm:$0xff]
    %v420 = vld [vmem:[#allocation2 + $0x8d0] sm:$0xff]
    %v421 = vld [vmem:[#allocation2 + $0x8d8] sm:$0xff]
    %v422 = vld [vmem:[#allocation2 + $0x8e0] sm:$0xff]
    %v423 = vld [vmem:[#allocation2 + $0x8e8] sm:$0xff]
    %v424 = vld [vmem:[#allocation2 + $0x8f0] sm:$0xff]
    %v425 = vld [vmem:[#allocation2 + $0x8f8] sm:$0xff]
    %v426 = vld [vmem:[#allocation2 + $0x900] sm:$0xff]
    %v427 = vld [vmem:[#allocation2 + $0x908] sm:$0xff]
    %v428 = vld [vmem:[#allocation2 + $0x910] sm:$0xff]
    %v429 = vld [vmem:[#allocation2 + $0x918] sm:$0xff]
    %v430 = vld [vmem:[#allocation2 + $0x920] sm:$0xff]
    %v431 = vld [vmem:[#allocation2 + $0x928] sm:$0xff]
    %v432 = vld [vmem:[#allocation2 + $0x930] sm:$0xff]
    %v433 = vld [vmem:[#allocation2 + $0x938] sm:$0xff]
    %v434 = vld [vmem:[#allocation2 + $0x940] sm:$0xff]
    %v435 = vld [vmem:[#allocation2 + $0x948] sm:$0xff]
    %v436 = vld [vmem:[#allocation2 + $0x950] sm:$0xff]
    %v437 = vld [vmem:[#allocation2 + $0x958] sm:$0xff]
    %v438 = vld [vmem:[#allocation2 + $0x960] sm:$0xff]
    %v439 = vld [vmem:[#allocation2 + $0x968] sm:$0xff]
    %v440 = vld [vmem:[#allocation2 + $0x970] sm:$0xff]
    %v441 = vld [vmem:[#allocation2 + $0x978] sm:$0xff]
    %v442 = vld [vmem:[#allocation2 + $0x980] sm:$0xff]
    %v443 = vld [vmem:[#allocation2 + $0x988] sm:$0xff]
    %v444 = vld [vmem:[#allocation2 + $0x990] sm:$0xff]
    %v445 = vld [vmem:[#allocation2 + $0x998] sm:$0xff]
    %v446 = vld [vmem:[#allocation2 + $0x9a0] sm:$0xff]
    %v447 = vld [vmem:[#allocation2 + $0x9a8] sm:$0xff]
    %v448 = vld [vmem:[#allocation2 + $0x9b0] sm:$0xff]
    %v449 = vld [vmem:[#allocation2 + $0x9b8] sm:$0xff]
    %v450 = vld [vmem:[#allocation2 + $0x9c0] sm:$0xff]
    %v451 = vld [vmem:[#allocation2 + $0x9c8] sm:$0xff]
    %v452 = vld [vmem:[#allocation2 + $0x9d0] sm:$0xff]
    %v453 = vld [vmem:[#allocation2 + $0x9d8] sm:$0xff]
    %v454 = vld [vmem:[#allocation2 + $0x9e0] sm:$0xff]
    %v455 = vld [vmem:[#allocation2 + $0x9e8] sm:$0xff]
    %v456 = vld [vmem:[#allocation2 + $0x9f0] sm:$0xff]
    %v457 = vld [vmem:[#allocation2 + $0x9f8] sm:$0xff]
    %v458 = vld [vmem:[#allocation2 + $0xa00] sm:$0xff]
    %v459 = vld [vmem:[#allocation2 + $0xa08] sm:$0xff]
    %v460 = vld [vmem:[#allocation2 + $0xa10] sm:$0xff]
    %v461 = vld [vmem:[#allocation2 + $0xa18] sm:$0xff]
    %v462 = vld [vmem:[#allocation2 + $0xa20] sm:$0xff]
    %v463 = vld [vmem:[#allocation2 + $0xa28] sm:$0xff]
    %v464 = vld [vmem:[#allocation2 + $0xa30] sm:$0xff]
    %v465 = vld [vmem:[#allocation2 + $0xa38] sm:$0xff]
    %v466 = vld [vmem:[#allocation2 + $0xa40] sm:$0xff]
    %v467 = vld [vmem:[#allocation2 + $0xa48] sm:$0xff]
    %v468 = vld [vmem:[#allocation2 + $0xa50] sm:$0xff]
    %v469 = vld [vmem:[#allocation2 + $0xa58] sm:$0xff]
    %v470 = vld [vmem:[#allocation2 + $0xa60] sm:$0xff]
    %v471 = vld [vmem:[#allocation2 + $0xa68] sm:$0xff]
    %v472 = vld [vmem:[#allocation2 + $0xa70] sm:$0xff]
    %v473 = vld [vmem:[#allocation2 + $0xa78] sm:$0xff]
    %v474 = vld [vmem:[#allocation2 + $0xa80] sm:$0xff]
    %v475 = vld [vmem:[#allocation2 + $0xa88] sm:$0xff]
    %v476 = vld [vmem:[#allocation2 + $0xa90] sm:$0xff]
    %v477 = vld [vmem:[#allocation2 + $0xa98] sm:$0xff]
    %v478 = vld [vmem:[#allocation2 + $0xaa0] sm:$0xff]
    %v479 = vld [vmem:[#allocation2 + $0xaa8] sm:$0xff]
    %v480 = vld [vmem:[#allocation2 + $0xab0] sm:$0xff]
    %v481 = vld [vmem:[#allocation2 + $0xab8] sm:$0xff]
    %v482 = vld [vmem:[#allocation2 + $0xac0] sm:$0xff]
    %v483 = vld [vmem:[#allocation2 + $0xac8] sm:$0xff]
    %v484 = vld [vmem:[#allocation2 + $0xad0] sm:$0xff]
    %v485 = vld [vmem:[#allocation2 + $0xad8] sm:$0xff]
    %v486 = vld [vmem:[#allocation2 + $0xae0] sm:$0xff]
    %v487 = vld [vmem:[#allocation2 + $0xae8] sm:$0xff]
    %v488 = vld [vmem:[#allocation2 + $0xaf0] sm:$0xff]
    %v489 = vld [vmem:[#allocation2 + $0xaf8] sm:$0xff]
    %v490 = vld [vmem:[#allocation2 + $0xb00] sm:$0xff]
    %v491 = vld [vmem:[#allocation2 + $0xb08] sm:$0xff]
    %v492 = vld [vmem:[#allocation2 + $0xb10] sm:$0xff]
    %v493 = vld [vmem:[#allocation2 + $0xb18] sm:$0xff]
    %v494 = vld [vmem:[#allocation2 + $0xb20] sm:$0xff]
    %v495 = vld [vmem:[#allocation2 + $0xb28] sm:$0xff]
    %v496 = vld [vmem:[#allocation2 + $0xb30] sm:$0xff]
    %v497 = vld [vmem:[#allocation2 + $0xb38] sm:$0xff]
    %v498 = vld [vmem:[#allocation2 + $0xb40] sm:$0xff]
    %v499 = vld [vmem:[#allocation2 + $0xb48] sm:$0xff]
    %v500 = vld [vmem:[#allocation2 + $0xb50] sm:$0xff]
    %v501 = vld [vmem:[#allocation2 + $0xb58] sm:$0xff]
    %v502 = vld [vmem:[#allocation2 + $0xb60] sm:$0xff]
    %v503 = vld [vmem:[#allocation2 + $0xb68] sm:$0xff]
    %v504 = vld [vmem:[#allocation2 + $0xb70] sm:$0xff]
    %v505 = vld [vmem:[#allocation2 + $0xb78] sm:$0xff]
    %v506 = vld [vmem:[#allocation2 + $0xb80] sm:$0xff]
    %v507 = vld [vmem:[#allocation2 + $0xb88] sm:$0xff]
    %v508 = vld [vmem:[#allocation2 + $0xb90] sm:$0xff]
    %v509 = vld [vmem:[#allocation2 + $0xb98] sm:$0xff]
    %v510 = vld [vmem:[#allocation2 + $0xba0] sm:$0xff]
    %v511 = vld [vmem:[#allocation2 + $0xba8] sm:$0xff]
    %v512 = vld [vmem:[#allocation2 + $0xbb0] sm:$0xff]
    %v513 = vld [vmem:[#allocation2 + $0xbb8] sm:$0xff]
    %v514 = vld [vmem:[#allocation2 + $0xbc0] sm:$0xff]
    %v515 = vld [vmem:[#allocation2 + $0xbc8] sm:$0xff]
    %v516 = vld [vmem:[#allocation2 + $0xbd0] sm:$0xff]
    %v517 = vld [vmem:[#allocation2 + $0xbd8] sm:$0xff]
    %v518 = vld [vmem:[#allocation2 + $0xbe0] sm:$0xff]
    %v519 = vld [vmem:[#allocation2 + $0xbe8] sm:$0xff]
    %v520 = vld [vmem:[#allocation2 + $0xbf0] sm:$0xff]
    %v521 = vld [vmem:[#allocation2 + $0xbf8] sm:$0xff]
    %v522 = vld [vmem:[#allocation2 + $0xc00] sm:$0xff]
    %v523 = vld [vmem:[#allocation2 + $0xc08] sm:$0xff]
    %v524 = vld [vmem:[#allocation2 + $0xc10] sm:$0xff]
    %v525 = vld [vmem:[#allocation2 + $0xc18] sm:$0xff]
    %v526 = vld [vmem:[#allocation2 + $0xc20] sm:$0xff]
    %v527 = vld [vmem:[#allocation2 + $0xc28] sm:$0xff]
    %v528 = vld [vmem:[#allocation2 + $0xc30] sm:$0xff]
    %v529 = vld [vmem:[#allocation2 + $0xc38] sm:$0xff]
    %v530 = vld [vmem:[#allocation4] sm:$0xff]
    %v532 = vlaneseq
    %v533 = vshrl.u32 %v532, 7
    %v534 = vsub.s32 0, %v533
    %v535 = vrot.slane %v530, %v534
    %v536 = vlaneseq
    %v537 = vshrl.u32 %v536, 7
    %v538 = vsub.s32 1, %v537
    %v539 = vrot.slane %v530, %v538
    %v540 = vlaneseq
    %v541 = vshrl.u32 %v540, 7
    %v542 = vsub.s32 2, %v541
    %v543 = vrot.slane %v530, %v542
    %v544 = vlaneseq
    %v545 = vshrl.u32 %v544, 7
    %v546 = vsub.s32 3, %v545
    %v547 = vrot.slane %v530, %v546
    %v548 = vlaneseq
    %v549 = vshrl.u32 %v548, 7
    %v550 = vsub.s32 4, %v549
    %v551 = vrot.slane %v530, %v550
    %v552 = vlaneseq
    %v553 = vshrl.u32 %v552, 7
    %v554 = vsub.s32 5, %v553
    %v555 = vrot.slane %v530, %v554
    %v556 = vlaneseq
    %v557 = vshrl.u32 %v556, 7
    %v558 = vsub.s32 6, %v557
    %v559 = vrot.slane %v530, %v558
    %v560 = vlaneseq
    %v561 = vshrl.u32 %v560, 7
    %v562 = vsub.s32 7, %v561
    %v563 = vrot.slane %v530, %v562
    %v576 = vunpack.c.l.b16 %v134
    %v577 = vunpack.c.h.b16 %v134
    %v578 = vunpack.c.l.b16 %v135
    %v579 = vunpack.c.h.b16 %v135
    %v580 = vunpack.c.l.b16 %v136
    %v581 = vunpack.c.h.b16 %v136
    %v582 = vunpack.c.l.b16 %v137
    %v583 = vpack.c.b16 %v576, %v576
    %v584 = vpack.c.b16 %v577, %v577
    %v585 = vpack.c.b16 %v578, %v578
    %v586 = vpack.c.b16 %v579, %v579
    %v587 = vpack.c.b16 %v580, %v580
    %v588 = vpack.c.b16 %v581, %v581
    %v589 = vpack.c.b16 %v582, %v582
    %v988 = vunpack.c.l.b16 %v138
    %v989 = vunpack.c.h.b16 %v138
    %v990 = vunpack.c.l.b16 %v139
    %v991 = vunpack.c.h.b16 %v139
    %v992 = vunpack.c.l.b16 %v140
    %v993 = vunpack.c.h.b16 %v140
    %v994 = vunpack.c.l.b16 %v141
    %v995 = vunpack.c.h.b16 %v141
    %v996 = vunpack.c.l.b16 %v142
    %v997 = vunpack.c.h.b16 %v142
    %v998 = vunpack.c.l.b16 %v143
    %v999 = vunpack.c.h.b16 %v143
    %v1000 = vunpack.c.l.b16 %v144
    %v1001 = vunpack.c.h.b16 %v144
    %v1002 = vunpack.c.l.b16 %v145
    %v1003 = vunpack.c.h.b16 %v145
    %v1004 = vunpack.c.l.b16 %v146
    %v1005 = vunpack.c.h.b16 %v146
    %v1006 = vunpack.c.l.b16 %v147
    %v1007 = vunpack.c.h.b16 %v147
    %v1008 = vunpack.c.l.b16 %v148
    %v1009 = vunpack.c.h.b16 %v148
    %v1010 = vunpack.c.l.b16 %v149
    %v1011 = vunpack.c.h.b16 %v149
    %v1012 = vunpack.c.l.b16 %v150
    %v1013 = vunpack.c.h.b16 %v150
    %v1014 = vunpack.c.l.b16 %v151
    %v1015 = vunpack.c.h.b16 %v151
    %v1016 = vunpack.c.l.b16 %v152
    %v1017 = vunpack.c.h.b16 %v152
    %v1018 = vunpack.c.l.b16 %v153
    %v1019 = vunpack.c.h.b16 %v153
    %v1020 = vunpack.c.l.b16 %v154
    %v1021 = vunpack.c.h.b16 %v154
    %v1022 = vunpack.c.l.b16 %v155
    %v1023 = vunpack.c.h.b16 %v155
    %v1024 = vunpack.c.l.b16 %v156
    %v1025 = vunpack.c.h.b16 %v156
    %v1026 = vunpack.c.l.b16 %v157
    %v1027 = vunpack.c.h.b16 %v157
    %v1028 = vunpack.c.l.b16 %v158
    %v1029 = vunpack.c.h.b16 %v158
    %v1030 = vunpack.c.l.b16 %v159
    %v1031 = vunpack.c.h.b16 %v159
    %v1032 = vunpack.c.l.b16 %v160
    %v1033 = vunpack.c.h.b16 %v160
    %v1034 = vunpack.c.l.b16 %v161
    %v1035 = vunpack.c.h.b16 %v161
    %v1036 = vunpack.c.l.b16 %v162
    %v1037 = vunpack.c.h.b16 %v162
    %v1038 = vunpack.c.l.b16 %v163
    %v1039 = vunpack.c.h.b16 %v163
    %v1040 = vunpack.c.l.b16 %v164
    %v1041 = vunpack.c.h.b16 %v164
    %v1042 = vunpack.c.l.b16 %v165
    %v1043 = vunpack.c.h.b16 %v165
    %v1044 = vunpack.c.l.b16 %v166
    %v1045 = vunpack.c.h.b16 %v166
    %v1046 = vunpack.c.l.b16 %v167
    %v1047 = vunpack.c.h.b16 %v167
    %v1048 = vunpack.c.l.b16 %v168
    %v1049 = vunpack.c.h.b16 %v168
    %v1050 = vunpack.c.l.b16 %v169
    %v1051 = vunpack.c.h.b16 %v169
    %v1052 = vunpack.c.l.b16 %v170
    %v1053 = vunpack.c.h.b16 %v170
    %v1054 = vunpack.c.l.b16 %v171
    %v1055 = vunpack.c.h.b16 %v171
    %v1056 = vunpack.c.l.b16 %v172
    %v1057 = vunpack.c.h.b16 %v172
    %v1058 = vunpack.c.l.b16 %v173
    %v1059 = vunpack.c.h.b16 %v173
    %v1060 = vunpack.c.l.b16 %v174
    %v1061 = vunpack.c.h.b16 %v174
    %v1062 = vunpack.c.l.b16 %v175
    %v1063 = vunpack.c.h.b16 %v175
    %v1064 = vunpack.c.l.b16 %v176
    %v1065 = vunpack.c.h.b16 %v176
    %v1066 = vunpack.c.l.b16 %v177
    %v1067 = vunpack.c.h.b16 %v177
    %v1068 = vunpack.c.l.b16 %v178
    %v1069 = vunpack.c.h.b16 %v178
    %v1070 = vunpack.c.l.b16 %v179
    %v1071 = vunpack.c.h.b16 %v179
    %v1072 = vunpack.c.l.b16 %v180
    %v1073 = vunpack.c.h.b16 %v180
    %v1074 = vunpack.c.l.b16 %v181
    %v1075 = vunpack.c.h.b16 %v181
    %v1076 = vunpack.c.l.b16 %v182
    %v1077 = vunpack.c.h.b16 %v182
    %v1078 = vunpack.c.l.b16 %v183
    %v1079 = vunpack.c.h.b16 %v183
    %v1080 = vunpack.c.l.b16 %v184
    %v1081 = vunpack.c.h.b16 %v184
    %v1082 = vunpack.c.l.b16 %v185
    %v1083 = vunpack.c.h.b16 %v185
    %v1084 = vunpack.c.l.b16 %v186
    %v1085 = vunpack.c.h.b16 %v186
    %v1086 = vunpack.c.l.b16 %v187
    %v1087 = vunpack.c.h.b16 %v187
    %v1088 = vunpack.c.l.b16 %v188
    %v1089 = vunpack.c.h.b16 %v188
    %v1090 = vunpack.c.l.b16 %v189
    %v1091 = vunpack.c.h.b16 %v189
    %v1092 = vunpack.c.l.b16 %v190
    %v1093 = vunpack.c.h.b16 %v190
    %v1094 = vunpack.c.l.b16 %v191
    %v1095 = vunpack.c.h.b16 %v191
    %v1096 = vunpack.c.l.b16 %v192
    %v1097 = vunpack.c.h.b16 %v192
    %v1098 = vunpack.c.l.b16 %v193
    %v1099 = vunpack.c.h.b16 %v193
    %v1100 = vunpack.c.l.b16 %v194
    %v1101 = vunpack.c.h.b16 %v194
    %v1102 = vunpack.c.l.b16 %v195
    %v1103 = vunpack.c.h.b16 %v195
    %v1104 = vunpack.c.l.b16 %v196
    %v1105 = vunpack.c.h.b16 %v196
    %v1106 = vunpack.c.l.b16 %v197
    %v1107 = vunpack.c.h.b16 %v197
    %v1108 = vunpack.c.l.b16 %v198
    %v1109 = vunpack.c.h.b16 %v198
    %v1110 = vunpack.c.l.b16 %v199
    %v1111 = vunpack.c.h.b16 %v199
    %v1112 = vunpack.c.l.b16 %v200
    %v1113 = vunpack.c.h.b16 %v200
    %v1114 = vunpack.c.l.b16 %v201
    %v1115 = vunpack.c.h.b16 %v201
    %v1116 = vunpack.c.l.b16 %v202
    %v1117 = vunpack.c.h.b16 %v202
    %v1118 = vunpack.c.l.b16 %v203
    %v1119 = vunpack.c.h.b16 %v203
    %v1120 = vunpack.c.l.b16 %v204
    %v1121 = vunpack.c.h.b16 %v204
    %v1122 = vunpack.c.l.b16 %v205
    %v1123 = vunpack.c.h.b16 %v205
    %v1124 = vunpack.c.l.b16 %v206
    %v1125 = vunpack.c.h.b16 %v206
    %v1126 = vunpack.c.l.b16 %v207
    %v1127 = vunpack.c.h.b16 %v207
    %v1128 = vunpack.c.l.b16 %v208
    %v1129 = vunpack.c.h.b16 %v208
    %v1130 = vunpack.c.l.b16 %v209
    %v1131 = vunpack.c.h.b16 %v209
    %v1132 = vunpack.c.l.b16 %v210
    %v1133 = vunpack.c.h.b16 %v210
    %v1134 = vunpack.c.l.b16 %v211
    %v1135 = vunpack.c.h.b16 %v211
    %v1136 = vunpack.c.l.b16 %v212
    %v1137 = vunpack.c.h.b16 %v212
    %v1138 = vunpack.c.l.b16 %v213
    %v1139 = vunpack.c.h.b16 %v213
    %v1140 = vunpack.c.l.b16 %v214
    %v1141 = vunpack.c.h.b16 %v214
    %v1142 = vunpack.c.l.b16 %v215
    %v1143 = vunpack.c.h.b16 %v215
    %v1144 = vunpack.c.l.b16 %v216
    %v1145 = vunpack.c.h.b16 %v216
    %v1146 = vunpack.c.l.b16 %v217
    %v1147 = vunpack.c.h.b16 %v217
    %v1148 = vunpack.c.l.b16 %v218
    %v1149 = vunpack.c.h.b16 %v218
    %v1150 = vunpack.c.l.b16 %v219
    %v1151 = vunpack.c.h.b16 %v219
    %v1152 = vunpack.c.l.b16 %v220
    %v1153 = vunpack.c.h.b16 %v220
    %v1154 = vunpack.c.l.b16 %v221
    %v1155 = vunpack.c.h.b16 %v221
    %v1156 = vunpack.c.l.b16 %v222
    %v1157 = vunpack.c.h.b16 %v222
    %v1158 = vunpack.c.l.b16 %v223
    %v1159 = vunpack.c.h.b16 %v223
    %v1160 = vunpack.c.l.b16 %v224
    %v1161 = vunpack.c.h.b16 %v224
    %v1162 = vunpack.c.l.b16 %v225
    %v1163 = vunpack.c.h.b16 %v225
    %v1164 = vunpack.c.l.b16 %v226
    %v1165 = vunpack.c.h.b16 %v226
    %v1166 = vunpack.c.l.b16 %v227
    %v1167 = vunpack.c.h.b16 %v227
    %v1168 = vunpack.c.l.b16 %v228
    %v1169 = vunpack.c.h.b16 %v228
    %v1170 = vunpack.c.l.b16 %v229
    %v1171 = vunpack.c.h.b16 %v229
    %v1172 = vunpack.c.l.b16 %v230
    %v1173 = vunpack.c.h.b16 %v230
    %v1174 = vunpack.c.l.b16 %v231
    %v1175 = vunpack.c.h.b16 %v231
    %v1176 = vunpack.c.l.b16 %v232
    %v1177 = vunpack.c.h.b16 %v232
    %v1178 = vunpack.c.l.b16 %v233
    %v1179 = vunpack.c.h.b16 %v233
    %v1180 = vunpack.c.l.b16 %v234
    %v1181 = vunpack.c.h.b16 %v234
    %v1182 = vunpack.c.l.b16 %v235
    %v1183 = vunpack.c.h.b16 %v235
    %v1184 = vunpack.c.l.b16 %v236
    %v1185 = vunpack.c.h.b16 %v236
    %v1186 = vunpack.c.l.b16 %v237
    %v1187 = vunpack.c.h.b16 %v237
    %v1188 = vunpack.c.l.b16 %v238
    %v1189 = vunpack.c.h.b16 %v238
    %v1190 = vunpack.c.l.b16 %v239
    %v1191 = vunpack.c.h.b16 %v239
    %v1192 = vunpack.c.l.b16 %v240
    %v1193 = vunpack.c.h.b16 %v240
    %v1194 = vunpack.c.l.b16 %v241
    %v1195 = vunpack.c.h.b16 %v241
    %v1196 = vunpack.c.l.b16 %v242
    %v1197 = vunpack.c.h.b16 %v242
    %v1198 = vunpack.c.l.b16 %v243
    %v1199 = vunpack.c.h.b16 %v243
    %v1200 = vunpack.c.l.b16 %v244
    %v1201 = vunpack.c.h.b16 %v244
    %v1202 = vunpack.c.l.b16 %v245
    %v1203 = vunpack.c.h.b16 %v245
    %v1204 = vunpack.c.l.b16 %v246
    %v1205 = vunpack.c.h.b16 %v246
    %v1206 = vunpack.c.l.b16 %v247
    %v1207 = vunpack.c.h.b16 %v247
    %v1208 = vunpack.c.l.b16 %v248
    %v1209 = vunpack.c.h.b16 %v248
    %v1210 = vunpack.c.l.b16 %v249
    %v1211 = vunpack.c.h.b16 %v249
    %v1212 = vunpack.c.l.b16 %v250
    %v1213 = vunpack.c.h.b16 %v250
    %v1214 = vunpack.c.l.b16 %v251
    %v1215 = vunpack.c.h.b16 %v251
    %v1216 = vunpack.c.l.b16 %v252
    %v1217 = vunpack.c.h.b16 %v252
    %v1218 = vunpack.c.l.b16 %v253
    %v1219 = vunpack.c.h.b16 %v253
    %v1220 = vunpack.c.l.b16 %v254
    %v1221 = vunpack.c.h.b16 %v254
    %v1222 = vunpack.c.l.b16 %v255
    %v1223 = vunpack.c.h.b16 %v255
    %v1224 = vunpack.c.l.b16 %v256
    %v1225 = vunpack.c.h.b16 %v256
    %v1226 = vunpack.c.l.b16 %v257
    %v1227 = vunpack.c.h.b16 %v257
    %v1228 = vunpack.c.l.b16 %v258
    %v1229 = vunpack.c.h.b16 %v258
    %v1230 = vunpack.c.l.b16 %v259
    %v1231 = vunpack.c.h.b16 %v259
    %v1232 = vunpack.c.l.b16 %v260
    %v1233 = vunpack.c.h.b16 %v260
    %v1234 = vunpack.c.l.b16 %v261
    %v1235 = vunpack.c.h.b16 %v261
    %v1236 = vunpack.c.l.b16 %v262
    %v1237 = vunpack.c.h.b16 %v262
    %v1238 = vunpack.c.l.b16 %v263
    %v1239 = vunpack.c.h.b16 %v263
    %v1240 = vunpack.c.l.b16 %v264
    %v1241 = vunpack.c.h.b16 %v264
    %v1242 = vunpack.c.l.b16 %v265
    %v1243 = vunpack.c.h.b16 %v265
    %v1244 = vunpack.c.l.b16 %v266
    %v1245 = vunpack.c.h.b16 %v266
    %v1246 = vunpack.c.l.b16 %v267
    %v1247 = vunpack.c.h.b16 %v267
    %v1248 = vunpack.c.l.b16 %v268
    %v1249 = vunpack.c.h.b16 %v268
    %v1250 = vunpack.c.l.b16 %v269
    %v1251 = vunpack.c.h.b16 %v269
    %v1252 = vunpack.c.l.b16 %v270
    %v1253 = vunpack.c.h.b16 %v270
    %v1254 = vunpack.c.l.b16 %v271
    %v1255 = vunpack.c.h.b16 %v271
    %v1256 = vunpack.c.l.b16 %v272
    %v1257 = vunpack.c.h.b16 %v272
    %v1258 = vunpack.c.l.b16 %v273
    %v1259 = vunpack.c.h.b16 %v273
    %v1260 = vunpack.c.l.b16 %v274
    %v1261 = vunpack.c.h.b16 %v274
    %v1262 = vunpack.c.l.b16 %v275
    %v1263 = vunpack.c.h.b16 %v275
    %v1264 = vunpack.c.l.b16 %v276
    %v1265 = vunpack.c.h.b16 %v276
    %v1266 = vunpack.c.l.b16 %v277
    %v1267 = vunpack.c.h.b16 %v277
    %v1268 = vunpack.c.l.b16 %v278
    %v1269 = vunpack.c.h.b16 %v278
    %v1270 = vunpack.c.l.b16 %v279
    %v1271 = vunpack.c.h.b16 %v279
    %v1272 = vunpack.c.l.b16 %v280
    %v1273 = vunpack.c.h.b16 %v280
    %v1274 = vunpack.c.l.b16 %v281
    %v1275 = vunpack.c.h.b16 %v281
    %v1276 = vunpack.c.l.b16 %v282
    %v1277 = vunpack.c.h.b16 %v282
    %v1278 = vunpack.c.l.b16 %v283
    %v1279 = vunpack.c.h.b16 %v283
    %v1280 = vunpack.c.l.b16 %v284
    %v1281 = vunpack.c.h.b16 %v284
    %v1282 = vunpack.c.l.b16 %v285
    %v1283 = vunpack.c.h.b16 %v285
    %v1284 = vunpack.c.l.b16 %v286
    %v1285 = vunpack.c.h.b16 %v286
    %v1286 = vunpack.c.l.b16 %v287
    %v1287 = vunpack.c.h.b16 %v287
    %v1288 = vunpack.c.l.b16 %v288
    %v1289 = vunpack.c.h.b16 %v288
    %v1290 = vunpack.c.l.b16 %v289
    %v1291 = vunpack.c.h.b16 %v289
    %v1292 = vunpack.c.l.b16 %v290
    %v1293 = vunpack.c.h.b16 %v290
    %v1294 = vunpack.c.l.b16 %v291
    %v1295 = vunpack.c.h.b16 %v291
    %v1296 = vunpack.c.l.b16 %v292
    %v1297 = vunpack.c.h.b16 %v292
    %v1298 = vunpack.c.l.b16 %v293
    %v1299 = vunpack.c.h.b16 %v293
    %v1300 = vunpack.c.l.b16 %v294
    %v1301 = vunpack.c.h.b16 %v294
    %v1302 = vunpack.c.l.b16 %v295
    %v1303 = vunpack.c.h.b16 %v295
    %v1304 = vunpack.c.l.b16 %v296
    %v1305 = vunpack.c.h.b16 %v296
    %v1306 = vunpack.c.l.b16 %v297
    %v1307 = vunpack.c.h.b16 %v297
    %v1308 = vunpack.c.l.b16 %v298
    %v1309 = vunpack.c.h.b16 %v298
    %v1310 = vunpack.c.l.b16 %v299
    %v1311 = vunpack.c.h.b16 %v299
    %v1312 = vunpack.c.l.b16 %v300
    %v1313 = vunpack.c.h.b16 %v300
    %v1314 = vunpack.c.l.b16 %v301
    %v1315 = vunpack.c.h.b16 %v301
    %v1316 = vunpack.c.l.b16 %v302
    %v1317 = vunpack.c.h.b16 %v302
    %v1318 = vunpack.c.l.b16 %v303
    %v1319 = vunpack.c.h.b16 %v303
    %v1320 = vunpack.c.l.b16 %v304
    %v1321 = vunpack.c.h.b16 %v304
    %v1322 = vunpack.c.l.b16 %v305
    %v1323 = vunpack.c.h.b16 %v305
    %v1324 = vunpack.c.l.b16 %v306
    %v1325 = vunpack.c.h.b16 %v306
    %v1326 = vunpack.c.l.b16 %v307
    %v1327 = vunpack.c.h.b16 %v307
    %v1328 = vunpack.c.l.b16 %v308
    %v1329 = vunpack.c.h.b16 %v308
    %v1330 = vunpack.c.l.b16 %v309
    %v1331 = vunpack.c.h.b16 %v309
    %v1332 = vunpack.c.l.b16 %v310
    %v1333 = vunpack.c.h.b16 %v310
    %v1334 = vunpack.c.l.b16 %v311
    %v1335 = vunpack.c.h.b16 %v311
    %v1336 = vunpack.c.l.b16 %v312
    %v1337 = vunpack.c.h.b16 %v312
    %v1338 = vunpack.c.l.b16 %v313
    %v1339 = vunpack.c.h.b16 %v313
    %v1340 = vunpack.c.l.b16 %v314
    %v1341 = vunpack.c.h.b16 %v314
    %v1342 = vunpack.c.l.b16 %v315
    %v1343 = vunpack.c.h.b16 %v315
    %v1344 = vunpack.c.l.b16 %v316
    %v1345 = vunpack.c.h.b16 %v316
    %v1346 = vunpack.c.l.b16 %v317
    %v1347 = vunpack.c.h.b16 %v317
    %v1348 = vunpack.c.l.b16 %v318
    %v1349 = vunpack.c.h.b16 %v318
    %v1350 = vunpack.c.l.b16 %v319
    %v1351 = vunpack.c.h.b16 %v319
    %v1352 = vunpack.c.l.b16 %v320
    %v1353 = vunpack.c.h.b16 %v320
    %v1354 = vunpack.c.l.b16 %v321
    %v1355 = vunpack.c.h.b16 %v321
    %v1356 = vunpack.c.l.b16 %v322
    %v1357 = vunpack.c.h.b16 %v322
    %v1358 = vunpack.c.l.b16 %v323
    %v1359 = vunpack.c.h.b16 %v323
    %v1360 = vunpack.c.l.b16 %v324
    %v1361 = vunpack.c.h.b16 %v324
    %v1362 = vunpack.c.l.b16 %v325
    %v1363 = vunpack.c.h.b16 %v325
    %v1364 = vunpack.c.l.b16 %v326
    %v1365 = vunpack.c.h.b16 %v326
    %v1366 = vunpack.c.l.b16 %v327
    %v1367 = vunpack.c.h.b16 %v327
    %v1368 = vunpack.c.l.b16 %v328
    %v1369 = vunpack.c.h.b16 %v328
    %v1370 = vunpack.c.l.b16 %v329
    %v1371 = vunpack.c.h.b16 %v329
    %v1372 = vunpack.c.l.b16 %v330
    %v1373 = vunpack.c.h.b16 %v330
    %v1374 = vunpack.c.l.b16 %v331
    %v1375 = vunpack.c.h.b16 %v331
    %v1376 = vunpack.c.l.b16 %v332
    %v1377 = vunpack.c.h.b16 %v332
    %v1378 = vunpack.c.l.b16 %v333
    %v1379 = vunpack.c.h.b16 %v333
    %v1380 = vunpack.c.l.b16 %v334
    %v1381 = vunpack.c.h.b16 %v334
    %v1382 = vunpack.c.l.b16 %v335
    %v1383 = vunpack.c.h.b16 %v335
    %v1384 = vunpack.c.l.b16 %v336
    %v1385 = vunpack.c.h.b16 %v336
    %v1386 = vunpack.c.l.b16 %v337
    %v1387 = vunpack.c.h.b16 %v337
    %v1388 = vunpack.c.l.b16 %v338
    %v1389 = vunpack.c.h.b16 %v338
    %v1390 = vunpack.c.l.b16 %v339
    %v1391 = vunpack.c.h.b16 %v339
    %v1392 = vunpack.c.l.b16 %v340
    %v1393 = vunpack.c.h.b16 %v340
    %v1394 = vunpack.c.l.b16 %v341
    %v1395 = vunpack.c.h.b16 %v341
    %v1396 = vunpack.c.l.b16 %v342
    %v1397 = vunpack.c.h.b16 %v342
    %v1398 = vunpack.c.l.b16 %v343
    %v1399 = vunpack.c.h.b16 %v343
    %v1400 = vunpack.c.l.b16 %v344
    %v1401 = vunpack.c.h.b16 %v344
    %v1402 = vunpack.c.l.b16 %v345
    %v1403 = vunpack.c.h.b16 %v345
    %v1404 = vunpack.c.l.b16 %v346
    %v1405 = vunpack.c.h.b16 %v346
    %v1406 = vunpack.c.l.b16 %v347
    %v1407 = vunpack.c.h.b16 %v347
    %v1408 = vunpack.c.l.b16 %v348
    %v1409 = vunpack.c.h.b16 %v348
    %v1410 = vunpack.c.l.b16 %v349
    %v1411 = vunpack.c.h.b16 %v349
    %v1412 = vunpack.c.l.b16 %v350
    %v1413 = vunpack.c.h.b16 %v350
    %v1414 = vunpack.c.l.b16 %v351
    %v1415 = vunpack.c.h.b16 %v351
    %v1416 = vunpack.c.l.b16 %v352
    %v1417 = vunpack.c.h.b16 %v352
    %v1418 = vunpack.c.l.b16 %v353
    %v1419 = vunpack.c.h.b16 %v353
    %v1420 = vunpack.c.l.b16 %v354
    %v1421 = vunpack.c.h.b16 %v354
    %v1422 = vunpack.c.l.b16 %v355
    %v1423 = vunpack.c.h.b16 %v355
    %v1424 = vunpack.c.l.b16 %v356
    %v1425 = vunpack.c.h.b16 %v356
    %v1426 = vunpack.c.l.b16 %v357
    %v1427 = vunpack.c.h.b16 %v357
    %v1428 = vunpack.c.l.b16 %v358
    %v1429 = vunpack.c.h.b16 %v358
    %v1430 = vunpack.c.l.b16 %v359
    %v1431 = vunpack.c.h.b16 %v359
    %v1432 = vunpack.c.l.b16 %v360
    %v1433 = vunpack.c.h.b16 %v360
    %v1434 = vunpack.c.l.b16 %v361
    %v1435 = vunpack.c.h.b16 %v361
    %v1436 = vunpack.c.l.b16 %v362
    %v1437 = vunpack.c.h.b16 %v362
    %v1438 = vunpack.c.l.b16 %v363
    %v1439 = vunpack.c.h.b16 %v363
    %v1440 = vunpack.c.l.b16 %v364
    %v1441 = vunpack.c.h.b16 %v364
    %v1442 = vunpack.c.l.b16 %v365
    %v1443 = vunpack.c.h.b16 %v365
    %v1444 = vunpack.c.l.b16 %v366
    %v1445 = vunpack.c.h.b16 %v366
    %v1446 = vunpack.c.l.b16 %v367
    %v1447 = vunpack.c.h.b16 %v367
    %v1448 = vunpack.c.l.b16 %v368
    %v1449 = vunpack.c.h.b16 %v368
    %v1450 = vunpack.c.l.b16 %v369
    %v1451 = vunpack.c.h.b16 %v369
    %v1452 = vunpack.c.l.b16 %v370
    %v1453 = vunpack.c.h.b16 %v370
    %v1454 = vunpack.c.l.b16 %v371
    %v1455 = vunpack.c.h.b16 %v371
    %v1456 = vunpack.c.l.b16 %v372
    %v1457 = vunpack.c.h.b16 %v372
    %v1458 = vunpack.c.l.b16 %v373
    %v1459 = vunpack.c.h.b16 %v373
    %v1460 = vunpack.c.l.b16 %v374
    %v1461 = vunpack.c.h.b16 %v374
    %v1462 = vunpack.c.l.b16 %v375
    %v1463 = vunpack.c.h.b16 %v375
    %v1464 = vunpack.c.l.b16 %v376
    %v1465 = vunpack.c.h.b16 %v376
    %v1466 = vunpack.c.l.b16 %v377
    %v1467 = vunpack.c.h.b16 %v377
    %v1468 = vunpack.c.l.b16 %v378
    %v1469 = vunpack.c.h.b16 %v378
    %v1470 = vunpack.c.l.b16 %v379
    %v1471 = vunpack.c.h.b16 %v379
    %v1472 = vunpack.c.l.b16 %v380
    %v1473 = vunpack.c.h.b16 %v380
    %v1474 = vunpack.c.l.b16 %v381
    %v1475 = vunpack.c.h.b16 %v381
    %v1476 = vunpack.c.l.b16 %v382
    %v1477 = vunpack.c.h.b16 %v382
    %v1478 = vunpack.c.l.b16 %v383
    %v1479 = vunpack.c.h.b16 %v383
    %v1480 = vunpack.c.l.b16 %v384
    %v1481 = vunpack.c.h.b16 %v384
    %v1482 = vunpack.c.l.b16 %v385
    %v1483 = vunpack.c.h.b16 %v385
    %v1484 = vunpack.c.l.b16 %v386
    %v1485 = vunpack.c.h.b16 %v386
    %v1486 = vunpack.c.l.b16 %v387
    %v1487 = vunpack.c.h.b16 %v387
    %v1488 = vunpack.c.l.b16 %v388
    %v1489 = vunpack.c.h.b16 %v388
    %v1490 = vunpack.c.l.b16 %v389
    %v1491 = vunpack.c.h.b16 %v389
    %v1492 = vunpack.c.l.b16 %v390
    %v1493 = vunpack.c.h.b16 %v390
    %v1494 = vunpack.c.l.b16 %v391
    %v1495 = vunpack.c.h.b16 %v391
    %v1496 = vunpack.c.l.b16 %v392
    %v1497 = vunpack.c.h.b16 %v392
    %v1498 = vunpack.c.l.b16 %v393
    %v1499 = vunpack.c.h.b16 %v393
    %v1500 = vunpack.c.l.b16 %v394
    %v1501 = vunpack.c.h.b16 %v394
    %v1502 = vunpack.c.l.b16 %v395
    %v1503 = vunpack.c.h.b16 %v395
    %v1504 = vunpack.c.l.b16 %v396
    %v1505 = vunpack.c.h.b16 %v396
    %v1506 = vunpack.c.l.b16 %v397
    %v1507 = vunpack.c.h.b16 %v397
    %v1508 = vunpack.c.l.b16 %v398
    %v1509 = vunpack.c.h.b16 %v398
    %v1510 = vunpack.c.l.b16 %v399
    %v1511 = vunpack.c.h.b16 %v399
    %v1512 = vunpack.c.l.b16 %v400
    %v1513 = vunpack.c.h.b16 %v400
    %v1514 = vunpack.c.l.b16 %v401
    %v1515 = vunpack.c.h.b16 %v401
    %v1516 = vunpack.c.l.b16 %v402
    %v1517 = vunpack.c.h.b16 %v402
    %v1518 = vunpack.c.l.b16 %v403
    %v1519 = vunpack.c.h.b16 %v403
    %v1520 = vunpack.c.l.b16 %v404
    %v1521 = vunpack.c.h.b16 %v404
    %v1522 = vunpack.c.l.b16 %v405
    %v1523 = vunpack.c.h.b16 %v405
    %v1524 = vunpack.c.l.b16 %v406
    %v1525 = vunpack.c.h.b16 %v406
    %v1526 = vunpack.c.l.b16 %v407
    %v1527 = vunpack.c.h.b16 %v407
    %v1528 = vunpack.c.l.b16 %v408
    %v1529 = vunpack.c.h.b16 %v408
    %v1530 = vunpack.c.l.b16 %v409
    %v1531 = vunpack.c.h.b16 %v409
    %v1532 = vunpack.c.l.b16 %v410
    %v1533 = vunpack.c.h.b16 %v410
    %v1534 = vunpack.c.l.b16 %v411
    %v1535 = vunpack.c.h.b16 %v411
    %v1536 = vunpack.c.l.b16 %v412
    %v1537 = vunpack.c.h.b16 %v412
    %v1538 = vunpack.c.l.b16 %v413
    %v1539 = vunpack.c.h.b16 %v413
    %v1540 = vunpack.c.l.b16 %v414
    %v1541 = vunpack.c.h.b16 %v414
    %v1542 = vunpack.c.l.b16 %v415
    %v1543 = vunpack.c.h.b16 %v415
    %v1544 = vunpack.c.l.b16 %v416
    %v1545 = vunpack.c.h.b16 %v416
    %v1546 = vunpack.c.l.b16 %v417
    %v1547 = vunpack.c.h.b16 %v417
    %v1548 = vunpack.c.l.b16 %v418
    %v1549 = vunpack.c.h.b16 %v418
    %v1550 = vunpack.c.l.b16 %v419
    %v1551 = vunpack.c.h.b16 %v419
    %v1552 = vunpack.c.l.b16 %v420
    %v1553 = vunpack.c.h.b16 %v420
    %v1554 = vunpack.c.l.b16 %v421
    %v1555 = vunpack.c.h.b16 %v421
    %v1556 = vunpack.c.l.b16 %v422
    %v1557 = vunpack.c.h.b16 %v422
    %v1558 = vunpack.c.l.b16 %v423
    %v1559 = vunpack.c.h.b16 %v423
    %v1560 = vunpack.c.l.b16 %v424
    %v1561 = vunpack.c.h.b16 %v424
    %v1562 = vunpack.c.l.b16 %v425
    %v1563 = vunpack.c.h.b16 %v425
    %v1564 = vunpack.c.l.b16 %v426
    %v1565 = vunpack.c.h.b16 %v426
    %v1566 = vunpack.c.l.b16 %v427
    %v1567 = vunpack.c.h.b16 %v427
    %v1568 = vunpack.c.l.b16 %v428
    %v1569 = vunpack.c.h.b16 %v428
    %v1570 = vunpack.c.l.b16 %v429
    %v1571 = vunpack.c.h.b16 %v429
    %v1572 = vunpack.c.l.b16 %v430
    %v1573 = vunpack.c.h.b16 %v430
    %v1574 = vunpack.c.l.b16 %v431
    %v1575 = vunpack.c.h.b16 %v431
    %v1576 = vunpack.c.l.b16 %v432
    %v1577 = vunpack.c.h.b16 %v432
    %v1578 = vunpack.c.l.b16 %v433
    %v1579 = vunpack.c.h.b16 %v433
    %v1580 = vunpack.c.l.b16 %v434
    %v1581 = vunpack.c.h.b16 %v434
    %v1582 = vunpack.c.l.b16 %v435
    %v1583 = vunpack.c.h.b16 %v435
    %v1584 = vunpack.c.l.b16 %v436
    %v1585 = vunpack.c.h.b16 %v436
    %v1586 = vunpack.c.l.b16 %v437
    %v1587 = vunpack.c.h.b16 %v437
    %v1588 = vunpack.c.l.b16 %v438
    %v1589 = vunpack.c.h.b16 %v438
    %v1590 = vunpack.c.l.b16 %v439
    %v1591 = vunpack.c.h.b16 %v439
    %v1592 = vunpack.c.l.b16 %v440
    %v1593 = vunpack.c.h.b16 %v440
    %v1594 = vunpack.c.l.b16 %v441
    %v1595 = vunpack.c.h.b16 %v441
    %v1596 = vunpack.c.l.b16 %v442
    %v1597 = vunpack.c.h.b16 %v442
    %v1598 = vunpack.c.l.b16 %v443
    %v1599 = vunpack.c.h.b16 %v443
    %v1600 = vunpack.c.l.b16 %v444
    %v1601 = vunpack.c.h.b16 %v444
    %v1602 = vunpack.c.l.b16 %v445
    %v1603 = vunpack.c.h.b16 %v445
    %v1604 = vunpack.c.l.b16 %v446
    %v1605 = vunpack.c.h.b16 %v446
    %v1606 = vunpack.c.l.b16 %v447
    %v1607 = vunpack.c.h.b16 %v447
    %v1608 = vunpack.c.l.b16 %v448
    %v1609 = vunpack.c.h.b16 %v448
    %v1610 = vunpack.c.l.b16 %v449
    %v1611 = vunpack.c.h.b16 %v449
    %v1612 = vunpack.c.l.b16 %v450
    %v1613 = vunpack.c.h.b16 %v450
    %v1614 = vunpack.c.l.b16 %v451
    %v1615 = vunpack.c.h.b16 %v451
    %v1616 = vunpack.c.l.b16 %v452
    %v1617 = vunpack.c.h.b16 %v452
    %v1618 = vunpack.c.l.b16 %v453
    %v1619 = vunpack.c.h.b16 %v453
    %v1620 = vunpack.c.l.b16 %v454
    %v1621 = vunpack.c.h.b16 %v454
    %v1622 = vunpack.c.l.b16 %v455
    %v1623 = vunpack.c.h.b16 %v455
    %v1624 = vunpack.c.l.b16 %v456
    %v1625 = vunpack.c.h.b16 %v456
    %v1626 = vunpack.c.l.b16 %v457
    %v1627 = vunpack.c.h.b16 %v457
    %v1628 = vunpack.c.l.b16 %v458
    %v1629 = vunpack.c.h.b16 %v458
    %v1630 = vunpack.c.l.b16 %v459
    %v1631 = vunpack.c.h.b16 %v459
    %v1632 = vunpack.c.l.b16 %v460
    %v1633 = vunpack.c.h.b16 %v460
    %v1634 = vunpack.c.l.b16 %v461
    %v1635 = vunpack.c.h.b16 %v461
    %v1636 = vunpack.c.l.b16 %v462
    %v1637 = vunpack.c.h.b16 %v462
    %v1638 = vunpack.c.l.b16 %v463
    %v1639 = vunpack.c.h.b16 %v463
    %v1640 = vunpack.c.l.b16 %v464
    %v1641 = vunpack.c.h.b16 %v464
    %v1642 = vunpack.c.l.b16 %v465
    %v1643 = vunpack.c.h.b16 %v465
    %v1644 = vunpack.c.l.b16 %v466
    %v1645 = vunpack.c.h.b16 %v466
    %v1646 = vunpack.c.l.b16 %v467
    %v1647 = vunpack.c.h.b16 %v467
    %v1648 = vunpack.c.l.b16 %v468
    %v1649 = vunpack.c.h.b16 %v468
    %v1650 = vunpack.c.l.b16 %v469
    %v1651 = vunpack.c.h.b16 %v469
    %v1652 = vunpack.c.l.b16 %v470
    %v1653 = vunpack.c.h.b16 %v470
    %v1654 = vunpack.c.l.b16 %v471
    %v1655 = vunpack.c.h.b16 %v471
    %v1656 = vunpack.c.l.b16 %v472
    %v1657 = vunpack.c.h.b16 %v472
    %v1658 = vunpack.c.l.b16 %v473
    %v1659 = vunpack.c.h.b16 %v473
    %v1660 = vunpack.c.l.b16 %v474
    %v1661 = vunpack.c.h.b16 %v474
    %v1662 = vunpack.c.l.b16 %v475
    %v1663 = vunpack.c.h.b16 %v475
    %v1664 = vunpack.c.l.b16 %v476
    %v1665 = vunpack.c.h.b16 %v476
    %v1666 = vunpack.c.l.b16 %v477
    %v1667 = vunpack.c.h.b16 %v477
    %v1668 = vunpack.c.l.b16 %v478
    %v1669 = vunpack.c.h.b16 %v478
    %v1670 = vunpack.c.l.b16 %v479
    %v1671 = vunpack.c.h.b16 %v479
    %v1672 = vunpack.c.l.b16 %v480
    %v1673 = vunpack.c.h.b16 %v480
    %v1674 = vunpack.c.l.b16 %v481
    %v1675 = vunpack.c.h.b16 %v481
    %v1676 = vunpack.c.l.b16 %v482
    %v1677 = vunpack.c.h.b16 %v482
    %v1678 = vunpack.c.l.b16 %v483
    %v1679 = vunpack.c.h.b16 %v483
    %v1680 = vunpack.c.l.b16 %v484
    %v1681 = vunpack.c.h.b16 %v484
    %v1682 = vunpack.c.l.b16 %v485
    %v1683 = vunpack.c.h.b16 %v485
    %v1684 = vunpack.c.l.b16 %v486
    %v1685 = vunpack.c.h.b16 %v486
    %v1686 = vunpack.c.l.b16 %v487
    %v1687 = vunpack.c.h.b16 %v487
    %v1688 = vunpack.c.l.b16 %v488
    %v1689 = vunpack.c.h.b16 %v488
    %v1690 = vunpack.c.l.b16 %v489
    %v1691 = vunpack.c.h.b16 %v489
    %v1692 = vunpack.c.l.b16 %v490
    %v1693 = vunpack.c.h.b16 %v490
    %v1694 = vunpack.c.l.b16 %v491
    %v1695 = vunpack.c.h.b16 %v491
    %v1696 = vunpack.c.l.b16 %v492
    %v1697 = vunpack.c.h.b16 %v492
    %v1698 = vunpack.c.l.b16 %v493
    %v1699 = vunpack.c.h.b16 %v493
    %v1700 = vunpack.c.l.b16 %v494
    %v1701 = vunpack.c.h.b16 %v494
    %v1702 = vunpack.c.l.b16 %v495
    %v1703 = vunpack.c.h.b16 %v495
    %v1704 = vunpack.c.l.b16 %v496
    %v1705 = vunpack.c.h.b16 %v496
    %v1706 = vunpack.c.l.b16 %v497
    %v1707 = vunpack.c.h.b16 %v497
    %v1708 = vunpack.c.l.b16 %v498
    %v1709 = vunpack.c.h.b16 %v498
    %v1710 = vunpack.c.l.b16 %v499
    %v1711 = vunpack.c.h.b16 %v499
    %v1712 = vunpack.c.l.b16 %v500
    %v1713 = vunpack.c.h.b16 %v500
    %v1714 = vunpack.c.l.b16 %v501
    %v1715 = vunpack.c.h.b16 %v501
    %v1716 = vunpack.c.l.b16 %v502
    %v1717 = vunpack.c.h.b16 %v502
    %v1718 = vunpack.c.l.b16 %v503
    %v1719 = vunpack.c.h.b16 %v503
    %v1720 = vunpack.c.l.b16 %v504
    %v1721 = vunpack.c.h.b16 %v504
    %v1722 = vunpack.c.l.b16 %v505
    %v1723 = vunpack.c.h.b16 %v505
    %v1724 = vunpack.c.l.b16 %v506
    %v1725 = vunpack.c.h.b16 %v506
    %v1726 = vunpack.c.l.b16 %v507
    %v1727 = vunpack.c.h.b16 %v507
    %v1728 = vunpack.c.l.b16 %v508
    %v1729 = vunpack.c.h.b16 %v508
    %v1730 = vunpack.c.l.b16 %v509
    %v1731 = vunpack.c.h.b16 %v509
    %v1732 = vunpack.c.l.b16 %v510
    %v1733 = vunpack.c.h.b16 %v510
    %v1734 = vunpack.c.l.b16 %v511
    %v1735 = vunpack.c.h.b16 %v511
    %v1736 = vunpack.c.l.b16 %v512
    %v1737 = vunpack.c.h.b16 %v512
    %v1738 = vunpack.c.l.b16 %v513
    %v1739 = vunpack.c.h.b16 %v513
    %v1740 = vunpack.c.l.b16 %v514
    %v1741 = vunpack.c.h.b16 %v514
    %v1742 = vunpack.c.l.b16 %v515
    %v1743 = vunpack.c.h.b16 %v515
    %v1744 = vunpack.c.l.b16 %v516
    %v1745 = vunpack.c.h.b16 %v516
    %v1746 = vunpack.c.l.b16 %v517
    %v1747 = vunpack.c.h.b16 %v517
    %v1748 = vunpack.c.l.b16 %v518
    %v1749 = vunpack.c.h.b16 %v518
    %v1750 = vunpack.c.l.b16 %v519
    %v1751 = vunpack.c.h.b16 %v519
    %v1752 = vunpack.c.l.b16 %v520
    %v1753 = vunpack.c.h.b16 %v520
    %v1754 = vunpack.c.l.b16 %v521
    %v1755 = vunpack.c.h.b16 %v521
    %v1756 = vunpack.c.l.b16 %v522
    %v1757 = vunpack.c.h.b16 %v522
    %v1758 = vunpack.c.l.b16 %v523
    %v1759 = vunpack.c.h.b16 %v523
    %v1760 = vunpack.c.l.b16 %v524
    %v1761 = vunpack.c.h.b16 %v524
    %v1762 = vunpack.c.l.b16 %v525
    %v1763 = vunpack.c.h.b16 %v525
    %v1764 = vunpack.c.l.b16 %v526
    %v1765 = vunpack.c.h.b16 %v526
    %v1766 = vunpack.c.l.b16 %v527
    %v1767 = vunpack.c.h.b16 %v527
    %v1768 = vunpack.c.l.b16 %v528
    %v1769 = vunpack.c.h.b16 %v528
    %v1770 = vunpack.c.l.b16 %v529
    %v1771 = vunpack.c.h.b16 %v529
    %v1772 = vpack.c.b16 %v996, %v988
    %v1773 = vpack.c.b16 %v997, %v989
    %v1774 = vpack.c.b16 %v998, %v990
    %v1775 = vpack.c.b16 %v999, %v991
    %v1776 = vpack.c.b16 %v1000, %v992
    %v1777 = vpack.c.b16 %v1001, %v993
    %v1778 = vpack.c.b16 %v1002, %v994
    %v1779 = vpack.c.b16 %v1003, %v995
    %v1780 = vpack.c.b16 %v1012, %v1004
    %v1781 = vpack.c.b16 %v1013, %v1005
    %v1782 = vpack.c.b16 %v1014, %v1006
    %v1783 = vpack.c.b16 %v1015, %v1007
    %v1784 = vpack.c.b16 %v1016, %v1008
    %v1785 = vpack.c.b16 %v1017, %v1009
    %v1786 = vpack.c.b16 %v1018, %v1010
    %v1787 = vpack.c.b16 %v1019, %v1011
    %v1788 = vpack.c.b16 %v1028, %v1020
    %v1789 = vpack.c.b16 %v1029, %v1021
    %v1790 = vpack.c.b16 %v1030, %v1022
    %v1791 = vpack.c.b16 %v1031, %v1023
    %v1792 = vpack.c.b16 %v1032, %v1024
    %v1793 = vpack.c.b16 %v1033, %v1025
    %v1794 = vpack.c.b16 %v1034, %v1026
    %v1795 = vpack.c.b16 %v1035, %v1027
    %v1796 = vpack.c.b16 %v1044, %v1036
    %v1797 = vpack.c.b16 %v1045, %v1037
    %v1798 = vpack.c.b16 %v1046, %v1038
    %v1799 = vpack.c.b16 %v1047, %v1039
    %v1800 = vpack.c.b16 %v1048, %v1040
    %v1801 = vpack.c.b16 %v1049, %v1041
    %v1802 = vpack.c.b16 %v1050, %v1042
    %v1803 = vpack.c.b16 %v1051, %v1043
    %v1804 = vpack.c.b16 %v1060, %v1052
    %v1805 = vpack.c.b16 %v1061, %v1053
    %v1806 = vpack.c.b16 %v1062, %v1054
    %v1807 = vpack.c.b16 %v1063, %v1055
    %v1808 = vpack.c.b16 %v1064, %v1056
    %v1809 = vpack.c.b16 %v1065, %v1057
    %v1810 = vpack.c.b16 %v1066, %v1058
    %v1811 = vpack.c.b16 %v1067, %v1059
    %v1812 = vpack.c.b16 %v1076, %v1068
    %v1813 = vpack.c.b16 %v1077, %v1069
    %v1814 = vpack.c.b16 %v1078, %v1070
    %v1815 = vpack.c.b16 %v1079, %v1071
    %v1816 = vpack.c.b16 %v1080, %v1072
    %v1817 = vpack.c.b16 %v1081, %v1073
    %v1818 = vpack.c.b16 %v1082, %v1074
    %v1819 = vpack.c.b16 %v1083, %v1075
    %v1820 = vpack.c.b16 %v1092, %v1084
    %v1821 = vpack.c.b16 %v1093, %v1085
    %v1822 = vpack.c.b16 %v1094, %v1086
    %v1823 = vpack.c.b16 %v1095, %v1087
    %v1824 = vpack.c.b16 %v1096, %v1088
    %v1825 = vpack.c.b16 %v1097, %v1089
    %v1826 = vpack.c.b16 %v1098, %v1090
    %v1827 = vpack.c.b16 %v1099, %v1091
    %v1828 = vpack.c.b16 %v1108, %v1100
    %v1829 = vpack.c.b16 %v1109, %v1101
    %v1830 = vpack.c.b16 %v1110, %v1102
    %v1831 = vpack.c.b16 %v1111, %v1103
    %v1832 = vpack.c.b16 %v1112, %v1104
    %v1833 = vpack.c.b16 %v1113, %v1105
    %v1834 = vpack.c.b16 %v1114, %v1106
    %v1835 = vpack.c.b16 %v1115, %v1107
    %v1836 = vpack.c.b16 %v1124, %v1116
    %v1837 = vpack.c.b16 %v1125, %v1117
    %v1838 = vpack.c.b16 %v1126, %v1118
    %v1839 = vpack.c.b16 %v1127, %v1119
    %v1840 = vpack.c.b16 %v1128, %v1120
    %v1841 = vpack.c.b16 %v1129, %v1121
    %v1842 = vpack.c.b16 %v1130, %v1122
    %v1843 = vpack.c.b16 %v1131, %v1123
    %v1844 = vpack.c.b16 %v1140, %v1132
    %v1845 = vpack.c.b16 %v1141, %v1133
    %v1846 = vpack.c.b16 %v1142, %v1134
    %v1847 = vpack.c.b16 %v1143, %v1135
    %v1848 = vpack.c.b16 %v1144, %v1136
    %v1849 = vpack.c.b16 %v1145, %v1137
    %v1850 = vpack.c.b16 %v1146, %v1138
    %v1851 = vpack.c.b16 %v1147, %v1139
    %v1852 = vpack.c.b16 %v1156, %v1148
    %v1853 = vpack.c.b16 %v1157, %v1149
    %v1854 = vpack.c.b16 %v1158, %v1150
    %v1855 = vpack.c.b16 %v1159, %v1151
    %v1856 = vpack.c.b16 %v1160, %v1152
    %v1857 = vpack.c.b16 %v1161, %v1153
    %v1858 = vpack.c.b16 %v1162, %v1154
    %v1859 = vpack.c.b16 %v1163, %v1155
    %v1860 = vpack.c.b16 %v1172, %v1164
    %v1861 = vpack.c.b16 %v1173, %v1165
    %v1862 = vpack.c.b16 %v1174, %v1166
    %v1863 = vpack.c.b16 %v1175, %v1167
    %v1864 = vpack.c.b16 %v1176, %v1168
    %v1865 = vpack.c.b16 %v1177, %v1169
    %v1866 = vpack.c.b16 %v1178, %v1170
    %v1867 = vpack.c.b16 %v1179, %v1171
    %v1868 = vpack.c.b16 %v1188, %v1180
    %v1869 = vpack.c.b16 %v1189, %v1181
    %v1870 = vpack.c.b16 %v1190, %v1182
    %v1871 = vpack.c.b16 %v1191, %v1183
    %v1872 = vpack.c.b16 %v1192, %v1184
    %v1873 = vpack.c.b16 %v1193, %v1185
    %v1874 = vpack.c.b16 %v1194, %v1186
    %v1875 = vpack.c.b16 %v1195, %v1187
    %v1876 = vpack.c.b16 %v1204, %v1196
    %v1877 = vpack.c.b16 %v1205, %v1197
    %v1878 = vpack.c.b16 %v1206, %v1198
    %v1879 = vpack.c.b16 %v1207, %v1199
    %v1880 = vpack.c.b16 %v1208, %v1200
    %v1881 = vpack.c.b16 %v1209, %v1201
    %v1882 = vpack.c.b16 %v1210, %v1202
    %v1883 = vpack.c.b16 %v1211, %v1203
    %v1884 = vpack.c.b16 %v1220, %v1212
    %v1885 = vpack.c.b16 %v1221, %v1213
    %v1886 = vpack.c.b16 %v1222, %v1214
    %v1887 = vpack.c.b16 %v1223, %v1215
    %v1888 = vpack.c.b16 %v1224, %v1216
    %v1889 = vpack.c.b16 %v1225, %v1217
    %v1890 = vpack.c.b16 %v1226, %v1218
    %v1891 = vpack.c.b16 %v1227, %v1219
    %v1892 = vpack.c.b16 %v1236, %v1228
    %v1893 = vpack.c.b16 %v1237, %v1229
    %v1894 = vpack.c.b16 %v1238, %v1230
    %v1895 = vpack.c.b16 %v1239, %v1231
    %v1896 = vpack.c.b16 %v1240, %v1232
    %v1897 = vpack.c.b16 %v1241, %v1233
    %v1898 = vpack.c.b16 %v1242, %v1234
    %v1899 = vpack.c.b16 %v1243, %v1235
    %v1900 = vpack.c.b16 %v1252, %v1244
    %v1901 = vpack.c.b16 %v1253, %v1245
    %v1902 = vpack.c.b16 %v1254, %v1246
    %v1903 = vpack.c.b16 %v1255, %v1247
    %v1904 = vpack.c.b16 %v1256, %v1248
    %v1905 = vpack.c.b16 %v1257, %v1249
    %v1906 = vpack.c.b16 %v1258, %v1250
    %v1907 = vpack.c.b16 %v1259, %v1251
    %v1908 = vpack.c.b16 %v1268, %v1260
    %v1909 = vpack.c.b16 %v1269, %v1261
    %v1910 = vpack.c.b16 %v1270, %v1262
    %v1911 = vpack.c.b16 %v1271, %v1263
    %v1912 = vpack.c.b16 %v1272, %v1264
    %v1913 = vpack.c.b16 %v1273, %v1265
    %v1914 = vpack.c.b16 %v1274, %v1266
    %v1915 = vpack.c.b16 %v1275, %v1267
    %v1916 = vpack.c.b16 %v1284, %v1276
    %v1917 = vpack.c.b16 %v1285, %v1277
    %v1918 = vpack.c.b16 %v1286, %v1278
    %v1919 = vpack.c.b16 %v1287, %v1279
    %v1920 = vpack.c.b16 %v1288, %v1280
    %v1921 = vpack.c.b16 %v1289, %v1281
    %v1922 = vpack.c.b16 %v1290, %v1282
    %v1923 = vpack.c.b16 %v1291, %v1283
    %v1924 = vpack.c.b16 %v1300, %v1292
    %v1925 = vpack.c.b16 %v1301, %v1293
    %v1926 = vpack.c.b16 %v1302, %v1294
    %v1927 = vpack.c.b16 %v1303, %v1295
    %v1928 = vpack.c.b16 %v1304, %v1296
    %v1929 = vpack.c.b16 %v1305, %v1297
    %v1930 = vpack.c.b16 %v1306, %v1298
    %v1931 = vpack.c.b16 %v1307, %v1299
    %v1932 = vpack.c.b16 %v1316, %v1308
    %v1933 = vpack.c.b16 %v1317, %v1309
    %v1934 = vpack.c.b16 %v1318, %v1310
    %v1935 = vpack.c.b16 %v1319, %v1311
    %v1936 = vpack.c.b16 %v1320, %v1312
    %v1937 = vpack.c.b16 %v1321, %v1313
    %v1938 = vpack.c.b16 %v1322, %v1314
    %v1939 = vpack.c.b16 %v1323, %v1315
    %v1940 = vpack.c.b16 %v1332, %v1324
    %v1941 = vpack.c.b16 %v1333, %v1325
    %v1942 = vpack.c.b16 %v1334, %v1326
    %v1943 = vpack.c.b16 %v1335, %v1327
    %v1944 = vpack.c.b16 %v1336, %v1328
    %v1945 = vpack.c.b16 %v1337, %v1329
    %v1946 = vpack.c.b16 %v1338, %v1330
    %v1947 = vpack.c.b16 %v1339, %v1331
    %v1948 = vpack.c.b16 %v1348, %v1340
    %v1949 = vpack.c.b16 %v1349, %v1341
    %v1950 = vpack.c.b16 %v1350, %v1342
    %v1951 = vpack.c.b16 %v1351, %v1343
    %v1952 = vpack.c.b16 %v1352, %v1344
    %v1953 = vpack.c.b16 %v1353, %v1345
    %v1954 = vpack.c.b16 %v1354, %v1346
    %v1955 = vpack.c.b16 %v1355, %v1347
    %v1956 = vpack.c.b16 %v1364, %v1356
    %v1957 = vpack.c.b16 %v1365, %v1357
    %v1958 = vpack.c.b16 %v1366, %v1358
    %v1959 = vpack.c.b16 %v1367, %v1359
    %v1960 = vpack.c.b16 %v1368, %v1360
    %v1961 = vpack.c.b16 %v1369, %v1361
    %v1962 = vpack.c.b16 %v1370, %v1362
    %v1963 = vpack.c.b16 %v1371, %v1363
    %v1964 = vpack.c.b16 %v1380, %v1372
    %v1965 = vpack.c.b16 %v1381, %v1373
    %v1966 = vpack.c.b16 %v1382, %v1374
    %v1967 = vpack.c.b16 %v1383, %v1375
    %v1968 = vpack.c.b16 %v1384, %v1376
    %v1969 = vpack.c.b16 %v1385, %v1377
    %v1970 = vpack.c.b16 %v1386, %v1378
    %v1971 = vpack.c.b16 %v1387, %v1379
    %v1972 = vpack.c.b16 %v1396, %v1388
    %v1973 = vpack.c.b16 %v1397, %v1389
    %v1974 = vpack.c.b16 %v1398, %v1390
    %v1975 = vpack.c.b16 %v1399, %v1391
    %v1976 = vpack.c.b16 %v1400, %v1392
    %v1977 = vpack.c.b16 %v1401, %v1393
    %v1978 = vpack.c.b16 %v1402, %v1394
    %v1979 = vpack.c.b16 %v1403, %v1395
    %v1980 = vpack.c.b16 %v1412, %v1404
    %v1981 = vpack.c.b16 %v1413, %v1405
    %v1982 = vpack.c.b16 %v1414, %v1406
    %v1983 = vpack.c.b16 %v1415, %v1407
    %v1984 = vpack.c.b16 %v1416, %v1408
    %v1985 = vpack.c.b16 %v1417, %v1409
    %v1986 = vpack.c.b16 %v1418, %v1410
    %v1987 = vpack.c.b16 %v1419, %v1411
    %v1988 = vpack.c.b16 %v1428, %v1420
    %v1989 = vpack.c.b16 %v1429, %v1421
    %v1990 = vpack.c.b16 %v1430, %v1422
    %v1991 = vpack.c.b16 %v1431, %v1423
    %v1992 = vpack.c.b16 %v1432, %v1424
    %v1993 = vpack.c.b16 %v1433, %v1425
    %v1994 = vpack.c.b16 %v1434, %v1426
    %v1995 = vpack.c.b16 %v1435, %v1427
    %v1996 = vpack.c.b16 %v1444, %v1436
    %v1997 = vpack.c.b16 %v1445, %v1437
    %v1998 = vpack.c.b16 %v1446, %v1438
    %v1999 = vpack.c.b16 %v1447, %v1439
    %v2000 = vpack.c.b16 %v1448, %v1440
    %v2001 = vpack.c.b16 %v1449, %v1441
    %v2002 = vpack.c.b16 %v1450, %v1442
    %v2003 = vpack.c.b16 %v1451, %v1443
    %v2004 = vpack.c.b16 %v1460, %v1452
    %v2005 = vpack.c.b16 %v1461, %v1453
    %v2006 = vpack.c.b16 %v1462, %v1454
    %v2007 = vpack.c.b16 %v1463, %v1455
    %v2008 = vpack.c.b16 %v1464, %v1456
    %v2009 = vpack.c.b16 %v1465, %v1457
    %v2010 = vpack.c.b16 %v1466, %v1458
    %v2011 = vpack.c.b16 %v1467, %v1459
    %v2012 = vpack.c.b16 %v1476, %v1468
    %v2013 = vpack.c.b16 %v1477, %v1469
    %v2014 = vpack.c.b16 %v1478, %v1470
    %v2015 = vpack.c.b16 %v1479, %v1471
    %v2016 = vpack.c.b16 %v1480, %v1472
    %v2017 = vpack.c.b16 %v1481, %v1473
    %v2018 = vpack.c.b16 %v1482, %v1474
    %v2019 = vpack.c.b16 %v1483, %v1475
    %v2020 = vpack.c.b16 %v1492, %v1484
    %v2021 = vpack.c.b16 %v1493, %v1485
    %v2022 = vpack.c.b16 %v1494, %v1486
    %v2023 = vpack.c.b16 %v1495, %v1487
    %v2024 = vpack.c.b16 %v1496, %v1488
    %v2025 = vpack.c.b16 %v1497, %v1489
    %v2026 = vpack.c.b16 %v1498, %v1490
    %v2027 = vpack.c.b16 %v1499, %v1491
    %v2028 = vpack.c.b16 %v1508, %v1500
    %v2029 = vpack.c.b16 %v1509, %v1501
    %v2030 = vpack.c.b16 %v1510, %v1502
    %v2031 = vpack.c.b16 %v1511, %v1503
    %v2032 = vpack.c.b16 %v1512, %v1504
    %v2033 = vpack.c.b16 %v1513, %v1505
    %v2034 = vpack.c.b16 %v1514, %v1506
    %v2035 = vpack.c.b16 %v1515, %v1507
    %v2036 = vpack.c.b16 %v1524, %v1516
    %v2037 = vpack.c.b16 %v1525, %v1517
    %v2038 = vpack.c.b16 %v1526, %v1518
    %v2039 = vpack.c.b16 %v1527, %v1519
    %v2040 = vpack.c.b16 %v1528, %v1520
    %v2041 = vpack.c.b16 %v1529, %v1521
    %v2042 = vpack.c.b16 %v1530, %v1522
    %v2043 = vpack.c.b16 %v1531, %v1523
    %v2044 = vpack.c.b16 %v1540, %v1532
    %v2045 = vpack.c.b16 %v1541, %v1533
    %v2046 = vpack.c.b16 %v1542, %v1534
    %v2047 = vpack.c.b16 %v1543, %v1535
    %v2048 = vpack.c.b16 %v1544, %v1536
    %v2049 = vpack.c.b16 %v1545, %v1537
    %v2050 = vpack.c.b16 %v1546, %v1538
    %v2051 = vpack.c.b16 %v1547, %v1539
    %v2052 = vpack.c.b16 %v1556, %v1548
    %v2053 = vpack.c.b16 %v1557, %v1549
    %v2054 = vpack.c.b16 %v1558, %v1550
    %v2055 = vpack.c.b16 %v1559, %v1551
    %v2056 = vpack.c.b16 %v1560, %v1552
    %v2057 = vpack.c.b16 %v1561, %v1553
    %v2058 = vpack.c.b16 %v1562, %v1554
    %v2059 = vpack.c.b16 %v1563, %v1555
    %v2060 = vpack.c.b16 %v1572, %v1564
    %v2061 = vpack.c.b16 %v1573, %v1565
    %v2062 = vpack.c.b16 %v1574, %v1566
    %v2063 = vpack.c.b16 %v1575, %v1567
    %v2064 = vpack.c.b16 %v1576, %v1568
    %v2065 = vpack.c.b16 %v1577, %v1569
    %v2066 = vpack.c.b16 %v1578, %v1570
    %v2067 = vpack.c.b16 %v1579, %v1571
    %v2068 = vpack.c.b16 %v1588, %v1580
    %v2069 = vpack.c.b16 %v1589, %v1581
    %v2070 = vpack.c.b16 %v1590, %v1582
    %v2071 = vpack.c.b16 %v1591, %v1583
    %v2072 = vpack.c.b16 %v1592, %v1584
    %v2073 = vpack.c.b16 %v1593, %v1585
    %v2074 = vpack.c.b16 %v1594, %v1586
    %v2075 = vpack.c.b16 %v1595, %v1587
    %v2076 = vpack.c.b16 %v1604, %v1596
    %v2077 = vpack.c.b16 %v1605, %v1597
    %v2078 = vpack.c.b16 %v1606, %v1598
    %v2079 = vpack.c.b16 %v1607, %v1599
    %v2080 = vpack.c.b16 %v1608, %v1600
    %v2081 = vpack.c.b16 %v1609, %v1601
    %v2082 = vpack.c.b16 %v1610, %v1602
    %v2083 = vpack.c.b16 %v1611, %v1603
    %v2084 = vpack.c.b16 %v1620, %v1612
    %v2085 = vpack.c.b16 %v1621, %v1613
    %v2086 = vpack.c.b16 %v1622, %v1614
    %v2087 = vpack.c.b16 %v1623, %v1615
    %v2088 = vpack.c.b16 %v1624, %v1616
    %v2089 = vpack.c.b16 %v1625, %v1617
    %v2090 = vpack.c.b16 %v1626, %v1618
    %v2091 = vpack.c.b16 %v1627, %v1619
    %v2092 = vpack.c.b16 %v1636, %v1628
    %v2093 = vpack.c.b16 %v1637, %v1629
    %v2094 = vpack.c.b16 %v1638, %v1630
    %v2095 = vpack.c.b16 %v1639, %v1631
    %v2096 = vpack.c.b16 %v1640, %v1632
    %v2097 = vpack.c.b16 %v1641, %v1633
    %v2098 = vpack.c.b16 %v1642, %v1634
    %v2099 = vpack.c.b16 %v1643, %v1635
    %v2100 = vpack.c.b16 %v1652, %v1644
    %v2101 = vpack.c.b16 %v1653, %v1645
    %v2102 = vpack.c.b16 %v1654, %v1646
    %v2103 = vpack.c.b16 %v1655, %v1647
    %v2104 = vpack.c.b16 %v1656, %v1648
    %v2105 = vpack.c.b16 %v1657, %v1649
    %v2106 = vpack.c.b16 %v1658, %v1650
    %v2107 = vpack.c.b16 %v1659, %v1651
    %v2108 = vpack.c.b16 %v1668, %v1660
    %v2109 = vpack.c.b16 %v1669, %v1661
    %v2110 = vpack.c.b16 %v1670, %v1662
    %v2111 = vpack.c.b16 %v1671, %v1663
    %v2112 = vpack.c.b16 %v1672, %v1664
    %v2113 = vpack.c.b16 %v1673, %v1665
    %v2114 = vpack.c.b16 %v1674, %v1666
    %v2115 = vpack.c.b16 %v1675, %v1667
    %v2116 = vpack.c.b16 %v1684, %v1676
    %v2117 = vpack.c.b16 %v1685, %v1677
    %v2118 = vpack.c.b16 %v1686, %v1678
    %v2119 = vpack.c.b16 %v1687, %v1679
    %v2120 = vpack.c.b16 %v1688, %v1680
    %v2121 = vpack.c.b16 %v1689, %v1681
    %v2122 = vpack.c.b16 %v1690, %v1682
    %v2123 = vpack.c.b16 %v1691, %v1683
    %v2124 = vpack.c.b16 %v1700, %v1692
    %v2125 = vpack.c.b16 %v1701, %v1693
    %v2126 = vpack.c.b16 %v1702, %v1694
    %v2127 = vpack.c.b16 %v1703, %v1695
    %v2128 = vpack.c.b16 %v1704, %v1696
    %v2129 = vpack.c.b16 %v1705, %v1697
    %v2130 = vpack.c.b16 %v1706, %v1698
    %v2131 = vpack.c.b16 %v1707, %v1699
    %v2132 = vpack.c.b16 %v1716, %v1708
    %v2133 = vpack.c.b16 %v1717, %v1709
    %v2134 = vpack.c.b16 %v1718, %v1710
    %v2135 = vpack.c.b16 %v1719, %v1711
    %v2136 = vpack.c.b16 %v1720, %v1712
    %v2137 = vpack.c.b16 %v1721, %v1713
    %v2138 = vpack.c.b16 %v1722, %v1714
    %v2139 = vpack.c.b16 %v1723, %v1715
    %v2140 = vpack.c.b16 %v1732, %v1724
    %v2141 = vpack.c.b16 %v1733, %v1725
    %v2142 = vpack.c.b16 %v1734, %v1726
    %v2143 = vpack.c.b16 %v1735, %v1727
    %v2144 = vpack.c.b16 %v1736, %v1728
    %v2145 = vpack.c.b16 %v1737, %v1729
    %v2146 = vpack.c.b16 %v1738, %v1730
    %v2147 = vpack.c.b16 %v1739, %v1731
    %v2148 = vpack.c.b16 %v1748, %v1740
    %v2149 = vpack.c.b16 %v1749, %v1741
    %v2150 = vpack.c.b16 %v1750, %v1742
    %v2151 = vpack.c.b16 %v1751, %v1743
    %v2152 = vpack.c.b16 %v1752, %v1744
    %v2153 = vpack.c.b16 %v1753, %v1745
    %v2154 = vpack.c.b16 %v1754, %v1746
    %v2155 = vpack.c.b16 %v1755, %v1747
    %v2156 = vpack.c.b16 %v1764, %v1756
    %v2157 = vpack.c.b16 %v1765, %v1757
    %v2158 = vpack.c.b16 %v1766, %v1758
    %v2159 = vpack.c.b16 %v1767, %v1759
    %v2160 = vpack.c.b16 %v1768, %v1760
    %v2161 = vpack.c.b16 %v1769, %v1761
    %v2162 = vpack.c.b16 %v1770, %v1762
    %v2163 = vpack.c.b16 %v1771, %v1763
    %vm2556 = vcmask 130048
    %v2558 = vsel %vm2556, %v589, 0
    %2560 = vmatprep.subr.bf16.mxu0 %v1773
    %2561 = vmatpush1.bf16.msra.mxu0 %v1772
    %2562 = vmatprep.subr.bf16.mxu0 %v1781
    %2563 = vmatpush1.bf16.msra.mxu0 %v1780
    %2564 = vmatprep.subr.bf16.mxu0 %v1789
    %2565 = vmatpush1.bf16.msra.mxu0 %v1788
    %2566 = vmatprep.subr.bf16.mxu0 %v1797
    %2567 = vmatpush1.bf16.msra.mxu0 %v1796
    %2568 = vmatprep.subr.bf16.mxu0 %v1805
    %2569 = vmatpush1.bf16.msra.mxu0 %v1804
    %2570 = vmatprep.subr.bf16.mxu0 %v1813
    %2571 = vmatpush1.bf16.msra.mxu0 %v1812
    %2572 = vmatprep.subr.bf16.mxu0 %v1821
    %2573 = vmatpush1.bf16.msra.mxu0 %v1820
    %2574 = vmatprep.subr.bf16.mxu0 %v1829
    %2575 = vmatpush1.bf16.msra.mxu0 %v1828
    %2576 = vmatprep.subr.bf16.mxu0 %v1837
    %2577 = vmatpush1.bf16.msra.mxu0 %v1836
    %2578 = vmatprep.subr.bf16.mxu0 %v1845
    %2579 = vmatpush1.bf16.msra.mxu0 %v1844
    %2580 = vmatprep.subr.bf16.mxu0 %v1853
    %2581 = vmatpush1.bf16.msra.mxu0 %v1852
    %2582 = vmatprep.subr.bf16.mxu0 %v1861
    %2583 = vmatpush1.bf16.msra.mxu0 %v1860
    %2584 = vmatprep.subr.bf16.mxu0 %v1869
    %2585 = vmatpush1.bf16.msra.mxu0 %v1868
    %2586 = vmatprep.subr.bf16.mxu0 %v1877
    %2587 = vmatpush1.bf16.msra.mxu0 %v1876
    %2588 = vmatprep.subr.bf16.mxu0 %v1885
    %2589 = vmatpush1.bf16.msra.mxu0 %v1884
    %2590 = vmatprep.subr.bf16.mxu0 %v1893
    %2591 = vmatpush1.bf16.msra.mxu0 %v1892
    %2592 = vmatprep.mubr.bf16.mxu0 %v584
    %2593 = vmatmul.mubr.bf16.gmra.mrb[0].mxu0 %v583
    %v2594 = vpop.f32.mrb[0].mxu0
    %v2595 = vadd.f32 %v535, %v2594
    %v2596 = vpop.f32.mrb[0].mxu0
    %v2597 = vadd.f32 %v539, %v2596
    %v2598 = vpop.f32.mrb[0].mxu0
    %v2599 = vpop.f32.mrb[0].mxu0
    %2600 = vdwg.mxu0
    %2601 = vmatprep.subr.bf16.mxu0 %v1901
    %2602 = vmatpush1.bf16.msra.mxu0 %v1900
    %2603 = vmatprep.subr.bf16.mxu0 %v1909
    %2604 = vmatpush1.bf16.msra.mxu0 %v1908
    %2605 = vmatprep.subr.bf16.mxu0 %v1917
    %2606 = vmatpush1.bf16.msra.mxu0 %v1916
    %2607 = vmatprep.subr.bf16.mxu0 %v1925
    %2608 = vmatpush1.bf16.msra.mxu0 %v1924
    %2609 = vmatprep.subr.bf16.mxu0 %v1933
    %2610 = vmatpush1.bf16.msra.mxu0 %v1932
    %2611 = vmatprep.subr.bf16.mxu0 %v1941
    %2612 = vmatpush1.bf16.msra.mxu0 %v1940
    %2613 = vmatprep.subr.bf16.mxu0 %v1949
    %2614 = vmatpush1.bf16.msra.mxu0 %v1948
    %2615 = vmatprep.subr.bf16.mxu0 %v1957
    %2616 = vmatpush1.bf16.msra.mxu0 %v1956
    %2617 = vmatprep.subr.bf16.mxu0 %v1965
    %2618 = vmatpush1.bf16.msra.mxu0 %v1964
    %2619 = vmatprep.subr.bf16.mxu0 %v1973
    %2620 = vmatpush1.bf16.msra.mxu0 %v1972
    %2621 = vmatprep.subr.bf16.mxu0 %v1981
    %2622 = vmatpush1.bf16.msra.mxu0 %v1980
    %2623 = vmatprep.subr.bf16.mxu0 %v1989
    %2624 = vmatpush1.bf16.msra.mxu0 %v1988
    %2625 = vmatprep.subr.bf16.mxu0 %v1997
    %2626 = vmatpush1.bf16.msra.mxu0 %v1996
    %2627 = vmatprep.subr.bf16.mxu0 %v2005
    %2628 = vmatpush1.bf16.msra.mxu0 %v2004
    %2629 = vmatprep.subr.bf16.mxu0 %v2013
    %2630 = vmatpush1.bf16.msra.mxu0 %v2012
    %2631 = vmatprep.subr.bf16.mxu0 %v2021
    %2632 = vmatpush1.bf16.msra.mxu0 %v2020
    %2633 = vmatprep.mubr.bf16.mxu0 %v586
    %2634 = vmatmul.mubr.bf16.gmra.mrb[0].mxu0 %v585
    %v2635 = vpop.f32.mrb[0].mxu0
    %v2636 = vadd.f32 %v2595, %v2635
    %v2637 = vpop.f32.mrb[0].mxu0
    %v2638 = vadd.f32 %v2597, %v2637
    %v2639 = vpop.f32.mrb[0].mxu0
    %v2640 = vpop.f32.mrb[0].mxu0
    %2641 = vdwg.mxu0
    %2642 = vmatprep.subr.bf16.mxu0 %v2029
    %2643 = vmatpush1.bf16.msra.mxu0 %v2028
    %2644 = vmatprep.subr.bf16.mxu0 %v2037
    %2645 = vmatpush1.bf16.msra.mxu0 %v2036
    %2646 = vmatprep.subr.bf16.mxu0 %v2045
    %2647 = vmatpush1.bf16.msra.mxu0 %v2044
    %2648 = vmatprep.subr.bf16.mxu0 %v2053
    %2649 = vmatpush1.bf16.msra.mxu0 %v2052
    %2650 = vmatprep.subr.bf16.mxu0 %v2061
    %2651 = vmatpush1.bf16.msra.mxu0 %v2060
    %2652 = vmatprep.subr.bf16.mxu0 %v2069
    %2653 = vmatpush1.bf16.msra.mxu0 %v2068
    %2654 = vmatprep.subr.bf16.mxu0 %v2077
    %2655 = vmatpush1.bf16.msra.mxu0 %v2076
    %2656 = vmatprep.subr.bf16.mxu0 %v2085
    %2657 = vmatpush1.bf16.msra.mxu0 %v2084
    %2658 = vmatprep.subr.bf16.mxu0 %v2093
    %2659 = vmatpush1.bf16.msra.mxu0 %v2092
    %2660 = vmatprep.subr.bf16.mxu0 %v2101
    %2661 = vmatpush1.bf16.msra.mxu0 %v2100
    %2662 = vmatprep.subr.bf16.mxu0 %v2109
    %2663 = vmatpush1.bf16.msra.mxu0 %v2108
    %2664 = vmatprep.subr.bf16.mxu0 %v2117
    %2665 = vmatpush1.bf16.msra.mxu0 %v2116
    %2666 = vmatprep.subr.bf16.mxu0 %v2125
    %2667 = vmatpush1.bf16.msra.mxu0 %v2124
    %2668 = vmatprep.subr.bf16.mxu0 %v2133
    %2669 = vmatpush1.bf16.msra.mxu0 %v2132
    %2670 = vmatprep.subr.bf16.mxu0 %v2141
    %2671 = vmatpush1.bf16.msra.mxu0 %v2140
    %2672 = vmatprep.subr.bf16.mxu0 %v2149
    %2673 = vmatpush1.bf16.msra.mxu0 %v2148
    %2674 = vmatprep.mubr.bf16.mxu0 %v588
    %2675 = vmatmul.mubr.bf16.gmra.mrb[0].mxu0 %v587
    %v2676 = vpop.f32.mrb[0].mxu0
    %v2677 = vadd.f32 %v2636, %v2676
    %v2678 = vpop.f32.mrb[0].mxu0
    %v2679 = vadd.f32 %v2638, %v2678
    %v2680 = vpop.f32.mrb[0].mxu0
    %v2681 = vpop.f32.mrb[0].mxu0
    %2682 = vdwg.mxu0
    %2683 = vmatprep.subr.bf16.mxu0 %v2157
    %2684 = vmatpush1.bf16.msra.mxu0 %v2156
    %2685 = vmatprep.subr.bf16.mxu0 0
    %2686 = vmatpush1.bf16.msra.mxu0 0
    %2687 = vmatprep.subr.bf16.mxu0 0
    %2688 = vmatpush1.bf16.msra.mxu0 0
    %2689 = vmatprep.subr.bf16.mxu0 0
    %2690 = vmatpush1.bf16.msra.mxu0 0
    %2691 = vmatprep.subr.bf16.mxu0 0
    %2692 = vmatpush1.bf16.msra.mxu0 0
    %2693 = vmatprep.subr.bf16.mxu0 0
    %2694 = vmatpush1.bf16.msra.mxu0 0
    %2695 = vmatprep.subr.bf16.mxu0 0
    %2696 = vmatpush1.bf16.msra.mxu0 0
    %2697 = vmatprep.subr.bf16.mxu0 0
    %2698 = vmatpush1.bf16.msra.mxu0 0
    %2699 = vmatprep.subr.bf16.mxu0 0
    %2700 = vmatpush1.bf16.msra.mxu0 0
    %2701 = vmatprep.subr.bf16.mxu0 0
    %2702 = vmatpush1.bf16.msra.mxu0 0
    %2703 = vmatprep.subr.bf16.mxu0 0
    %2704 = vmatpush1.bf16.msra.mxu0 0
    %2705 = vmatprep.subr.bf16.mxu0 0
    %2706 = vmatpush1.bf16.msra.mxu0 0
    %2707 = vmatprep.subr.bf16.mxu0 0
    %2708 = vmatpush1.bf16.msra.mxu0 0
    %2709 = vmatprep.subr.bf16.mxu0 0
    %2710 = vmatpush1.bf16.msra.mxu0 0
    %2711 = vmatprep.subr.bf16.mxu0 0
    %2712 = vmatpush1.bf16.msra.mxu0 0
    %2713 = vmatprep.subr.bf16.mxu0 0
    %2714 = vmatpush1.bf16.msra.mxu0 0
    %2715 = vmatprep.mubr.bf16.mxu0 0
    %2716 = vmatmul.mubr.bf16.gmra.mrb[0].mxu0 %v2558
    %v2717 = vpop.f32.mrb[0].mxu0
    %v2718 = vadd.f32 %v2677, %v2717
    %v2719 = vpop.f32.mrb[0].mxu0
    %v2720 = vadd.f32 %v2679, %v2719
    %v2721 = vpop.f32.mrb[0].mxu0
    %v2722 = vpop.f32.mrb[0].mxu0
    %2723 = vdwg.mxu0
    %2724 = vmatprep.subr.bf16.mxu0 %v1775
    %2725 = vmatpush1.bf16.msra.mxu0 %v1774
    %2726 = vmatprep.subr.bf16.mxu0 %v1783
    %2727 = vmatpush1.bf16.msra.mxu0 %v1782
    %2728 = vmatprep.subr.bf16.mxu0 %v1791
    %2729 = vmatpush1.bf16.msra.mxu0 %v1790
    %2730 = vmatprep.subr.bf16.mxu0 %v1799
    %2731 = vmatpush1.bf16.msra.mxu0 %v1798
    %2732 = vmatprep.subr.bf16.mxu0 %v1807
    %2733 = vmatpush1.bf16.msra.mxu0 %v1806
    %2734 = vmatprep.subr.bf16.mxu0 %v1815
    %2735 = vmatpush1.bf16.msra.mxu0 %v1814
    %2736 = vmatprep.subr.bf16.mxu0 %v1823
    %2737 = vmatpush1.bf16.msra.mxu0 %v1822
    %2738 = vmatprep.subr.bf16.mxu0 %v1831
    %2739 = vmatpush1.bf16.msra.mxu0 %v1830
    %2740 = vmatprep.subr.bf16.mxu0 %v1839
    %2741 = vmatpush1.bf16.msra.mxu0 %v1838
    %2742 = vmatprep.subr.bf16.mxu0 %v1847
    %2743 = vmatpush1.bf16.msra.mxu0 %v1846
    %2744 = vmatprep.subr.bf16.mxu0 %v1855
    %2745 = vmatpush1.bf16.msra.mxu0 %v1854
    %2746 = vmatprep.subr.bf16.mxu0 %v1863
    %2747 = vmatpush1.bf16.msra.mxu0 %v1862
    %2748 = vmatprep.subr.bf16.mxu0 %v1871
    %2749 = vmatpush1.bf16.msra.mxu0 %v1870
    %2750 = vmatprep.subr.bf16.mxu0 %v1879
    %2751 = vmatpush1.bf16.msra.mxu0 %v1878
    %2752 = vmatprep.subr.bf16.mxu0 %v1887
    %2753 = vmatpush1.bf16.msra.mxu0 %v1886
    %2754 = vmatprep.subr.bf16.mxu0 %v1895
    %2755 = vmatpush1.bf16.msra.mxu0 %v1894
    %2756 = vmatprep.mubr.bf16.mxu0 %v584
    %2757 = vmatmul.mubr.bf16.gmra.mrb[0].mxu0 %v583
    %v2758 = vpop.f32.mrb[0].mxu0
    %v2759 = vadd.f32 %v543, %v2758
    %v2760 = vpop.f32.mrb[0].mxu0
    %v2761 = vadd.f32 %v547, %v2760
    %v2762 = vpop.f32.mrb[0].mxu0
    %v2763 = vpop.f32.mrb[0].mxu0
    %2764 = vdwg.mxu0
    %2765 = vmatprep.subr.bf16.mxu0 %v1903
    %2766 = vmatpush1.bf16.msra.mxu0 %v1902
    %2767 = vmatprep.subr.bf16.mxu0 %v1911
    %2768 = vmatpush1.bf16.msra.mxu0 %v1910
    %2769 = vmatprep.subr.bf16.mxu0 %v1919
    %2770 = vmatpush1.bf16.msra.mxu0 %v1918
    %2771 = vmatprep.subr.bf16.mxu0 %v1927
    %2772 = vmatpush1.bf16.msra.mxu0 %v1926
    %2773 = vmatprep.subr.bf16.mxu0 %v1935
    %2774 = vmatpush1.bf16.msra.mxu0 %v1934
    %2775 = vmatprep.subr.bf16.mxu0 %v1943
    %2776 = vmatpush1.bf16.msra.mxu0 %v1942
    %2777 = vmatprep.subr.bf16.mxu0 %v1951
    %2778 = vmatpush1.bf16.msra.mxu0 %v1950
    %2779 = vmatprep.subr.bf16.mxu0 %v1959
    %2780 = vmatpush1.bf16.msra.mxu0 %v1958
    %2781 = vmatprep.subr.bf16.mxu0 %v1967
    %2782 = vmatpush1.bf16.msra.mxu0 %v1966
    %2783 = vmatprep.subr.bf16.mxu0 %v1975
    %2784 = vmatpush1.bf16.msra.mxu0 %v1974
    %2785 = vmatprep.subr.bf16.mxu0 %v1983
    %2786 = vmatpush1.bf16.msra.mxu0 %v1982
    %2787 = vmatprep.subr.bf16.mxu0 %v1991
    %2788 = vmatpush1.bf16.msra.mxu0 %v1990
    %2789 = vmatprep.subr.bf16.mxu0 %v1999
    %2790 = vmatpush1.bf16.msra.mxu0 %v1998
    %2791 = vmatprep.subr.bf16.mxu0 %v2007
    %2792 = vmatpush1.bf16.msra.mxu0 %v2006
    %2793 = vmatprep.subr.bf16.mxu0 %v2015
    %2794 = vmatpush1.bf16.msra.mxu0 %v2014
    %2795 = vmatprep.subr.bf16.mxu0 %v2023
    %2796 = vmatpush1.bf16.msra.mxu0 %v2022
    %2797 = vmatprep.mubr.bf16.mxu0 %v586
    %2798 = vmatmul.mubr.bf16.gmra.mrb[0].mxu0 %v585
    %v2799 = vpop.f32.mrb[0].mxu0
    %v2800 = vadd.f32 %v2759, %v2799
    %v2801 = vpop.f32.mrb[0].mxu0
    %v2802 = vadd.f32 %v2761, %v2801
    %v2803 = vpop.f32.mrb[0].mxu0
    %v2804 = vpop.f32.mrb[0].mxu0
    %2805 = vdwg.mxu0
    %2806 = vmatprep.subr.bf16.mxu0 %v2031
    %2807 = vmatpush1.bf16.msra.mxu0 %v2030
    %2808 = vmatprep.subr.bf16.mxu0 %v2039
    %2809 = vmatpush1.bf16.msra.mxu0 %v2038
    %2810 = vmatprep.subr.bf16.mxu0 %v2047
    %2811 = vmatpush1.bf16.msra.mxu0 %v2046
    %2812 = vmatprep.subr.bf16.mxu0 %v2055
    %2813 = vmatpush1.bf16.msra.mxu0 %v2054
    %2814 = vmatprep.subr.bf16.mxu0 %v2063
    %2815 = vmatpush1.bf16.msra.mxu0 %v2062
    %2816 = vmatprep.subr.bf16.mxu0 %v2071
    %2817 = vmatpush1.bf16.msra.mxu0 %v2070
    %2818 = vmatprep.subr.bf16.mxu0 %v2079
    %2819 = vmatpush1.bf16.msra.mxu0 %v2078
    %2820 = vmatprep.subr.bf16.mxu0 %v2087
    %2821 = vmatpush1.bf16.msra.mxu0 %v2086
    %2822 = vmatprep.subr.bf16.mxu0 %v2095
    %2823 = vmatpush1.bf16.msra.mxu0 %v2094
    %2824 = vmatprep.subr.bf16.mxu0 %v2103
    %2825 = vmatpush1.bf16.msra.mxu0 %v2102
    %2826 = vmatprep.subr.bf16.mxu0 %v2111
    %2827 = vmatpush1.bf16.msra.mxu0 %v2110
    %2828 = vmatprep.subr.bf16.mxu0 %v2119
    %2829 = vmatpush1.bf16.msra.mxu0 %v2118
    %2830 = vmatprep.subr.bf16.mxu0 %v2127
    %2831 = vmatpush1.bf16.msra.mxu0 %v2126
    %2832 = vmatprep.subr.bf16.mxu0 %v2135
    %2833 = vmatpush1.bf16.msra.mxu0 %v2134
    %2834 = vmatprep.subr.bf16.mxu0 %v2143
    %2835 = vmatpush1.bf16.msra.mxu0 %v2142
    %2836 = vmatprep.subr.bf16.mxu0 %v2151
    %2837 = vmatpush1.bf16.msra.mxu0 %v2150
    %2838 = vmatprep.mubr.bf16.mxu0 %v588
    %2839 = vmatmul.mubr.bf16.gmra.mrb[0].mxu0 %v587
    %v2840 = vpop.f32.mrb[0].mxu0
    %v2841 = vadd.f32 %v2800, %v2840
    %v2842 = vpop.f32.mrb[0].mxu0
    %v2843 = vadd.f32 %v2802, %v2842
    %v2844 = vpop.f32.mrb[0].mxu0
    %v2845 = vpop.f32.mrb[0].mxu0
    %2846 = vdwg.mxu0
    %2847 = vmatprep.subr.bf16.mxu0 %v2159
    %2848 = vmatpush1.bf16.msra.mxu0 %v2158
    %2849 = vmatprep.subr.bf16.mxu0 0
    %2850 = vmatpush1.bf16.msra.mxu0 0
    %2851 = vmatprep.subr.bf16.mxu0 0
    %2852 = vmatpush1.bf16.msra.mxu0 0
    %2853 = vmatprep.subr.bf16.mxu0 0
    %2854 = vmatpush1.bf16.msra.mxu0 0
    %2855 = vmatprep.subr.bf16.mxu0 0
    %2856 = vmatpush1.bf16.msra.mxu0 0
    %2857 = vmatprep.subr.bf16.mxu0 0
    %2858 = vmatpush1.bf16.msra.mxu0 0
    %2859 = vmatprep.subr.bf16.mxu0 0
    %2860 = vmatpush1.bf16.msra.mxu0 0
    %2861 = vmatprep.subr.bf16.mxu0 0
    %2862 = vmatpush1.bf16.msra.mxu0 0
    %2863 = vmatprep.subr.bf16.mxu0 0
    %2864 = vmatpush1.bf16.msra.mxu0 0
    %2865 = vmatprep.subr.bf16.mxu0 0
    %2866 = vmatpush1.bf16.msra.mxu0 0
    %2867 = vmatprep.subr.bf16.mxu0 0
    %2868 = vmatpush1.bf16.msra.mxu0 0
    %2869 = vmatprep.subr.bf16.mxu0 0
    %2870 = vmatpush1.bf16.msra.mxu0 0
    %2871 = vmatprep.subr.bf16.mxu0 0
    %2872 = vmatpush1.bf16.msra.mxu0 0
    %2873 = vmatprep.subr.bf16.mxu0 0
    %2874 = vmatpush1.bf16.msra.mxu0 0
    %2875 = vmatprep.subr.bf16.mxu0 0
    %2876 = vmatpush1.bf16.msra.mxu0 0
    %2877 = vmatprep.subr.bf16.mxu0 0
    %2878 = vmatpush1.bf16.msra.mxu0 0
    %2879 = vmatprep.mubr.bf16.mxu0 0
    %2880 = vmatmul.mubr.bf16.gmra.mrb[0].mxu0 %v2558
    %v2881 = vpop.f32.mrb[0].mxu0
    %v2882 = vadd.f32 %v2841, %v2881
    %v2883 = vpop.f32.mrb[0].mxu0
    %v2884 = vadd.f32 %v2843, %v2883
    %v2885 = vpop.f32.mrb[0].mxu0
    %v2886 = vpop.f32.mrb[0].mxu0
    %2887 = vdwg.mxu0
    %2888 = vmatprep.subr.bf16.mxu0 %v1777
    %2889 = vmatpush1.bf16.msra.mxu0 %v1776
    %2890 = vmatprep.subr.bf16.mxu0 %v1785
    %2891 = vmatpush1.bf16.msra.mxu0 %v1784
    %2892 = vmatprep.subr.bf16.mxu0 %v1793
    %2893 = vmatpush1.bf16.msra.mxu0 %v1792
    %2894 = vmatprep.subr.bf16.mxu0 %v1801
    %2895 = vmatpush1.bf16.msra.mxu0 %v1800
    %2896 = vmatprep.subr.bf16.mxu0 %v1809
    %2897 = vmatpush1.bf16.msra.mxu0 %v1808
    %2898 = vmatprep.subr.bf16.mxu0 %v1817
    %2899 = vmatpush1.bf16.msra.mxu0 %v1816
    %2900 = vmatprep.subr.bf16.mxu0 %v1825
    %2901 = vmatpush1.bf16.msra.mxu0 %v1824
    %2902 = vmatprep.subr.bf16.mxu0 %v1833
    %2903 = vmatpush1.bf16.msra.mxu0 %v1832
    %2904 = vmatprep.subr.bf16.mxu0 %v1841
    %2905 = vmatpush1.bf16.msra.mxu0 %v1840
    %2906 = vmatprep.subr.bf16.mxu0 %v1849
    %2907 = vmatpush1.bf16.msra.mxu0 %v1848
    %2908 = vmatprep.subr.bf16.mxu0 %v1857
    %2909 = vmatpush1.bf16.msra.mxu0 %v1856
    %2910 = vmatprep.subr.bf16.mxu0 %v1865
    %2911 = vmatpush1.bf16.msra.mxu0 %v1864
    %2912 = vmatprep.subr.bf16.mxu0 %v1873
    %2913 = vmatpush1.bf16.msra.mxu0 %v1872
    %2914 = vmatprep.subr.bf16.mxu0 %v1881
    %2915 = vmatpush1.bf16.msra.mxu0 %v1880
    %2916 = vmatprep.subr.bf16.mxu0 %v1889
    %2917 = vmatpush1.bf16.msra.mxu0 %v1888
    %2918 = vmatprep.subr.bf16.mxu0 %v1897
    %2919 = vmatpush1.bf16.msra.mxu0 %v1896
    %2920 = vmatprep.mubr.bf16.mxu0 %v584
    %2921 = vmatmul.mubr.bf16.gmra.mrb[0].mxu0 %v583
    %v2922 = vpop.f32.mrb[0].mxu0
    %v2923 = vadd.f32 %v551, %v2922
    %v2924 = vpop.f32.mrb[0].mxu0
    %v2925 = vadd.f32 %v555, %v2924
    %v2926 = vpop.f32.mrb[0].mxu0
    %v2927 = vpop.f32.mrb[0].mxu0
    %2928 = vdwg.mxu0
    %2929 = vmatprep.subr.bf16.mxu0 %v1905
    %2930 = vmatpush1.bf16.msra.mxu0 %v1904
    %2931 = vmatprep.subr.bf16.mxu0 %v1913
    %2932 = vmatpush1.bf16.msra.mxu0 %v1912
    %2933 = vmatprep.subr.bf16.mxu0 %v1921
    %2934 = vmatpush1.bf16.msra.mxu0 %v1920
    %2935 = vmatprep.subr.bf16.mxu0 %v1929
    %2936 = vmatpush1.bf16.msra.mxu0 %v1928
    %2937 = vmatprep.subr.bf16.mxu0 %v1937
    %2938 = vmatpush1.bf16.msra.mxu0 %v1936
    %2939 = vmatprep.subr.bf16.mxu0 %v1945
    %2940 = vmatpush1.bf16.msra.mxu0 %v1944
    %2941 = vmatprep.subr.bf16.mxu0 %v1953
    %2942 = vmatpush1.bf16.msra.mxu0 %v1952
    %2943 = vmatprep.subr.bf16.mxu0 %v1961
    %2944 = vmatpush1.bf16.msra.mxu0 %v1960
    %2945 = vmatprep.subr.bf16.mxu0 %v1969
    %2946 = vmatpush1.bf16.msra.mxu0 %v1968
    %2947 = vmatprep.subr.bf16.mxu0 %v1977
    %2948 = vmatpush1.bf16.msra.mxu0 %v1976
    %2949 = vmatprep.subr.bf16.mxu0 %v1985
    %2950 = vmatpush1.bf16.msra.mxu0 %v1984
    %2951 = vmatprep.subr.bf16.mxu0 %v1993
    %2952 = vmatpush1.bf16.msra.mxu0 %v1992
    %2953 = vmatprep.subr.bf16.mxu0 %v2001
    %2954 = vmatpush1.bf16.msra.mxu0 %v2000
    %2955 = vmatprep.subr.bf16.mxu0 %v2009
    %2956 = vmatpush1.bf16.msra.mxu0 %v2008
    %2957 = vmatprep.subr.bf16.mxu0 %v2017
    %2958 = vmatpush1.bf16.msra.mxu0 %v2016
    %2959 = vmatprep.subr.bf16.mxu0 %v2025
    %2960 = vmatpush1.bf16.msra.mxu0 %v2024
    %2961 = vmatprep.mubr.bf16.mxu0 %v586
    %2962 = vmatmul.mubr.bf16.gmra.mrb[0].mxu0 %v585
    %v2963 = vpop.f32.mrb[0].mxu0
    %v2964 = vadd.f32 %v2923, %v2963
    %v2965 = vpop.f32.mrb[0].mxu0
    %v2966 = vadd.f32 %v2925, %v2965
    %v2967 = vpop.f32.mrb[0].mxu0
    %v2968 = vpop.f32.mrb[0].mxu0
    %2969 = vdwg.mxu0
    %2970 = vmatprep.subr.bf16.mxu0 %v2033
    %2971 = vmatpush1.bf16.msra.mxu0 %v2032
    %2972 = vmatprep.subr.bf16.mxu0 %v2041
    %2973 = vmatpush1.bf16.msra.mxu0 %v2040
    %2974 = vmatprep.subr.bf16.mxu0 %v2049
    %2975 = vmatpush1.bf16.msra.mxu0 %v2048
    %2976 = vmatprep.subr.bf16.mxu0 %v2057
    %2977 = vmatpush1.bf16.msra.mxu0 %v2056
    %2978 = vmatprep.subr.bf16.mxu0 %v2065
    %2979 = vmatpush1.bf16.msra.mxu0 %v2064
    %2980 = vmatprep.subr.bf16.mxu0 %v2073
    %2981 = vmatpush1.bf16.msra.mxu0 %v2072
    %2982 = vmatprep.subr.bf16.mxu0 %v2081
    %2983 = vmatpush1.bf16.msra.mxu0 %v2080
    %2984 = vmatprep.subr.bf16.mxu0 %v2089
    %2985 = vmatpush1.bf16.msra.mxu0 %v2088
    %2986 = vmatprep.subr.bf16.mxu0 %v2097
    %2987 = vmatpush1.bf16.msra.mxu0 %v2096
    %2988 = vmatprep.subr.bf16.mxu0 %v2105
    %2989 = vmatpush1.bf16.msra.mxu0 %v2104
    %2990 = vmatprep.subr.bf16.mxu0 %v2113
    %2991 = vmatpush1.bf16.msra.mxu0 %v2112
    %2992 = vmatprep.subr.bf16.mxu0 %v2121
    %2993 = vmatpush1.bf16.msra.mxu0 %v2120
    %2994 = vmatprep.subr.bf16.mxu0 %v2129
    %2995 = vmatpush1.bf16.msra.mxu0 %v2128
    %2996 = vmatprep.subr.bf16.mxu0 %v2137
    %2997 = vmatpush1.bf16.msra.mxu0 %v2136
    %2998 = vmatprep.subr.bf16.mxu0 %v2145
    %2999 = vmatpush1.bf16.msra.mxu0 %v2144
    %3000 = vmatprep.subr.bf16.mxu0 %v2153
    %3001 = vmatpush1.bf16.msra.mxu0 %v2152
    %3002 = vmatprep.mubr.bf16.mxu0 %v588
    %3003 = vmatmul.mubr.bf16.gmra.mrb[0].mxu0 %v587
    %v3004 = vpop.f32.mrb[0].mxu0
    %v3005 = vadd.f32 %v2964, %v3004
    %v3006 = vpop.f32.mrb[0].mxu0
    %v3007 = vadd.f32 %v2966, %v3006
    %v3008 = vpop.f32.mrb[0].mxu0
    %v3009 = vpop.f32.mrb[0].mxu0
    %3010 = vdwg.mxu0
    %3011 = vmatprep.subr.bf16.mxu0 %v2161
    %3012 = vmatpush1.bf16.msra.mxu0 %v2160
    %3013 = vmatprep.subr.bf16.mxu0 0
    %3014 = vmatpush1.bf16.msra.mxu0 0
    %3015 = vmatprep.subr.bf16.mxu0 0
    %3016 = vmatpush1.bf16.msra.mxu0 0
    %3017 = vmatprep.subr.bf16.mxu0 0
    %3018 = vmatpush1.bf16.msra.mxu0 0
    %3019 = vmatprep.subr.bf16.mxu0 0
    %3020 = vmatpush1.bf16.msra.mxu0 0
    %3021 = vmatprep.subr.bf16.mxu0 0
    %3022 = vmatpush1.bf16.msra.mxu0 0
    %3023 = vmatprep.subr.bf16.mxu0 0
    %3024 = vmatpush1.bf16.msra.mxu0 0
    %3025 = vmatprep.subr.bf16.mxu0 0
    %3026 = vmatpush1.bf16.msra.mxu0 0
    %3027 = vmatprep.subr.bf16.mxu0 0
    %3028 = vmatpush1.bf16.msra.mxu0 0
    %3029 = vmatprep.subr.bf16.mxu0 0
    %3030 = vmatpush1.bf16.msra.mxu0 0
    %3031 = vmatprep.subr.bf16.mxu0 0
    %3032 = vmatpush1.bf16.msra.mxu0 0
    %3033 = vmatprep.subr.bf16.mxu0 0
    %3034 = vmatpush1.bf16.msra.mxu0 0
    %3035 = vmatprep.subr.bf16.mxu0 0
    %3036 = vmatpush1.bf16.msra.mxu0 0
    %3037 = vmatprep.subr.bf16.mxu0 0
    %3038 = vmatpush1.bf16.msra.mxu0 0
    %3039 = vmatprep.subr.bf16.mxu0 0
    %3040 = vmatpush1.bf16.msra.mxu0 0
    %3041 = vmatprep.subr.bf16.mxu0 0
    %3042 = vmatpush1.bf16.msra.mxu0 0
    %3043 = vmatprep.mubr.bf16.mxu0 0
    %3044 = vmatmul.mubr.bf16.gmra.mrb[0].mxu0 %v2558
    %v3045 = vpop.f32.mrb[0].mxu0
    %v3046 = vadd.f32 %v3005, %v3045
    %v3047 = vpop.f32.mrb[0].mxu0
    %v3048 = vadd.f32 %v3007, %v3047
    %v3049 = vpop.f32.mrb[0].mxu0
    %v3050 = vpop.f32.mrb[0].mxu0
    %3051 = vdwg.mxu0
    %3052 = vmatprep.subr.bf16.mxu0 %v1779
    %3053 = vmatpush1.bf16.msra.mxu0 %v1778
    %3054 = vmatprep.subr.bf16.mxu0 %v1787
    %3055 = vmatpush1.bf16.msra.mxu0 %v1786
    %3056 = vmatprep.subr.bf16.mxu0 %v1795
    %3057 = vmatpush1.bf16.msra.mxu0 %v1794
    %3058 = vmatprep.subr.bf16.mxu0 %v1803
    %3059 = vmatpush1.bf16.msra.mxu0 %v1802
    %3060 = vmatprep.subr.bf16.mxu0 %v1811
    %3061 = vmatpush1.bf16.msra.mxu0 %v1810
    %3062 = vmatprep.subr.bf16.mxu0 %v1819
    %3063 = vmatpush1.bf16.msra.mxu0 %v1818
    %3064 = vmatprep.subr.bf16.mxu0 %v1827
    %3065 = vmatpush1.bf16.msra.mxu0 %v1826
    %3066 = vmatprep.subr.bf16.mxu0 %v1835
    %3067 = vmatpush1.bf16.msra.mxu0 %v1834
    %3068 = vmatprep.subr.bf16.mxu0 %v1843
    %3069 = vmatpush1.bf16.msra.mxu0 %v1842
    %3070 = vmatprep.subr.bf16.mxu0 %v1851
    %3071 = vmatpush1.bf16.msra.mxu0 %v1850
    %3072 = vmatprep.subr.bf16.mxu0 %v1859
    %3073 = vmatpush1.bf16.msra.mxu0 %v1858
    %3074 = vmatprep.subr.bf16.mxu0 %v1867
    %3075 = vmatpush1.bf16.msra.mxu0 %v1866
    %3076 = vmatprep.subr.bf16.mxu0 %v1875
    %3077 = vmatpush1.bf16.msra.mxu0 %v1874
    %3078 = vmatprep.subr.bf16.mxu0 %v1883
    %3079 = vmatpush1.bf16.msra.mxu0 %v1882
    %3080 = vmatprep.subr.bf16.mxu0 %v1891
    %3081 = vmatpush1.bf16.msra.mxu0 %v1890
    %3082 = vmatprep.subr.bf16.mxu0 %v1899
    %3083 = vmatpush1.bf16.msra.mxu0 %v1898
    %3084 = vmatprep.mubr.bf16.mxu0 %v584
    %3085 = vmatmul.mubr.bf16.gmra.mrb[0].mxu0 %v583
    %v3086 = vpop.f32.mrb[0].mxu0
    %v3087 = vadd.f32 %v559, %v3086
    %v3088 = vpop.f32.mrb[0].mxu0
    %v3089 = vadd.f32 %v563, %v3088
    %v3090 = vpop.f32.mrb[0].mxu0
    %v3091 = vpop.f32.mrb[0].mxu0
    %3092 = vdwg.mxu0
    %3093 = vmatprep.subr.bf16.mxu0 %v1907
    %3094 = vmatpush1.bf16.msra.mxu0 %v1906
    %3095 = vmatprep.subr.bf16.mxu0 %v1915
    %3096 = vmatpush1.bf16.msra.mxu0 %v1914
    %3097 = vmatprep.subr.bf16.mxu0 %v1923
    %3098 = vmatpush1.bf16.msra.mxu0 %v1922
    %3099 = vmatprep.subr.bf16.mxu0 %v1931
    %3100 = vmatpush1.bf16.msra.mxu0 %v1930
    %3101 = vmatprep.subr.bf16.mxu0 %v1939
    %3102 = vmatpush1.bf16.msra.mxu0 %v1938
    %3103 = vmatprep.subr.bf16.mxu0 %v1947
    %3104 = vmatpush1.bf16.msra.mxu0 %v1946
    %3105 = vmatprep.subr.bf16.mxu0 %v1955
    %3106 = vmatpush1.bf16.msra.mxu0 %v1954
    %3107 = vmatprep.subr.bf16.mxu0 %v1963
    %3108 = vmatpush1.bf16.msra.mxu0 %v1962
    %3109 = vmatprep.subr.bf16.mxu0 %v1971
    %3110 = vmatpush1.bf16.msra.mxu0 %v1970
    %3111 = vmatprep.subr.bf16.mxu0 %v1979
    %3112 = vmatpush1.bf16.msra.mxu0 %v1978
    %3113 = vmatprep.subr.bf16.mxu0 %v1987
    %3114 = vmatpush1.bf16.msra.mxu0 %v1986
    %3115 = vmatprep.subr.bf16.mxu0 %v1995
    %3116 = vmatpush1.bf16.msra.mxu0 %v1994
    %3117 = vmatprep.subr.bf16.mxu0 %v2003
    %3118 = vmatpush1.bf16.msra.mxu0 %v2002
    %3119 = vmatprep.subr.bf16.mxu0 %v2011
    %3120 = vmatpush1.bf16.msra.mxu0 %v2010
    %3121 = vmatprep.subr.bf16.mxu0 %v2019
    %3122 = vmatpush1.bf16.msra.mxu0 %v2018
    %3123 = vmatprep.subr.bf16.mxu0 %v2027
    %3124 = vmatpush1.bf16.msra.mxu0 %v2026
    %3125 = vmatprep.mubr.bf16.mxu0 %v586
    %3126 = vmatmul.mubr.bf16.gmra.mrb[0].mxu0 %v585
    %v3127 = vpop.f32.mrb[0].mxu0
    %v3128 = vadd.f32 %v3087, %v3127
    %v3129 = vpop.f32.mrb[0].mxu0
    %v3130 = vadd.f32 %v3089, %v3129
    %v3131 = vpop.f32.mrb[0].mxu0
    %v3132 = vpop.f32.mrb[0].mxu0
    %3133 = vdwg.mxu0
    %3134 = vmatprep.subr.bf16.mxu0 %v2035
    %3135 = vmatpush1.bf16.msra.mxu0 %v2034
    %3136 = vmatprep.subr.bf16.mxu0 %v2043
    %3137 = vmatpush1.bf16.msra.mxu0 %v2042
    %3138 = vmatprep.subr.bf16.mxu0 %v2051
    %3139 = vmatpush1.bf16.msra.mxu0 %v2050
    %3140 = vmatprep.subr.bf16.mxu0 %v2059
    %3141 = vmatpush1.bf16.msra.mxu0 %v2058
    %3142 = vmatprep.subr.bf16.mxu0 %v2067
    %3143 = vmatpush1.bf16.msra.mxu0 %v2066
    %3144 = vmatprep.subr.bf16.mxu0 %v2075
    %3145 = vmatpush1.bf16.msra.mxu0 %v2074
    %3146 = vmatprep.subr.bf16.mxu0 %v2083
    %3147 = vmatpush1.bf16.msra.mxu0 %v2082
    %3148 = vmatprep.subr.bf16.mxu0 %v2091
    %3149 = vmatpush1.bf16.msra.mxu0 %v2090
    %3150 = vmatprep.subr.bf16.mxu0 %v2099
    %3151 = vmatpush1.bf16.msra.mxu0 %v2098
    %3152 = vmatprep.subr.bf16.mxu0 %v2107
    %3153 = vmatpush1.bf16.msra.mxu0 %v2106
    %3154 = vmatprep.subr.bf16.mxu0 %v2115
    %3155 = vmatpush1.bf16.msra.mxu0 %v2114
    %3156 = vmatprep.subr.bf16.mxu0 %v2123
    %3157 = vmatpush1.bf16.msra.mxu0 %v2122
    %3158 = vmatprep.subr.bf16.mxu0 %v2131
    %3159 = vmatpush1.bf16.msra.mxu0 %v2130
    %3160 = vmatprep.subr.bf16.mxu0 %v2139
    %3161 = vmatpush1.bf16.msra.mxu0 %v2138
    %3162 = vmatprep.subr.bf16.mxu0 %v2147
    %3163 = vmatpush1.bf16.msra.mxu0 %v2146
    %3164 = vmatprep.subr.bf16.mxu0 %v2155
    %3165 = vmatpush1.bf16.msra.mxu0 %v2154
    %3166 = vmatprep.mubr.bf16.mxu0 %v588
    %3167 = vmatmul.mubr.bf16.gmra.mrb[0].mxu0 %v587
    %v3168 = vpop.f32.mrb[0].mxu0
    %v3169 = vadd.f32 %v3128, %v3168
    %v3170 = vpop.f32.mrb[0].mxu0
    %v3171 = vadd.f32 %v3130, %v3170
    %v3172 = vpop.f32.mrb[0].mxu0
    %v3173 = vpop.f32.mrb[0].mxu0
    %3174 = vdwg.mxu0
    %3175 = vmatprep.subr.bf16.mxu0 %v2163
    %3176 = vmatpush1.bf16.msra.mxu0 %v2162
    %3177 = vmatprep.subr.bf16.mxu0 0
    %3178 = vmatpush1.bf16.msra.mxu0 0
    %3179 = vmatprep.subr.bf16.mxu0 0
    %3180 = vmatpush1.bf16.msra.mxu0 0
    %3181 = vmatprep.subr.bf16.mxu0 0
    %3182 = vmatpush1.bf16.msra.mxu0 0
    %3183 = vmatprep.subr.bf16.mxu0 0
    %3184 = vmatpush1.bf16.msra.mxu0 0
    %3185 = vmatprep.subr.bf16.mxu0 0
    %3186 = vmatpush1.bf16.msra.mxu0 0
    %3187 = vmatprep.subr.bf16.mxu0 0
    %3188 = vmatpush1.bf16.msra.mxu0 0
    %3189 = vmatprep.subr.bf16.mxu0 0
    %3190 = vmatpush1.bf16.msra.mxu0 0
    %3191 = vmatprep.subr.bf16.mxu0 0
    %3192 = vmatpush1.bf16.msra.mxu0 0
    %3193 = vmatprep.subr.bf16.mxu0 0
    %3194 = vmatpush1.bf16.msra.mxu0 0
    %3195 = vmatprep.subr.bf16.mxu0 0
    %3196 = vmatpush1.bf16.msra.mxu0 0
    %3197 = vmatprep.subr.bf16.mxu0 0
    %3198 = vmatpush1.bf16.msra.mxu0 0
    %3199 = vmatprep.subr.bf16.mxu0 0
    %3200 = vmatpush1.bf16.msra.mxu0 0
    %3201 = vmatprep.subr.bf16.mxu0 0
    %3202 = vmatpush1.bf16.msra.mxu0 0
    %3203 = vmatprep.subr.bf16.mxu0 0
    %3204 = vmatpush1.bf16.msra.mxu0 0
    %3205 = vmatprep.subr.bf16.mxu0 0
    %3206 = vmatpush1.bf16.msra.mxu0 0
    %3207 = vmatprep.mubr.bf16.mxu0 0
    %3208 = vmatmul.mubr.bf16.gmra.mrb[0].mxu0 %v2558
    %v3209 = vpop.f32.mrb[0].mxu0
    %v3210 = vadd.f32 %v3169, %v3209
    %v3211 = vpop.f32.mrb[0].mxu0
    %v3212 = vadd.f32 %v3171, %v3211
    %v3213 = vpop.f32.mrb[0].mxu0
    %v3214 = vpop.f32.mrb[0].mxu0
    %3215 = vdwg.mxu0
    %vm3216 = vcmp.ge.f32.partialorder %v2718, 0.0
    %vm3217 = vcmp.ge.f32.partialorder %v2720, 0.0
    %vm3218 = vcmp.ge.f32.partialorder %v2882, 0.0
    %vm3219 = vcmp.ge.f32.partialorder %v2884, 0.0
    %vm3220 = vcmp.ge.f32.partialorder %v3046, 0.0
    %vm3221 = vcmp.ge.f32.partialorder %v3048, 0.0
    %vm3222 = vcmp.ge.f32.partialorder %v3210, 0.0
    %vm3223 = vcmp.ge.f32.partialorder %v3212, 0.0
    %v3224 = vmul.f32 %v2718, 0.01
    %v3225 = vmul.f32 %v2720, 0.01
    %v3226 = vmul.f32 %v2882, 0.01
    %v3227 = vmul.f32 %v2884, 0.01
    %v3228 = vmul.f32 %v3046, 0.01
    %v3229 = vmul.f32 %v3048, 0.01
    %v3230 = vmul.f32 %v3210, 0.01
    %v3231 = vmul.f32 %v3212, 0.01
    %v3232 = vsel %vm3216, %v2718, %v3224
    %v3233 = vsel %vm3217, %v2720, %v3225
    %v3234 = vsel %vm3218, %v2882, %v3226
    %v3235 = vsel %vm3219, %v2884, %v3227
    %v3236 = vsel %vm3220, %v3046, %v3228
    %v3237 = vsel %vm3221, %v3048, %v3229
    %v3238 = vsel %vm3222, %v3210, %v3230
    %v3239 = vsel %vm3223, %v3212, %v3231
    %v3240 = vpack.c.bf16 %v3232, %v3232
    %v3241 = vpack.c.bf16 %v3233, %v3233
    %v3242 = vpack.c.bf16 %v3234, %v3234
    %v3243 = vpack.c.bf16 %v3235, %v3235
    %v3244 = vpack.c.bf16 %v3236, %v3236
    %v3245 = vpack.c.bf16 %v3237, %v3237
    %v3246 = vpack.c.bf16 %v3238, %v3238
    %v3247 = vpack.c.bf16 %v3239, %v3239
    %v3248 = vld [vmem:[#allocation6] sm:$0xff]
    %v3249 = vld [vmem:[#allocation6 + $0x8] sm:$0xff]
    %v3250 = vld [vmem:[#allocation6 + $0x10] sm:$0xff]
    %v3251 = vld [vmem:[#allocation6 + $0x18] sm:$0xff]
    %v3252 = vld [vmem:[#allocation6 + $0x20] sm:$0xff]
    %v3253 = vld [vmem:[#allocation6 + $0x28] sm:$0xff]
    %v3254 = vld [vmem:[#allocation6 + $0x30] sm:$0xff]
    %v3255 = vld [vmem:[#allocation6 + $0x38] sm:$0xff]
    %v3256 = vld [vmem:[#allocation6 + $0x40] sm:$0xff]
    %v3257 = vld [vmem:[#allocation6 + $0x48] sm:$0xff]
    %v3258 = vld [vmem:[#allocation6 + $0x50] sm:$0xff]
    %v3259 = vld [vmem:[#allocation6 + $0x58] sm:$0xff]
    %v3260 = vld [vmem:[#allocation6 + $0x60] sm:$0xff]
    %v3261 = vld [vmem:[#allocation6 + $0x68] sm:$0xff]
    %v3262 = vld [vmem:[#allocation6 + $0x70] sm:$0xff]
    %v3263 = vld [vmem:[#allocation6 + $0x78] sm:$0xff]
    %v3264 = vld [vmem:[#allocation6 + $0x80] sm:$0xff]
    %v3265 = vld [vmem:[#allocation6 + $0x88] sm:$0xff]
    %v3266 = vld [vmem:[#allocation6 + $0x90] sm:$0xff]
    %v3267 = vld [vmem:[#allocation6 + $0x98] sm:$0xff]
    %v3268 = vld [vmem:[#allocation6 + $0xa0] sm:$0xff]
    %v3269 = vld [vmem:[#allocation6 + $0xa8] sm:$0xff]
    %v3270 = vld [vmem:[#allocation6 + $0xb0] sm:$0xff]
    %v3271 = vld [vmem:[#allocation6 + $0xb8] sm:$0xff]
    %v3272 = vld [vmem:[#allocation6 + $0xc0] sm:$0xff]
    %v3273 = vld [vmem:[#allocation6 + $0xc8] sm:$0xff]
    %v3274 = vld [vmem:[#allocation6 + $0xd0] sm:$0xff]
    %v3275 = vld [vmem:[#allocation6 + $0xd8] sm:$0xff]
    %v3276 = vld [vmem:[#allocation6 + $0xe0] sm:$0xff]
    %v3277 = vld [vmem:[#allocation6 + $0xe8] sm:$0xff]
    %v3278 = vld [vmem:[#allocation6 + $0xf0] sm:$0xff]
    %v3279 = vld [vmem:[#allocation6 + $0xf8] sm:$0xff]
    %v3280 = vld [vmem:[#allocation6 + $0x100] sm:$0xff]
    %v3281 = vld [vmem:[#allocation6 + $0x108] sm:$0xff]
    %v3282 = vld [vmem:[#allocation6 + $0x110] sm:$0xff]
    %v3283 = vld [vmem:[#allocation6 + $0x118] sm:$0xff]
    %v3284 = vld [vmem:[#allocation6 + $0x120] sm:$0xff]
    %v3285 = vld [vmem:[#allocation6 + $0x128] sm:$0xff]
    %v3286 = vld [vmem:[#allocation6 + $0x130] sm:$0xff]
    %v3287 = vld [vmem:[#allocation6 + $0x138] sm:$0xff]
    %v3288 = vld [vmem:[#allocation6 + $0x140] sm:$0xff]
    %v3289 = vld [vmem:[#allocation6 + $0x148] sm:$0xff]
    %v3290 = vld [vmem:[#allocation6 + $0x150] sm:$0xff]
    %v3291 = vld [vmem:[#allocation6 + $0x158] sm:$0xff]
    %v3292 = vld [vmem:[#allocation6 + $0x160] sm:$0xff]
    %v3293 = vld [vmem:[#allocation6 + $0x168] sm:$0xff]
    %v3294 = vld [vmem:[#allocation6 + $0x170] sm:$0xff]
    %v3295 = vld [vmem:[#allocation6 + $0x178] sm:$0xff]
    %v3296 = vld [vmem:[#allocation6 + $0x180] sm:$0xff]
    %v3297 = vld [vmem:[#allocation6 + $0x188] sm:$0xff]
    %v3298 = vld [vmem:[#allocation6 + $0x190] sm:$0xff]
    %v3299 = vld [vmem:[#allocation6 + $0x198] sm:$0xff]
    %v3300 = vld [vmem:[#allocation6 + $0x1a0] sm:$0xff]
    %v3301 = vld [vmem:[#allocation6 + $0x1a8] sm:$0xff]
    %v3302 = vld [vmem:[#allocation6 + $0x1b0] sm:$0xff]
    %v3303 = vld [vmem:[#allocation6 + $0x1b8] sm:$0xff]
    %v3304 = vld [vmem:[#allocation6 + $0x1c0] sm:$0xff]
    %v3305 = vld [vmem:[#allocation6 + $0x1c8] sm:$0xff]
    %v3306 = vld [vmem:[#allocation6 + $0x1d0] sm:$0xff]
    %v3307 = vld [vmem:[#allocation6 + $0x1d8] sm:$0xff]
    %v3308 = vld [vmem:[#allocation6 + $0x1e0] sm:$0xff]
    %v3309 = vld [vmem:[#allocation6 + $0x1e8] sm:$0xff]
    %v3310 = vld [vmem:[#allocation6 + $0x1f0] sm:$0xff]
    %v3311 = vld [vmem:[#allocation6 + $0x1f8] sm:$0xff]
    %v3312 = vld [vmem:[#allocation6 + $0x200] sm:$0xff]
    %v3313 = vld [vmem:[#allocation6 + $0x208] sm:$0xff]
    %v3314 = vld [vmem:[#allocation6 + $0x210] sm:$0xff]
    %v3315 = vld [vmem:[#allocation6 + $0x218] sm:$0xff]
    %v3316 = vld [vmem:[#allocation6 + $0x220] sm:$0xff]
    %v3317 = vld [vmem:[#allocation6 + $0x228] sm:$0xff]
    %v3318 = vld [vmem:[#allocation6 + $0x230] sm:$0xff]
    %v3319 = vld [vmem:[#allocation6 + $0x238] sm:$0xff]
    %v3320 = vld [vmem:[#allocation6 + $0x240] sm:$0xff]
    %v3321 = vld [vmem:[#allocation6 + $0x248] sm:$0xff]
    %v3322 = vld [vmem:[#allocation6 + $0x250] sm:$0xff]
    %v3323 = vld [vmem:[#allocation6 + $0x258] sm:$0xff]
    %v3324 = vld [vmem:[#allocation6 + $0x260] sm:$0xff]
    %v3325 = vld [vmem:[#allocation6 + $0x268] sm:$0xff]
    %v3326 = vld [vmem:[#allocation6 + $0x270] sm:$0xff]
    %v3327 = vld [vmem:[#allocation6 + $0x278] sm:$0xff]
    %v3328 = vld [vmem:[#allocation6 + $0x280] sm:$0xff]
    %v3329 = vld [vmem:[#allocation6 + $0x288] sm:$0xff]
    %v3330 = vld [vmem:[#allocation6 + $0x290] sm:$0xff]
    %v3331 = vld [vmem:[#allocation6 + $0x298] sm:$0xff]
    %v3332 = vld [vmem:[#allocation6 + $0x2a0] sm:$0xff]
    %v3333 = vld [vmem:[#allocation6 + $0x2a8] sm:$0xff]
    %v3334 = vld [vmem:[#allocation6 + $0x2b0] sm:$0xff]
    %v3335 = vld [vmem:[#allocation6 + $0x2b8] sm:$0xff]
    %v3336 = vld [vmem:[#allocation6 + $0x2c0] sm:$0xff]
    %v3337 = vld [vmem:[#allocation6 + $0x2c8] sm:$0xff]
    %v3338 = vld [vmem:[#allocation6 + $0x2d0] sm:$0xff]
    %v3339 = vld [vmem:[#allocation6 + $0x2d8] sm:$0xff]
    %v3340 = vld [vmem:[#allocation6 + $0x2e0] sm:$0xff]
    %v3341 = vld [vmem:[#allocation6 + $0x2e8] sm:$0xff]
    %v3342 = vld [vmem:[#allocation6 + $0x2f0] sm:$0xff]
    %v3343 = vld [vmem:[#allocation6 + $0x2f8] sm:$0xff]
    %v3344 = vld [vmem:[#allocation6 + $0x300] sm:$0xff]
    %v3345 = vld [vmem:[#allocation6 + $0x308] sm:$0xff]
    %v3346 = vld [vmem:[#allocation6 + $0x310] sm:$0xff]
    %v3347 = vld [vmem:[#allocation6 + $0x318] sm:$0xff]
    %v3348 = vld [vmem:[#allocation6 + $0x320] sm:$0xff]
    %v3349 = vld [vmem:[#allocation6 + $0x328] sm:$0xff]
    %v3350 = vld [vmem:[#allocation6 + $0x330] sm:$0xff]
    %v3351 = vld [vmem:[#allocation6 + $0x338] sm:$0xff]
    %v3352 = vld [vmem:[#allocation6 + $0x340] sm:$0xff]
    %v3353 = vld [vmem:[#allocation6 + $0x348] sm:$0xff]
    %v3354 = vld [vmem:[#allocation6 + $0x350] sm:$0xff]
    %v3355 = vld [vmem:[#allocation6 + $0x358] sm:$0xff]
    %v3356 = vld [vmem:[#allocation6 + $0x360] sm:$0xff]
    %v3357 = vld [vmem:[#allocation6 + $0x368] sm:$0xff]
    %v3358 = vld [vmem:[#allocation6 + $0x370] sm:$0xff]
    %v3359 = vld [vmem:[#allocation6 + $0x378] sm:$0xff]
    %v3360 = vld [vmem:[#allocation6 + $0x380] sm:$0xff]
    %v3361 = vld [vmem:[#allocation6 + $0x388] sm:$0xff]
    %v3362 = vld [vmem:[#allocation6 + $0x390] sm:$0xff]
    %v3363 = vld [vmem:[#allocation6 + $0x398] sm:$0xff]
    %v3364 = vld [vmem:[#allocation6 + $0x3a0] sm:$0xff]
    %v3365 = vld [vmem:[#allocation6 + $0x3a8] sm:$0xff]
    %v3366 = vld [vmem:[#allocation6 + $0x3b0] sm:$0xff]
    %v3367 = vld [vmem:[#allocation6 + $0x3b8] sm:$0xff]
    %v3368 = vld [vmem:[#allocation6 + $0x3c0] sm:$0xff]
    %v3369 = vld [vmem:[#allocation6 + $0x3c8] sm:$0xff]
    %v3370 = vld [vmem:[#allocation6 + $0x3d0] sm:$0xff]
    %v3371 = vld [vmem:[#allocation6 + $0x3d8] sm:$0xff]
    %v3372 = vld [vmem:[#allocation6 + $0x3e0] sm:$0xff]
    %v3373 = vld [vmem:[#allocation6 + $0x3e8] sm:$0xff]
    %v3374 = vld [vmem:[#allocation6 + $0x3f0] sm:$0xff]
    %v3375 = vld [vmem:[#allocation6 + $0x3f8] sm:$0xff]
    %v3376 = vld [vmem:[#allocation6 + $0x400] sm:$0xff]
    %v3377 = vld [vmem:[#allocation6 + $0x408] sm:$0xff]
    %v3378 = vld [vmem:[#allocation6 + $0x410] sm:$0xff]
    %v3379 = vld [vmem:[#allocation6 + $0x418] sm:$0xff]
    %v3380 = vld [vmem:[#allocation6 + $0x420] sm:$0xff]
    %v3381 = vld [vmem:[#allocation6 + $0x428] sm:$0xff]
    %v3382 = vld [vmem:[#allocation6 + $0x430] sm:$0xff]
    %v3383 = vld [vmem:[#allocation6 + $0x438] sm:$0xff]
    %v3384 = vld [vmem:[#allocation6 + $0x440] sm:$0xff]
    %v3385 = vld [vmem:[#allocation6 + $0x448] sm:$0xff]
    %v3386 = vld [vmem:[#allocation6 + $0x450] sm:$0xff]
    %v3387 = vld [vmem:[#allocation6 + $0x458] sm:$0xff]
    %v3388 = vld [vmem:[#allocation6 + $0x460] sm:$0xff]
    %v3389 = vld [vmem:[#allocation6 + $0x468] sm:$0xff]
    %v3390 = vld [vmem:[#allocation6 + $0x470] sm:$0xff]
    %v3391 = vld [vmem:[#allocation6 + $0x478] sm:$0xff]
    %v3392 = vld [vmem:[#allocation6 + $0x480] sm:$0xff]
    %v3393 = vld [vmem:[#allocation6 + $0x488] sm:$0xff]
    %v3394 = vld [vmem:[#allocation6 + $0x490] sm:$0xff]
    %v3395 = vld [vmem:[#allocation6 + $0x498] sm:$0xff]
    %v3396 = vld [vmem:[#allocation6 + $0x4a0] sm:$0xff]
    %v3397 = vld [vmem:[#allocation6 + $0x4a8] sm:$0xff]
    %v3398 = vld [vmem:[#allocation6 + $0x4b0] sm:$0xff]
    %v3399 = vld [vmem:[#allocation6 + $0x4b8] sm:$0xff]
    %v3400 = vld [vmem:[#allocation6 + $0x4c0] sm:$0xff]
    %v3401 = vld [vmem:[#allocation6 + $0x4c8] sm:$0xff]
    %v3402 = vld [vmem:[#allocation6 + $0x4d0] sm:$0xff]
    %v3403 = vld [vmem:[#allocation6 + $0x4d8] sm:$0xff]
    %v3404 = vld [vmem:[#allocation6 + $0x4e0] sm:$0xff]
    %v3405 = vld [vmem:[#allocation6 + $0x4e8] sm:$0xff]
    %v3406 = vld [vmem:[#allocation6 + $0x4f0] sm:$0xff]
    %v3407 = vld [vmem:[#allocation6 + $0x4f8] sm:$0xff]
    %v3408 = vld [vmem:[#allocation6 + $0x500] sm:$0xff]
    %v3409 = vld [vmem:[#allocation6 + $0x508] sm:$0xff]
    %v3410 = vld [vmem:[#allocation6 + $0x510] sm:$0xff]
    %v3411 = vld [vmem:[#allocation6 + $0x518] sm:$0xff]
    %v3412 = vld [vmem:[#allocation6 + $0x520] sm:$0xff]
    %v3413 = vld [vmem:[#allocation6 + $0x528] sm:$0xff]
    %v3414 = vld [vmem:[#allocation6 + $0x530] sm:$0xff]
    %v3415 = vld [vmem:[#allocation6 + $0x538] sm:$0xff]
    %v3416 = vld [vmem:[#allocation6 + $0x540] sm:$0xff]
    %v3417 = vld [vmem:[#allocation6 + $0x548] sm:$0xff]
    %v3418 = vld [vmem:[#allocation6 + $0x550] sm:$0xff]
    %v3419 = vld [vmem:[#allocation6 + $0x558] sm:$0xff]
    %v3420 = vld [vmem:[#allocation6 + $0x560] sm:$0xff]
    %v3421 = vld [vmem:[#allocation6 + $0x568] sm:$0xff]
    %v3422 = vld [vmem:[#allocation6 + $0x570] sm:$0xff]
    %v3423 = vld [vmem:[#allocation6 + $0x578] sm:$0xff]
    %v3424 = vld [vmem:[#allocation6 + $0x580] sm:$0xff]
    %v3425 = vld [vmem:[#allocation6 + $0x588] sm:$0xff]
    %v3426 = vld [vmem:[#allocation6 + $0x590] sm:$0xff]
    %v3427 = vld [vmem:[#allocation6 + $0x598] sm:$0xff]
    %v3428 = vld [vmem:[#allocation6 + $0x5a0] sm:$0xff]
    %v3429 = vld [vmem:[#allocation6 + $0x5a8] sm:$0xff]
    %v3430 = vld [vmem:[#allocation6 + $0x5b0] sm:$0xff]
    %v3431 = vld [vmem:[#allocation6 + $0x5b8] sm:$0xff]
    %v3432 = vld [vmem:[#allocation6 + $0x5c0] sm:$0xff]
    %v3433 = vld [vmem:[#allocation6 + $0x5c8] sm:$0xff]
    %v3434 = vld [vmem:[#allocation6 + $0x5d0] sm:$0xff]
    %v3435 = vld [vmem:[#allocation6 + $0x5d8] sm:$0xff]
    %v3436 = vld [vmem:[#allocation6 + $0x5e0] sm:$0xff]
    %v3437 = vld [vmem:[#allocation6 + $0x5e8] sm:$0xff]
    %v3438 = vld [vmem:[#allocation6 + $0x5f0] sm:$0xff]
    %v3439 = vld [vmem:[#allocation6 + $0x5f8] sm:$0xff]
    %v3440 = vld [vmem:[#allocation6 + $0x600] sm:$0xff]
    %v3441 = vld [vmem:[#allocation6 + $0x608] sm:$0xff]
    %v3442 = vld [vmem:[#allocation6 + $0x610] sm:$0xff]
    %v3443 = vld [vmem:[#allocation6 + $0x618] sm:$0xff]
    %v3444 = vld [vmem:[#allocation6 + $0x620] sm:$0xff]
    %v3445 = vld [vmem:[#allocation6 + $0x628] sm:$0xff]
    %v3446 = vld [vmem:[#allocation6 + $0x630] sm:$0xff]
    %v3447 = vld [vmem:[#allocation6 + $0x638] sm:$0xff]
    %v3448 = vld [vmem:[#allocation6 + $0x640] sm:$0xff]
    %v3449 = vld [vmem:[#allocation6 + $0x648] sm:$0xff]
    %v3450 = vld [vmem:[#allocation6 + $0x650] sm:$0xff]
    %v3451 = vld [vmem:[#allocation6 + $0x658] sm:$0xff]
    %v3452 = vld [vmem:[#allocation6 + $0x660] sm:$0xff]
    %v3453 = vld [vmem:[#allocation6 + $0x668] sm:$0xff]
    %v3454 = vld [vmem:[#allocation6 + $0x670] sm:$0xff]
    %v3455 = vld [vmem:[#allocation6 + $0x678] sm:$0xff]
    %v3456 = vld [vmem:[#allocation6 + $0x680] sm:$0xff]
    %v3457 = vld [vmem:[#allocation6 + $0x688] sm:$0xff]
    %v3458 = vld [vmem:[#allocation6 + $0x690] sm:$0xff]
    %v3459 = vld [vmem:[#allocation6 + $0x698] sm:$0xff]
    %v3460 = vld [vmem:[#allocation6 + $0x6a0] sm:$0xff]
    %v3461 = vld [vmem:[#allocation6 + $0x6a8] sm:$0xff]
    %v3462 = vld [vmem:[#allocation6 + $0x6b0] sm:$0xff]
    %v3463 = vld [vmem:[#allocation6 + $0x6b8] sm:$0xff]
    %v3464 = vld [vmem:[#allocation6 + $0x6c0] sm:$0xff]
    %v3465 = vld [vmem:[#allocation6 + $0x6c8] sm:$0xff]
    %v3466 = vld [vmem:[#allocation6 + $0x6d0] sm:$0xff]
    %v3467 = vld [vmem:[#allocation6 + $0x6d8] sm:$0xff]
    %v3468 = vld [vmem:[#allocation6 + $0x6e0] sm:$0xff]
    %v3469 = vld [vmem:[#allocation6 + $0x6e8] sm:$0xff]
    %v3470 = vld [vmem:[#allocation6 + $0x6f0] sm:$0xff]
    %v3471 = vld [vmem:[#allocation6 + $0x6f8] sm:$0xff]
    %v3472 = vld [vmem:[#allocation6 + $0x700] sm:$0xff]
    %v3473 = vld [vmem:[#allocation6 + $0x708] sm:$0xff]
    %v3474 = vld [vmem:[#allocation6 + $0x710] sm:$0xff]
    %v3475 = vld [vmem:[#allocation6 + $0x718] sm:$0xff]
    %v3476 = vld [vmem:[#allocation6 + $0x720] sm:$0xff]
    %v3477 = vld [vmem:[#allocation6 + $0x728] sm:$0xff]
    %v3478 = vld [vmem:[#allocation6 + $0x730] sm:$0xff]
    %v3479 = vld [vmem:[#allocation6 + $0x738] sm:$0xff]
    %v3480 = vld [vmem:[#allocation6 + $0x740] sm:$0xff]
    %v3481 = vld [vmem:[#allocation6 + $0x748] sm:$0xff]
    %v3482 = vld [vmem:[#allocation6 + $0x750] sm:$0xff]
    %v3483 = vld [vmem:[#allocation6 + $0x758] sm:$0xff]
    %v3484 = vld [vmem:[#allocation6 + $0x760] sm:$0xff]
    %v3485 = vld [vmem:[#allocation6 + $0x768] sm:$0xff]
    %v3486 = vld [vmem:[#allocation6 + $0x770] sm:$0xff]
    %v3487 = vld [vmem:[#allocation6 + $0x778] sm:$0xff]
    %v3488 = vld [vmem:[#allocation6 + $0x780] sm:$0xff]
    %v3489 = vld [vmem:[#allocation6 + $0x788] sm:$0xff]
    %v3490 = vld [vmem:[#allocation6 + $0x790] sm:$0xff]
    %v3491 = vld [vmem:[#allocation6 + $0x798] sm:$0xff]
    %v3492 = vld [vmem:[#allocation6 + $0x7a0] sm:$0xff]
    %v3493 = vld [vmem:[#allocation6 + $0x7a8] sm:$0xff]
    %v3494 = vld [vmem:[#allocation6 + $0x7b0] sm:$0xff]
    %v3495 = vld [vmem:[#allocation6 + $0x7b8] sm:$0xff]
    %v3496 = vld [vmem:[#allocation6 + $0x7c0] sm:$0xff]
    %v3497 = vld [vmem:[#allocation6 + $0x7c8] sm:$0xff]
    %v3498 = vld [vmem:[#allocation6 + $0x7d0] sm:$0xff]
    %v3499 = vld [vmem:[#allocation6 + $0x7d8] sm:$0xff]
    %v3500 = vld [vmem:[#allocation6 + $0x7e0] sm:$0xff]
    %v3501 = vld [vmem:[#allocation6 + $0x7e8] sm:$0xff]
    %v3502 = vld [vmem:[#allocation6 + $0x7f0] sm:$0xff]
    %v3503 = vld [vmem:[#allocation6 + $0x7f8] sm:$0xff]
    %v3504 = vld [vmem:[#allocation7] sm:$0xf]
    %v3506 = vlaneseq
    %v3507 = vshrl.u32 %v3506, 7
    %v3508 = vsub.s32 0, %v3507
    %v3509 = vrot.slane %v3504, %v3508
    %v3510 = vlaneseq
    %v3511 = vshrl.u32 %v3510, 7
    %v3512 = vsub.s32 1, %v3511
    %v3513 = vrot.slane %v3504, %v3512
    %v3514 = vlaneseq
    %v3515 = vshrl.u32 %v3514, 7
    %v3516 = vsub.s32 2, %v3515
    %v3517 = vrot.slane %v3504, %v3516
    %v3518 = vlaneseq
    %v3519 = vshrl.u32 %v3518, 7
    %v3520 = vsub.s32 3, %v3519
    %v3521 = vrot.slane %v3504, %v3520
    %v3782 = vunpack.c.l.b16 %v3248
    %v3783 = vunpack.c.h.b16 %v3248
    %v3784 = vunpack.c.l.b16 %v3249
    %v3785 = vunpack.c.h.b16 %v3249
    %v3786 = vunpack.c.l.b16 %v3250
    %v3787 = vunpack.c.h.b16 %v3250
    %v3788 = vunpack.c.l.b16 %v3251
    %v3789 = vunpack.c.h.b16 %v3251
    %v3790 = vunpack.c.l.b16 %v3252
    %v3791 = vunpack.c.h.b16 %v3252
    %v3792 = vunpack.c.l.b16 %v3253
    %v3793 = vunpack.c.h.b16 %v3253
    %v3794 = vunpack.c.l.b16 %v3254
    %v3795 = vunpack.c.h.b16 %v3254
    %v3796 = vunpack.c.l.b16 %v3255
    %v3797 = vunpack.c.h.b16 %v3255
    %v3798 = vunpack.c.l.b16 %v3256
    %v3799 = vunpack.c.h.b16 %v3256
    %v3800 = vunpack.c.l.b16 %v3257
    %v3801 = vunpack.c.h.b16 %v3257
    %v3802 = vunpack.c.l.b16 %v3258
    %v3803 = vunpack.c.h.b16 %v3258
    %v3804 = vunpack.c.l.b16 %v3259
    %v3805 = vunpack.c.h.b16 %v3259
    %v3806 = vunpack.c.l.b16 %v3260
    %v3807 = vunpack.c.h.b16 %v3260
    %v3808 = vunpack.c.l.b16 %v3261
    %v3809 = vunpack.c.h.b16 %v3261
    %v3810 = vunpack.c.l.b16 %v3262
    %v3811 = vunpack.c.h.b16 %v3262
    %v3812 = vunpack.c.l.b16 %v3263
    %v3813 = vunpack.c.h.b16 %v3263
    %v3814 = vunpack.c.l.b16 %v3264
    %v3815 = vunpack.c.h.b16 %v3264
    %v3816 = vunpack.c.l.b16 %v3265
    %v3817 = vunpack.c.h.b16 %v3265
    %v3818 = vunpack.c.l.b16 %v3266
    %v3819 = vunpack.c.h.b16 %v3266
    %v3820 = vunpack.c.l.b16 %v3267
    %v3821 = vunpack.c.h.b16 %v3267
    %v3822 = vunpack.c.l.b16 %v3268
    %v3823 = vunpack.c.h.b16 %v3268
    %v3824 = vunpack.c.l.b16 %v3269
    %v3825 = vunpack.c.h.b16 %v3269
    %v3826 = vunpack.c.l.b16 %v3270
    %v3827 = vunpack.c.h.b16 %v3270
    %v3828 = vunpack.c.l.b16 %v3271
    %v3829 = vunpack.c.h.b16 %v3271
    %v3830 = vunpack.c.l.b16 %v3272
    %v3831 = vunpack.c.h.b16 %v3272
    %v3832 = vunpack.c.l.b16 %v3273
    %v3833 = vunpack.c.h.b16 %v3273
    %v3834 = vunpack.c.l.b16 %v3274
    %v3835 = vunpack.c.h.b16 %v3274
    %v3836 = vunpack.c.l.b16 %v3275
    %v3837 = vunpack.c.h.b16 %v3275
    %v3838 = vunpack.c.l.b16 %v3276
    %v3839 = vunpack.c.h.b16 %v3276
    %v3840 = vunpack.c.l.b16 %v3277
    %v3841 = vunpack.c.h.b16 %v3277
    %v3842 = vunpack.c.l.b16 %v3278
    %v3843 = vunpack.c.h.b16 %v3278
    %v3844 = vunpack.c.l.b16 %v3279
    %v3845 = vunpack.c.h.b16 %v3279
    %v3846 = vunpack.c.l.b16 %v3280
    %v3847 = vunpack.c.h.b16 %v3280
    %v3848 = vunpack.c.l.b16 %v3281
    %v3849 = vunpack.c.h.b16 %v3281
    %v3850 = vunpack.c.l.b16 %v3282
    %v3851 = vunpack.c.h.b16 %v3282
    %v3852 = vunpack.c.l.b16 %v3283
    %v3853 = vunpack.c.h.b16 %v3283
    %v3854 = vunpack.c.l.b16 %v3284
    %v3855 = vunpack.c.h.b16 %v3284
    %v3856 = vunpack.c.l.b16 %v3285
    %v3857 = vunpack.c.h.b16 %v3285
    %v3858 = vunpack.c.l.b16 %v3286
    %v3859 = vunpack.c.h.b16 %v3286
    %v3860 = vunpack.c.l.b16 %v3287
    %v3861 = vunpack.c.h.b16 %v3287
    %v3862 = vunpack.c.l.b16 %v3288
    %v3863 = vunpack.c.h.b16 %v3288
    %v3864 = vunpack.c.l.b16 %v3289
    %v3865 = vunpack.c.h.b16 %v3289
    %v3866 = vunpack.c.l.b16 %v3290
    %v3867 = vunpack.c.h.b16 %v3290
    %v3868 = vunpack.c.l.b16 %v3291
    %v3869 = vunpack.c.h.b16 %v3291
    %v3870 = vunpack.c.l.b16 %v3292
    %v3871 = vunpack.c.h.b16 %v3292
    %v3872 = vunpack.c.l.b16 %v3293
    %v3873 = vunpack.c.h.b16 %v3293
    %v3874 = vunpack.c.l.b16 %v3294
    %v3875 = vunpack.c.h.b16 %v3294
    %v3876 = vunpack.c.l.b16 %v3295
    %v3877 = vunpack.c.h.b16 %v3295
    %v3878 = vunpack.c.l.b16 %v3296
    %v3879 = vunpack.c.h.b16 %v3296
    %v3880 = vunpack.c.l.b16 %v3297
    %v3881 = vunpack.c.h.b16 %v3297
    %v3882 = vunpack.c.l.b16 %v3298
    %v3883 = vunpack.c.h.b16 %v3298
    %v3884 = vunpack.c.l.b16 %v3299
    %v3885 = vunpack.c.h.b16 %v3299
    %v3886 = vunpack.c.l.b16 %v3300
    %v3887 = vunpack.c.h.b16 %v3300
    %v3888 = vunpack.c.l.b16 %v3301
    %v3889 = vunpack.c.h.b16 %v3301
    %v3890 = vunpack.c.l.b16 %v3302
    %v3891 = vunpack.c.h.b16 %v3302
    %v3892 = vunpack.c.l.b16 %v3303
    %v3893 = vunpack.c.h.b16 %v3303
    %v3894 = vunpack.c.l.b16 %v3304
    %v3895 = vunpack.c.h.b16 %v3304
    %v3896 = vunpack.c.l.b16 %v3305
    %v3897 = vunpack.c.h.b16 %v3305
    %v3898 = vunpack.c.l.b16 %v3306
    %v3899 = vunpack.c.h.b16 %v3306
    %v3900 = vunpack.c.l.b16 %v3307
    %v3901 = vunpack.c.h.b16 %v3307
    %v3902 = vunpack.c.l.b16 %v3308
    %v3903 = vunpack.c.h.b16 %v3308
    %v3904 = vunpack.c.l.b16 %v3309
    %v3905 = vunpack.c.h.b16 %v3309
    %v3906 = vunpack.c.l.b16 %v3310
    %v3907 = vunpack.c.h.b16 %v3310
    %v3908 = vunpack.c.l.b16 %v3311
    %v3909 = vunpack.c.h.b16 %v3311
    %v3910 = vunpack.c.l.b16 %v3312
    %v3911 = vunpack.c.h.b16 %v3312
    %v3912 = vunpack.c.l.b16 %v3313
    %v3913 = vunpack.c.h.b16 %v3313
    %v3914 = vunpack.c.l.b16 %v3314
    %v3915 = vunpack.c.h.b16 %v3314
    %v3916 = vunpack.c.l.b16 %v3315
    %v3917 = vunpack.c.h.b16 %v3315
    %v3918 = vunpack.c.l.b16 %v3316
    %v3919 = vunpack.c.h.b16 %v3316
    %v3920 = vunpack.c.l.b16 %v3317
    %v3921 = vunpack.c.h.b16 %v3317
    %v3922 = vunpack.c.l.b16 %v3318
    %v3923 = vunpack.c.h.b16 %v3318
    %v3924 = vunpack.c.l.b16 %v3319
    %v3925 = vunpack.c.h.b16 %v3319
    %v3926 = vunpack.c.l.b16 %v3320
    %v3927 = vunpack.c.h.b16 %v3320
    %v3928 = vunpack.c.l.b16 %v3321
    %v3929 = vunpack.c.h.b16 %v3321
    %v3930 = vunpack.c.l.b16 %v3322
    %v3931 = vunpack.c.h.b16 %v3322
    %v3932 = vunpack.c.l.b16 %v3323
    %v3933 = vunpack.c.h.b16 %v3323
    %v3934 = vunpack.c.l.b16 %v3324
    %v3935 = vunpack.c.h.b16 %v3324
    %v3936 = vunpack.c.l.b16 %v3325
    %v3937 = vunpack.c.h.b16 %v3325
    %v3938 = vunpack.c.l.b16 %v3326
    %v3939 = vunpack.c.h.b16 %v3326
    %v3940 = vunpack.c.l.b16 %v3327
    %v3941 = vunpack.c.h.b16 %v3327
    %v3942 = vunpack.c.l.b16 %v3328
    %v3943 = vunpack.c.h.b16 %v3328
    %v3944 = vunpack.c.l.b16 %v3329
    %v3945 = vunpack.c.h.b16 %v3329
    %v3946 = vunpack.c.l.b16 %v3330
    %v3947 = vunpack.c.h.b16 %v3330
    %v3948 = vunpack.c.l.b16 %v3331
    %v3949 = vunpack.c.h.b16 %v3331
    %v3950 = vunpack.c.l.b16 %v3332
    %v3951 = vunpack.c.h.b16 %v3332
    %v3952 = vunpack.c.l.b16 %v3333
    %v3953 = vunpack.c.h.b16 %v3333
    %v3954 = vunpack.c.l.b16 %v3334
    %v3955 = vunpack.c.h.b16 %v3334
    %v3956 = vunpack.c.l.b16 %v3335
    %v3957 = vunpack.c.h.b16 %v3335
    %v3958 = vunpack.c.l.b16 %v3336
    %v3959 = vunpack.c.h.b16 %v3336
    %v3960 = vunpack.c.l.b16 %v3337
    %v3961 = vunpack.c.h.b16 %v3337
    %v3962 = vunpack.c.l.b16 %v3338
    %v3963 = vunpack.c.h.b16 %v3338
    %v3964 = vunpack.c.l.b16 %v3339
    %v3965 = vunpack.c.h.b16 %v3339
    %v3966 = vunpack.c.l.b16 %v3340
    %v3967 = vunpack.c.h.b16 %v3340
    %v3968 = vunpack.c.l.b16 %v3341
    %v3969 = vunpack.c.h.b16 %v3341
    %v3970 = vunpack.c.l.b16 %v3342
    %v3971 = vunpack.c.h.b16 %v3342
    %v3972 = vunpack.c.l.b16 %v3343
    %v3973 = vunpack.c.h.b16 %v3343
    %v3974 = vunpack.c.l.b16 %v3344
    %v3975 = vunpack.c.h.b16 %v3344
    %v3976 = vunpack.c.l.b16 %v3345
    %v3977 = vunpack.c.h.b16 %v3345
    %v3978 = vunpack.c.l.b16 %v3346
    %v3979 = vunpack.c.h.b16 %v3346
    %v3980 = vunpack.c.l.b16 %v3347
    %v3981 = vunpack.c.h.b16 %v3347
    %v3982 = vunpack.c.l.b16 %v3348
    %v3983 = vunpack.c.h.b16 %v3348
    %v3984 = vunpack.c.l.b16 %v3349
    %v3985 = vunpack.c.h.b16 %v3349
    %v3986 = vunpack.c.l.b16 %v3350
    %v3987 = vunpack.c.h.b16 %v3350
    %v3988 = vunpack.c.l.b16 %v3351
    %v3989 = vunpack.c.h.b16 %v3351
    %v3990 = vunpack.c.l.b16 %v3352
    %v3991 = vunpack.c.h.b16 %v3352
    %v3992 = vunpack.c.l.b16 %v3353
    %v3993 = vunpack.c.h.b16 %v3353
    %v3994 = vunpack.c.l.b16 %v3354
    %v3995 = vunpack.c.h.b16 %v3354
    %v3996 = vunpack.c.l.b16 %v3355
    %v3997 = vunpack.c.h.b16 %v3355
    %v3998 = vunpack.c.l.b16 %v3356
    %v3999 = vunpack.c.h.b16 %v3356
    %v4000 = vunpack.c.l.b16 %v3357
    %v4001 = vunpack.c.h.b16 %v3357
    %v4002 = vunpack.c.l.b16 %v3358
    %v4003 = vunpack.c.h.b16 %v3358
    %v4004 = vunpack.c.l.b16 %v3359
    %v4005 = vunpack.c.h.b16 %v3359
    %v4006 = vunpack.c.l.b16 %v3360
    %v4007 = vunpack.c.h.b16 %v3360
    %v4008 = vunpack.c.l.b16 %v3361
    %v4009 = vunpack.c.h.b16 %v3361
    %v4010 = vunpack.c.l.b16 %v3362
    %v4011 = vunpack.c.h.b16 %v3362
    %v4012 = vunpack.c.l.b16 %v3363
    %v4013 = vunpack.c.h.b16 %v3363
    %v4014 = vunpack.c.l.b16 %v3364
    %v4015 = vunpack.c.h.b16 %v3364
    %v4016 = vunpack.c.l.b16 %v3365
    %v4017 = vunpack.c.h.b16 %v3365
    %v4018 = vunpack.c.l.b16 %v3366
    %v4019 = vunpack.c.h.b16 %v3366
    %v4020 = vunpack.c.l.b16 %v3367
    %v4021 = vunpack.c.h.b16 %v3367
    %v4022 = vunpack.c.l.b16 %v3368
    %v4023 = vunpack.c.h.b16 %v3368
    %v4024 = vunpack.c.l.b16 %v3369
    %v4025 = vunpack.c.h.b16 %v3369
    %v4026 = vunpack.c.l.b16 %v3370
    %v4027 = vunpack.c.h.b16 %v3370
    %v4028 = vunpack.c.l.b16 %v3371
    %v4029 = vunpack.c.h.b16 %v3371
    %v4030 = vunpack.c.l.b16 %v3372
    %v4031 = vunpack.c.h.b16 %v3372
    %v4032 = vunpack.c.l.b16 %v3373
    %v4033 = vunpack.c.h.b16 %v3373
    %v4034 = vunpack.c.l.b16 %v3374
    %v4035 = vunpack.c.h.b16 %v3374
    %v4036 = vunpack.c.l.b16 %v3375
    %v4037 = vunpack.c.h.b16 %v3375
    %v4038 = vunpack.c.l.b16 %v3376
    %v4039 = vunpack.c.h.b16 %v3376
    %v4040 = vunpack.c.l.b16 %v3377
    %v4041 = vunpack.c.h.b16 %v3377
    %v4042 = vunpack.c.l.b16 %v3378
    %v4043 = vunpack.c.h.b16 %v3378
    %v4044 = vunpack.c.l.b16 %v3379
    %v4045 = vunpack.c.h.b16 %v3379
    %v4046 = vunpack.c.l.b16 %v3380
    %v4047 = vunpack.c.h.b16 %v3380
    %v4048 = vunpack.c.l.b16 %v3381
    %v4049 = vunpack.c.h.b16 %v3381
    %v4050 = vunpack.c.l.b16 %v3382
    %v4051 = vunpack.c.h.b16 %v3382
    %v4052 = vunpack.c.l.b16 %v3383
    %v4053 = vunpack.c.h.b16 %v3383
    %v4054 = vunpack.c.l.b16 %v3384
    %v4055 = vunpack.c.h.b16 %v3384
    %v4056 = vunpack.c.l.b16 %v3385
    %v4057 = vunpack.c.h.b16 %v3385
    %v4058 = vunpack.c.l.b16 %v3386
    %v4059 = vunpack.c.h.b16 %v3386
    %v4060 = vunpack.c.l.b16 %v3387
    %v4061 = vunpack.c.h.b16 %v3387
    %v4062 = vunpack.c.l.b16 %v3388
    %v4063 = vunpack.c.h.b16 %v3388
    %v4064 = vunpack.c.l.b16 %v3389
    %v4065 = vunpack.c.h.b16 %v3389
    %v4066 = vunpack.c.l.b16 %v3390
    %v4067 = vunpack.c.h.b16 %v3390
    %v4068 = vunpack.c.l.b16 %v3391
    %v4069 = vunpack.c.h.b16 %v3391
    %v4070 = vunpack.c.l.b16 %v3392
    %v4071 = vunpack.c.h.b16 %v3392
    %v4072 = vunpack.c.l.b16 %v3393
    %v4073 = vunpack.c.h.b16 %v3393
    %v4074 = vunpack.c.l.b16 %v3394
    %v4075 = vunpack.c.h.b16 %v3394
    %v4076 = vunpack.c.l.b16 %v3395
    %v4077 = vunpack.c.h.b16 %v3395
    %v4078 = vunpack.c.l.b16 %v3396
    %v4079 = vunpack.c.h.b16 %v3396
    %v4080 = vunpack.c.l.b16 %v3397
    %v4081 = vunpack.c.h.b16 %v3397
    %v4082 = vunpack.c.l.b16 %v3398
    %v4083 = vunpack.c.h.b16 %v3398
    %v4084 = vunpack.c.l.b16 %v3399
    %v4085 = vunpack.c.h.b16 %v3399
    %v4086 = vunpack.c.l.b16 %v3400
    %v4087 = vunpack.c.h.b16 %v3400
    %v4088 = vunpack.c.l.b16 %v3401
    %v4089 = vunpack.c.h.b16 %v3401
    %v4090 = vunpack.c.l.b16 %v3402
    %v4091 = vunpack.c.h.b16 %v3402
    %v4092 = vunpack.c.l.b16 %v3403
    %v4093 = vunpack.c.h.b16 %v3403
    %v4094 = vunpack.c.l.b16 %v3404
    %v4095 = vunpack.c.h.b16 %v3404
    %v4096 = vunpack.c.l.b16 %v3405
    %v4097 = vunpack.c.h.b16 %v3405
    %v4098 = vunpack.c.l.b16 %v3406
    %v4099 = vunpack.c.h.b16 %v3406
    %v4100 = vunpack.c.l.b16 %v3407
    %v4101 = vunpack.c.h.b16 %v3407
    %v4102 = vunpack.c.l.b16 %v3408
    %v4103 = vunpack.c.h.b16 %v3408
    %v4104 = vunpack.c.l.b16 %v3409
    %v4105 = vunpack.c.h.b16 %v3409
    %v4106 = vunpack.c.l.b16 %v3410
    %v4107 = vunpack.c.h.b16 %v3410
    %v4108 = vunpack.c.l.b16 %v3411
    %v4109 = vunpack.c.h.b16 %v3411
    %v4110 = vunpack.c.l.b16 %v3412
    %v4111 = vunpack.c.h.b16 %v3412
    %v4112 = vunpack.c.l.b16 %v3413
    %v4113 = vunpack.c.h.b16 %v3413
    %v4114 = vunpack.c.l.b16 %v3414
    %v4115 = vunpack.c.h.b16 %v3414
    %v4116 = vunpack.c.l.b16 %v3415
    %v4117 = vunpack.c.h.b16 %v3415
    %v4118 = vunpack.c.l.b16 %v3416
    %v4119 = vunpack.c.h.b16 %v3416
    %v4120 = vunpack.c.l.b16 %v3417
    %v4121 = vunpack.c.h.b16 %v3417
    %v4122 = vunpack.c.l.b16 %v3418
    %v4123 = vunpack.c.h.b16 %v3418
    %v4124 = vunpack.c.l.b16 %v3419
    %v4125 = vunpack.c.h.b16 %v3419
    %v4126 = vunpack.c.l.b16 %v3420
    %v4127 = vunpack.c.h.b16 %v3420
    %v4128 = vunpack.c.l.b16 %v3421
    %v4129 = vunpack.c.h.b16 %v3421
    %v4130 = vunpack.c.l.b16 %v3422
    %v4131 = vunpack.c.h.b16 %v3422
    %v4132 = vunpack.c.l.b16 %v3423
    %v4133 = vunpack.c.h.b16 %v3423
    %v4134 = vunpack.c.l.b16 %v3424
    %v4135 = vunpack.c.h.b16 %v3424
    %v4136 = vunpack.c.l.b16 %v3425
    %v4137 = vunpack.c.h.b16 %v3425
    %v4138 = vunpack.c.l.b16 %v3426
    %v4139 = vunpack.c.h.b16 %v3426
    %v4140 = vunpack.c.l.b16 %v3427
    %v4141 = vunpack.c.h.b16 %v3427
    %v4142 = vunpack.c.l.b16 %v3428
    %v4143 = vunpack.c.h.b16 %v3428
    %v4144 = vunpack.c.l.b16 %v3429
    %v4145 = vunpack.c.h.b16 %v3429
    %v4146 = vunpack.c.l.b16 %v3430
    %v4147 = vunpack.c.h.b16 %v3430
    %v4148 = vunpack.c.l.b16 %v3431
    %v4149 = vunpack.c.h.b16 %v3431
    %v4150 = vunpack.c.l.b16 %v3432
    %v4151 = vunpack.c.h.b16 %v3432
    %v4152 = vunpack.c.l.b16 %v3433
    %v4153 = vunpack.c.h.b16 %v3433
    %v4154 = vunpack.c.l.b16 %v3434
    %v4155 = vunpack.c.h.b16 %v3434
    %v4156 = vunpack.c.l.b16 %v3435
    %v4157 = vunpack.c.h.b16 %v3435
    %v4158 = vunpack.c.l.b16 %v3436
    %v4159 = vunpack.c.h.b16 %v3436
    %v4160 = vunpack.c.l.b16 %v3437
    %v4161 = vunpack.c.h.b16 %v3437
    %v4162 = vunpack.c.l.b16 %v3438
    %v4163 = vunpack.c.h.b16 %v3438
    %v4164 = vunpack.c.l.b16 %v3439
    %v4165 = vunpack.c.h.b16 %v3439
    %v4166 = vunpack.c.l.b16 %v3440
    %v4167 = vunpack.c.h.b16 %v3440
    %v4168 = vunpack.c.l.b16 %v3441
    %v4169 = vunpack.c.h.b16 %v3441
    %v4170 = vunpack.c.l.b16 %v3442
    %v4171 = vunpack.c.h.b16 %v3442
    %v4172 = vunpack.c.l.b16 %v3443
    %v4173 = vunpack.c.h.b16 %v3443
    %v4174 = vunpack.c.l.b16 %v3444
    %v4175 = vunpack.c.h.b16 %v3444
    %v4176 = vunpack.c.l.b16 %v3445
    %v4177 = vunpack.c.h.b16 %v3445
    %v4178 = vunpack.c.l.b16 %v3446
    %v4179 = vunpack.c.h.b16 %v3446
    %v4180 = vunpack.c.l.b16 %v3447
    %v4181 = vunpack.c.h.b16 %v3447
    %v4182 = vunpack.c.l.b16 %v3448
    %v4183 = vunpack.c.h.b16 %v3448
    %v4184 = vunpack.c.l.b16 %v3449
    %v4185 = vunpack.c.h.b16 %v3449
    %v4186 = vunpack.c.l.b16 %v3450
    %v4187 = vunpack.c.h.b16 %v3450
    %v4188 = vunpack.c.l.b16 %v3451
    %v4189 = vunpack.c.h.b16 %v3451
    %v4190 = vunpack.c.l.b16 %v3452
    %v4191 = vunpack.c.h.b16 %v3452
    %v4192 = vunpack.c.l.b16 %v3453
    %v4193 = vunpack.c.h.b16 %v3453
    %v4194 = vunpack.c.l.b16 %v3454
    %v4195 = vunpack.c.h.b16 %v3454
    %v4196 = vunpack.c.l.b16 %v3455
    %v4197 = vunpack.c.h.b16 %v3455
    %v4198 = vunpack.c.l.b16 %v3456
    %v4199 = vunpack.c.h.b16 %v3456
    %v4200 = vunpack.c.l.b16 %v3457
    %v4201 = vunpack.c.h.b16 %v3457
    %v4202 = vunpack.c.l.b16 %v3458
    %v4203 = vunpack.c.h.b16 %v3458
    %v4204 = vunpack.c.l.b16 %v3459
    %v4205 = vunpack.c.h.b16 %v3459
    %v4206 = vunpack.c.l.b16 %v3460
    %v4207 = vunpack.c.h.b16 %v3460
    %v4208 = vunpack.c.l.b16 %v3461
    %v4209 = vunpack.c.h.b16 %v3461
    %v4210 = vunpack.c.l.b16 %v3462
    %v4211 = vunpack.c.h.b16 %v3462
    %v4212 = vunpack.c.l.b16 %v3463
    %v4213 = vunpack.c.h.b16 %v3463
    %v4214 = vunpack.c.l.b16 %v3464
    %v4215 = vunpack.c.h.b16 %v3464
    %v4216 = vunpack.c.l.b16 %v3465
    %v4217 = vunpack.c.h.b16 %v3465
    %v4218 = vunpack.c.l.b16 %v3466
    %v4219 = vunpack.c.h.b16 %v3466
    %v4220 = vunpack.c.l.b16 %v3467
    %v4221 = vunpack.c.h.b16 %v3467
    %v4222 = vunpack.c.l.b16 %v3468
    %v4223 = vunpack.c.h.b16 %v3468
    %v4224 = vunpack.c.l.b16 %v3469
    %v4225 = vunpack.c.h.b16 %v3469
    %v4226 = vunpack.c.l.b16 %v3470
    %v4227 = vunpack.c.h.b16 %v3470
    %v4228 = vunpack.c.l.b16 %v3471
    %v4229 = vunpack.c.h.b16 %v3471
    %v4230 = vunpack.c.l.b16 %v3472
    %v4231 = vunpack.c.h.b16 %v3472
    %v4232 = vunpack.c.l.b16 %v3473
    %v4233 = vunpack.c.h.b16 %v3473
    %v4234 = vunpack.c.l.b16 %v3474
    %v4235 = vunpack.c.h.b16 %v3474
    %v4236 = vunpack.c.l.b16 %v3475
    %v4237 = vunpack.c.h.b16 %v3475
    %v4238 = vunpack.c.l.b16 %v3476
    %v4239 = vunpack.c.h.b16 %v3476
    %v4240 = vunpack.c.l.b16 %v3477
    %v4241 = vunpack.c.h.b16 %v3477
    %v4242 = vunpack.c.l.b16 %v3478
    %v4243 = vunpack.c.h.b16 %v3478
    %v4244 = vunpack.c.l.b16 %v3479
    %v4245 = vunpack.c.h.b16 %v3479
    %v4246 = vunpack.c.l.b16 %v3480
    %v4247 = vunpack.c.h.b16 %v3480
    %v4248 = vunpack.c.l.b16 %v3481
    %v4249 = vunpack.c.h.b16 %v3481
    %v4250 = vunpack.c.l.b16 %v3482
    %v4251 = vunpack.c.h.b16 %v3482
    %v4252 = vunpack.c.l.b16 %v3483
    %v4253 = vunpack.c.h.b16 %v3483
    %v4254 = vunpack.c.l.b16 %v3484
    %v4255 = vunpack.c.h.b16 %v3484
    %v4256 = vunpack.c.l.b16 %v3485
    %v4257 = vunpack.c.h.b16 %v3485
    %v4258 = vunpack.c.l.b16 %v3486
    %v4259 = vunpack.c.h.b16 %v3486
    %v4260 = vunpack.c.l.b16 %v3487
    %v4261 = vunpack.c.h.b16 %v3487
    %v4262 = vunpack.c.l.b16 %v3488
    %v4263 = vunpack.c.h.b16 %v3488
    %v4264 = vunpack.c.l.b16 %v3489
    %v4265 = vunpack.c.h.b16 %v3489
    %v4266 = vunpack.c.l.b16 %v3490
    %v4267 = vunpack.c.h.b16 %v3490
    %v4268 = vunpack.c.l.b16 %v3491
    %v4269 = vunpack.c.h.b16 %v3491
    %v4270 = vunpack.c.l.b16 %v3492
    %v4271 = vunpack.c.h.b16 %v3492
    %v4272 = vunpack.c.l.b16 %v3493
    %v4273 = vunpack.c.h.b16 %v3493
    %v4274 = vunpack.c.l.b16 %v3494
    %v4275 = vunpack.c.h.b16 %v3494
    %v4276 = vunpack.c.l.b16 %v3495
    %v4277 = vunpack.c.h.b16 %v3495
    %v4278 = vunpack.c.l.b16 %v3496
    %v4279 = vunpack.c.h.b16 %v3496
    %v4280 = vunpack.c.l.b16 %v3497
    %v4281 = vunpack.c.h.b16 %v3497
    %v4282 = vunpack.c.l.b16 %v3498
    %v4283 = vunpack.c.h.b16 %v3498
    %v4284 = vunpack.c.l.b16 %v3499
    %v4285 = vunpack.c.h.b16 %v3499
    %v4286 = vunpack.c.l.b16 %v3500
    %v4287 = vunpack.c.h.b16 %v3500
    %v4288 = vunpack.c.l.b16 %v3501
    %v4289 = vunpack.c.h.b16 %v3501
    %v4290 = vunpack.c.l.b16 %v3502
    %v4291 = vunpack.c.h.b16 %v3502
    %v4292 = vunpack.c.l.b16 %v3503
    %v4293 = vunpack.c.h.b16 %v3503
    %v4294 = vpack.c.b16 %v3786, %v3782
    %v4295 = vpack.c.b16 %v3787, %v3783
    %v4296 = vpack.c.b16 %v3788, %v3784
    %v4297 = vpack.c.b16 %v3789, %v3785
    %v4298 = vpack.c.b16 %v3794, %v3790
    %v4299 = vpack.c.b16 %v3795, %v3791
    %v4300 = vpack.c.b16 %v3796, %v3792
    %v4301 = vpack.c.b16 %v3797, %v3793
    %v4302 = vpack.c.b16 %v3802, %v3798
    %v4303 = vpack.c.b16 %v3803, %v3799
    %v4304 = vpack.c.b16 %v3804, %v3800
    %v4305 = vpack.c.b16 %v3805, %v3801
    %v4306 = vpack.c.b16 %v3810, %v3806
    %v4307 = vpack.c.b16 %v3811, %v3807
    %v4308 = vpack.c.b16 %v3812, %v3808
    %v4309 = vpack.c.b16 %v3813, %v3809
    %v4310 = vpack.c.b16 %v3818, %v3814
    %v4311 = vpack.c.b16 %v3819, %v3815
    %v4312 = vpack.c.b16 %v3820, %v3816
    %v4313 = vpack.c.b16 %v3821, %v3817
    %v4314 = vpack.c.b16 %v3826, %v3822
    %v4315 = vpack.c.b16 %v3827, %v3823
    %v4316 = vpack.c.b16 %v3828, %v3824
    %v4317 = vpack.c.b16 %v3829, %v3825
    %v4318 = vpack.c.b16 %v3834, %v3830
    %v4319 = vpack.c.b16 %v3835, %v3831
    %v4320 = vpack.c.b16 %v3836, %v3832
    %v4321 = vpack.c.b16 %v3837, %v3833
    %v4322 = vpack.c.b16 %v3842, %v3838
    %v4323 = vpack.c.b16 %v3843, %v3839
    %v4324 = vpack.c.b16 %v3844, %v3840
    %v4325 = vpack.c.b16 %v3845, %v3841
    %v4326 = vpack.c.b16 %v3850, %v3846
    %v4327 = vpack.c.b16 %v3851, %v3847
    %v4328 = vpack.c.b16 %v3852, %v3848
    %v4329 = vpack.c.b16 %v3853, %v3849
    %v4330 = vpack.c.b16 %v3858, %v3854
    %v4331 = vpack.c.b16 %v3859, %v3855
    %v4332 = vpack.c.b16 %v3860, %v3856
    %v4333 = vpack.c.b16 %v3861, %v3857
    %v4334 = vpack.c.b16 %v3866, %v3862
    %v4335 = vpack.c.b16 %v3867, %v3863
    %v4336 = vpack.c.b16 %v3868, %v3864
    %v4337 = vpack.c.b16 %v3869, %v3865
    %v4338 = vpack.c.b16 %v3874, %v3870
    %v4339 = vpack.c.b16 %v3875, %v3871
    %v4340 = vpack.c.b16 %v3876, %v3872
    %v4341 = vpack.c.b16 %v3877, %v3873
    %v4342 = vpack.c.b16 %v3882, %v3878
    %v4343 = vpack.c.b16 %v3883, %v3879
    %v4344 = vpack.c.b16 %v3884, %v3880
    %v4345 = vpack.c.b16 %v3885, %v3881
    %v4346 = vpack.c.b16 %v3890, %v3886
    %v4347 = vpack.c.b16 %v3891, %v3887
    %v4348 = vpack.c.b16 %v3892, %v3888
    %v4349 = vpack.c.b16 %v3893, %v3889
    %v4350 = vpack.c.b16 %v3898, %v3894
    %v4351 = vpack.c.b16 %v3899, %v3895
    %v4352 = vpack.c.b16 %v3900, %v3896
    %v4353 = vpack.c.b16 %v3901, %v3897
    %v4354 = vpack.c.b16 %v3906, %v3902
    %v4355 = vpack.c.b16 %v3907, %v3903
    %v4356 = vpack.c.b16 %v3908, %v3904
    %v4357 = vpack.c.b16 %v3909, %v3905
    %v4358 = vpack.c.b16 %v3914, %v3910
    %v4359 = vpack.c.b16 %v3915, %v3911
    %v4360 = vpack.c.b16 %v3916, %v3912
    %v4361 = vpack.c.b16 %v3917, %v3913
    %v4362 = vpack.c.b16 %v3922, %v3918
    %v4363 = vpack.c.b16 %v3923, %v3919
    %v4364 = vpack.c.b16 %v3924, %v3920
    %v4365 = vpack.c.b16 %v3925, %v3921
    %v4366 = vpack.c.b16 %v3930, %v3926
    %v4367 = vpack.c.b16 %v3931, %v3927
    %v4368 = vpack.c.b16 %v3932, %v3928
    %v4369 = vpack.c.b16 %v3933, %v3929
    %v4370 = vpack.c.b16 %v3938, %v3934
    %v4371 = vpack.c.b16 %v3939, %v3935
    %v4372 = vpack.c.b16 %v3940, %v3936
    %v4373 = vpack.c.b16 %v3941, %v3937
    %v4374 = vpack.c.b16 %v3946, %v3942
    %v4375 = vpack.c.b16 %v3947, %v3943
    %v4376 = vpack.c.b16 %v3948, %v3944
    %v4377 = vpack.c.b16 %v3949, %v3945
    %v4378 = vpack.c.b16 %v3954, %v3950
    %v4379 = vpack.c.b16 %v3955, %v3951
    %v4380 = vpack.c.b16 %v3956, %v3952
    %v4381 = vpack.c.b16 %v3957, %v3953
    %v4382 = vpack.c.b16 %v3962, %v3958
    %v4383 = vpack.c.b16 %v3963, %v3959
    %v4384 = vpack.c.b16 %v3964, %v3960
    %v4385 = vpack.c.b16 %v3965, %v3961
    %v4386 = vpack.c.b16 %v3970, %v3966
    %v4387 = vpack.c.b16 %v3971, %v3967
    %v4388 = vpack.c.b16 %v3972, %v3968
    %v4389 = vpack.c.b16 %v3973, %v3969
    %v4390 = vpack.c.b16 %v3978, %v3974
    %v4391 = vpack.c.b16 %v3979, %v3975
    %v4392 = vpack.c.b16 %v3980, %v3976
    %v4393 = vpack.c.b16 %v3981, %v3977
    %v4394 = vpack.c.b16 %v3986, %v3982
    %v4395 = vpack.c.b16 %v3987, %v3983
    %v4396 = vpack.c.b16 %v3988, %v3984
    %v4397 = vpack.c.b16 %v3989, %v3985
    %v4398 = vpack.c.b16 %v3994, %v3990
    %v4399 = vpack.c.b16 %v3995, %v3991
    %v4400 = vpack.c.b16 %v3996, %v3992
    %v4401 = vpack.c.b16 %v3997, %v3993
    %v4402 = vpack.c.b16 %v4002, %v3998
    %v4403 = vpack.c.b16 %v4003, %v3999
    %v4404 = vpack.c.b16 %v4004, %v4000
    %v4405 = vpack.c.b16 %v4005, %v4001
    %v4406 = vpack.c.b16 %v4010, %v4006
    %v4407 = vpack.c.b16 %v4011, %v4007
    %v4408 = vpack.c.b16 %v4012, %v4008
    %v4409 = vpack.c.b16 %v4013, %v4009
    %v4410 = vpack.c.b16 %v4018, %v4014
    %v4411 = vpack.c.b16 %v4019, %v4015
    %v4412 = vpack.c.b16 %v4020, %v4016
    %v4413 = vpack.c.b16 %v4021, %v4017
    %v4414 = vpack.c.b16 %v4026, %v4022
    %v4415 = vpack.c.b16 %v4027, %v4023
    %v4416 = vpack.c.b16 %v4028, %v4024
    %v4417 = vpack.c.b16 %v4029, %v4025
    %v4418 = vpack.c.b16 %v4034, %v4030
    %v4419 = vpack.c.b16 %v4035, %v4031
    %v4420 = vpack.c.b16 %v4036, %v4032
    %v4421 = vpack.c.b16 %v4037, %v4033
    %v4422 = vpack.c.b16 %v4042, %v4038
    %v4423 = vpack.c.b16 %v4043, %v4039
    %v4424 = vpack.c.b16 %v4044, %v4040
    %v4425 = vpack.c.b16 %v4045, %v4041
    %v4426 = vpack.c.b16 %v4050, %v4046
    %v4427 = vpack.c.b16 %v4051, %v4047
    %v4428 = vpack.c.b16 %v4052, %v4048
    %v4429 = vpack.c.b16 %v4053, %v4049
    %v4430 = vpack.c.b16 %v4058, %v4054
    %v4431 = vpack.c.b16 %v4059, %v4055
    %v4432 = vpack.c.b16 %v4060, %v4056
    %v4433 = vpack.c.b16 %v4061, %v4057
    %v4434 = vpack.c.b16 %v4066, %v4062
    %v4435 = vpack.c.b16 %v4067, %v4063
    %v4436 = vpack.c.b16 %v4068, %v4064
    %v4437 = vpack.c.b16 %v4069, %v4065
    %v4438 = vpack.c.b16 %v4074, %v4070
    %v4439 = vpack.c.b16 %v4075, %v4071
    %v4440 = vpack.c.b16 %v4076, %v4072
    %v4441 = vpack.c.b16 %v4077, %v4073
    %v4442 = vpack.c.b16 %v4082, %v4078
    %v4443 = vpack.c.b16 %v4083, %v4079
    %v4444 = vpack.c.b16 %v4084, %v4080
    %v4445 = vpack.c.b16 %v4085, %v4081
    %v4446 = vpack.c.b16 %v4090, %v4086
    %v4447 = vpack.c.b16 %v4091, %v4087
    %v4448 = vpack.c.b16 %v4092, %v4088
    %v4449 = vpack.c.b16 %v4093, %v4089
    %v4450 = vpack.c.b16 %v4098, %v4094
    %v4451 = vpack.c.b16 %v4099, %v4095
    %v4452 = vpack.c.b16 %v4100, %v4096
    %v4453 = vpack.c.b16 %v4101, %v4097
    %v4454 = vpack.c.b16 %v4106, %v4102
    %v4455 = vpack.c.b16 %v4107, %v4103
    %v4456 = vpack.c.b16 %v4108, %v4104
    %v4457 = vpack.c.b16 %v4109, %v4105
    %v4458 = vpack.c.b16 %v4114, %v4110
    %v4459 = vpack.c.b16 %v4115, %v4111
    %v4460 = vpack.c.b16 %v4116, %v4112
    %v4461 = vpack.c.b16 %v4117, %v4113
    %v4462 = vpack.c.b16 %v4122, %v4118
    %v4463 = vpack.c.b16 %v4123, %v4119
    %v4464 = vpack.c.b16 %v4124, %v4120
    %v4465 = vpack.c.b16 %v4125, %v4121
    %v4466 = vpack.c.b16 %v4130, %v4126
    %v4467 = vpack.c.b16 %v4131, %v4127
    %v4468 = vpack.c.b16 %v4132, %v4128
    %v4469 = vpack.c.b16 %v4133, %v4129
    %v4470 = vpack.c.b16 %v4138, %v4134
    %v4471 = vpack.c.b16 %v4139, %v4135
    %v4472 = vpack.c.b16 %v4140, %v4136
    %v4473 = vpack.c.b16 %v4141, %v4137
    %v4474 = vpack.c.b16 %v4146, %v4142
    %v4475 = vpack.c.b16 %v4147, %v4143
    %v4476 = vpack.c.b16 %v4148, %v4144
    %v4477 = vpack.c.b16 %v4149, %v4145
    %v4478 = vpack.c.b16 %v4154, %v4150
    %v4479 = vpack.c.b16 %v4155, %v4151
    %v4480 = vpack.c.b16 %v4156, %v4152
    %v4481 = vpack.c.b16 %v4157, %v4153
    %v4482 = vpack.c.b16 %v4162, %v4158
    %v4483 = vpack.c.b16 %v4163, %v4159
    %v4484 = vpack.c.b16 %v4164, %v4160
    %v4485 = vpack.c.b16 %v4165, %v4161
    %v4486 = vpack.c.b16 %v4170, %v4166
    %v4487 = vpack.c.b16 %v4171, %v4167
    %v4488 = vpack.c.b16 %v4172, %v4168
    %v4489 = vpack.c.b16 %v4173, %v4169
    %v4490 = vpack.c.b16 %v4178, %v4174
    %v4491 = vpack.c.b16 %v4179, %v4175
    %v4492 = vpack.c.b16 %v4180, %v4176
    %v4493 = vpack.c.b16 %v4181, %v4177
    %v4494 = vpack.c.b16 %v4186, %v4182
    %v4495 = vpack.c.b16 %v4187, %v4183
    %v4496 = vpack.c.b16 %v4188, %v4184
    %v4497 = vpack.c.b16 %v4189, %v4185
    %v4498 = vpack.c.b16 %v4194, %v4190
    %v4499 = vpack.c.b16 %v4195, %v4191
    %v4500 = vpack.c.b16 %v4196, %v4192
    %v4501 = vpack.c.b16 %v4197, %v4193
    %v4502 = vpack.c.b16 %v4202, %v4198
    %v4503 = vpack.c.b16 %v4203, %v4199
    %v4504 = vpack.c.b16 %v4204, %v4200
    %v4505 = vpack.c.b16 %v4205, %v4201
    %v4506 = vpack.c.b16 %v4210, %v4206
    %v4507 = vpack.c.b16 %v4211, %v4207
    %v4508 = vpack.c.b16 %v4212, %v4208
    %v4509 = vpack.c.b16 %v4213, %v4209
    %v4510 = vpack.c.b16 %v4218, %v4214
    %v4511 = vpack.c.b16 %v4219, %v4215
    %v4512 = vpack.c.b16 %v4220, %v4216
    %v4513 = vpack.c.b16 %v4221, %v4217
    %v4514 = vpack.c.b16 %v4226, %v4222
    %v4515 = vpack.c.b16 %v4227, %v4223
    %v4516 = vpack.c.b16 %v4228, %v4224
    %v4517 = vpack.c.b16 %v4229, %v4225
    %v4518 = vpack.c.b16 %v4234, %v4230
    %v4519 = vpack.c.b16 %v4235, %v4231
    %v4520 = vpack.c.b16 %v4236, %v4232
    %v4521 = vpack.c.b16 %v4237, %v4233
    %v4522 = vpack.c.b16 %v4242, %v4238
    %v4523 = vpack.c.b16 %v4243, %v4239
    %v4524 = vpack.c.b16 %v4244, %v4240
    %v4525 = vpack.c.b16 %v4245, %v4241
    %v4526 = vpack.c.b16 %v4250, %v4246
    %v4527 = vpack.c.b16 %v4251, %v4247
    %v4528 = vpack.c.b16 %v4252, %v4248
    %v4529 = vpack.c.b16 %v4253, %v4249
    %v4530 = vpack.c.b16 %v4258, %v4254
    %v4531 = vpack.c.b16 %v4259, %v4255
    %v4532 = vpack.c.b16 %v4260, %v4256
    %v4533 = vpack.c.b16 %v4261, %v4257
    %v4534 = vpack.c.b16 %v4266, %v4262
    %v4535 = vpack.c.b16 %v4267, %v4263
    %v4536 = vpack.c.b16 %v4268, %v4264
    %v4537 = vpack.c.b16 %v4269, %v4265
    %v4538 = vpack.c.b16 %v4274, %v4270
    %v4539 = vpack.c.b16 %v4275, %v4271
    %v4540 = vpack.c.b16 %v4276, %v4272
    %v4541 = vpack.c.b16 %v4277, %v4273
    %v4542 = vpack.c.b16 %v4282, %v4278
    %v4543 = vpack.c.b16 %v4283, %v4279
    %v4544 = vpack.c.b16 %v4284, %v4280
    %v4545 = vpack.c.b16 %v4285, %v4281
    %v4546 = vpack.c.b16 %v4290, %v4286
    %v4547 = vpack.c.b16 %v4291, %v4287
    %v4548 = vpack.c.b16 %v4292, %v4288
    %v4549 = vpack.c.b16 %v4293, %v4289
    %4806 = vmatprep.subr.bf16.mxu0 %v4295
    %4807 = vmatpush1.bf16.msra.mxu0 %v4294
    %4808 = vmatprep.subr.bf16.mxu0 %v4299
    %4809 = vmatpush1.bf16.msra.mxu0 %v4298
    %4810 = vmatprep.subr.bf16.mxu0 %v4303
    %4811 = vmatpush1.bf16.msra.mxu0 %v4302
    %4812 = vmatprep.subr.bf16.mxu0 %v4307
    %4813 = vmatpush1.bf16.msra.mxu0 %v4306
    %4814 = vmatprep.subr.bf16.mxu0 %v4311
    %4815 = vmatpush1.bf16.msra.mxu0 %v4310
    %4816 = vmatprep.subr.bf16.mxu0 %v4315
    %4817 = vmatpush1.bf16.msra.mxu0 %v4314
    %4818 = vmatprep.subr.bf16.mxu0 %v4319
    %4819 = vmatpush1.bf16.msra.mxu0 %v4318
    %4820 = vmatprep.subr.bf16.mxu0 %v4323
    %4821 = vmatpush1.bf16.msra.mxu0 %v4322
    %4822 = vmatprep.subr.bf16.mxu0 %v4327
    %4823 = vmatpush1.bf16.msra.mxu0 %v4326
    %4824 = vmatprep.subr.bf16.mxu0 %v4331
    %4825 = vmatpush1.bf16.msra.mxu0 %v4330
    %4826 = vmatprep.subr.bf16.mxu0 %v4335
    %4827 = vmatpush1.bf16.msra.mxu0 %v4334
    %4828 = vmatprep.subr.bf16.mxu0 %v4339
    %4829 = vmatpush1.bf16.msra.mxu0 %v4338
    %4830 = vmatprep.subr.bf16.mxu0 %v4343
    %4831 = vmatpush1.bf16.msra.mxu0 %v4342
    %4832 = vmatprep.subr.bf16.mxu0 %v4347
    %4833 = vmatpush1.bf16.msra.mxu0 %v4346
    %4834 = vmatprep.subr.bf16.mxu0 %v4351
    %4835 = vmatpush1.bf16.msra.mxu0 %v4350
    %4836 = vmatprep.subr.bf16.mxu0 %v4355
    %4837 = vmatpush1.bf16.msra.mxu0 %v4354
    %4838 = vmatprep.mubr.bf16.mxu0 %v3241
    %4839 = vmatmul.mubr.bf16.gmra.mrb[0].mxu0 %v3240
    %v4840 = vpop.f32.mrb[0].mxu0
    %v4841 = vadd.f32 %v3509, %v4840
    %v4842 = vpop.f32.mrb[0].mxu0
    %v4843 = vadd.f32 %v3513, %v4842
    %v4844 = vpop.f32.mrb[0].mxu0
    %v4845 = vpop.f32.mrb[0].mxu0
    %4846 = vdwg.mxu0
    %4847 = vmatprep.subr.bf16.mxu0 %v4359
    %4848 = vmatpush1.bf16.msra.mxu0 %v4358
    %4849 = vmatprep.subr.bf16.mxu0 %v4363
    %4850 = vmatpush1.bf16.msra.mxu0 %v4362
    %4851 = vmatprep.subr.bf16.mxu0 %v4367
    %4852 = vmatpush1.bf16.msra.mxu0 %v4366
    %4853 = vmatprep.subr.bf16.mxu0 %v4371
    %4854 = vmatpush1.bf16.msra.mxu0 %v4370
    %4855 = vmatprep.subr.bf16.mxu0 %v4375
    %4856 = vmatpush1.bf16.msra.mxu0 %v4374
    %4857 = vmatprep.subr.bf16.mxu0 %v4379
    %4858 = vmatpush1.bf16.msra.mxu0 %v4378
    %4859 = vmatprep.subr.bf16.mxu0 %v4383
    %4860 = vmatpush1.bf16.msra.mxu0 %v4382
    %4861 = vmatprep.subr.bf16.mxu0 %v4387
    %4862 = vmatpush1.bf16.msra.mxu0 %v4386
    %4863 = vmatprep.subr.bf16.mxu0 %v4391
    %4864 = vmatpush1.bf16.msra.mxu0 %v4390
    %4865 = vmatprep.subr.bf16.mxu0 %v4395
    %4866 = vmatpush1.bf16.msra.mxu0 %v4394
    %4867 = vmatprep.subr.bf16.mxu0 %v4399
    %4868 = vmatpush1.bf16.msra.mxu0 %v4398
    %4869 = vmatprep.subr.bf16.mxu0 %v4403
    %4870 = vmatpush1.bf16.msra.mxu0 %v4402
    %4871 = vmatprep.subr.bf16.mxu0 %v4407
    %4872 = vmatpush1.bf16.msra.mxu0 %v4406
    %4873 = vmatprep.subr.bf16.mxu0 %v4411
    %4874 = vmatpush1.bf16.msra.mxu0 %v4410
    %4875 = vmatprep.subr.bf16.mxu0 %v4415
    %4876 = vmatpush1.bf16.msra.mxu0 %v4414
    %4877 = vmatprep.subr.bf16.mxu0 %v4419
    %4878 = vmatpush1.bf16.msra.mxu0 %v4418
    %4879 = vmatprep.mubr.bf16.mxu0 %v3243
    %4880 = vmatmul.mubr.bf16.gmra.mrb[0].mxu0 %v3242
    %v4881 = vpop.f32.mrb[0].mxu0
    %v4882 = vadd.f32 %v4841, %v4881
    %v4883 = vpop.f32.mrb[0].mxu0
    %v4884 = vadd.f32 %v4843, %v4883
    %v4885 = vpop.f32.mrb[0].mxu0
    %v4886 = vpop.f32.mrb[0].mxu0
    %4887 = vdwg.mxu0
    %4888 = vmatprep.subr.bf16.mxu0 %v4423
    %4889 = vmatpush1.bf16.msra.mxu0 %v4422
    %4890 = vmatprep.subr.bf16.mxu0 %v4427
    %4891 = vmatpush1.bf16.msra.mxu0 %v4426
    %4892 = vmatprep.subr.bf16.mxu0 %v4431
    %4893 = vmatpush1.bf16.msra.mxu0 %v4430
    %4894 = vmatprep.subr.bf16.mxu0 %v4435
    %4895 = vmatpush1.bf16.msra.mxu0 %v4434
    %4896 = vmatprep.subr.bf16.mxu0 %v4439
    %4897 = vmatpush1.bf16.msra.mxu0 %v4438
    %4898 = vmatprep.subr.bf16.mxu0 %v4443
    %4899 = vmatpush1.bf16.msra.mxu0 %v4442
    %4900 = vmatprep.subr.bf16.mxu0 %v4447
    %4901 = vmatpush1.bf16.msra.mxu0 %v4446
    %4902 = vmatprep.subr.bf16.mxu0 %v4451
    %4903 = vmatpush1.bf16.msra.mxu0 %v4450
    %4904 = vmatprep.subr.bf16.mxu0 %v4455
    %4905 = vmatpush1.bf16.msra.mxu0 %v4454
    %4906 = vmatprep.subr.bf16.mxu0 %v4459
    %4907 = vmatpush1.bf16.msra.mxu0 %v4458
    %4908 = vmatprep.subr.bf16.mxu0 %v4463
    %4909 = vmatpush1.bf16.msra.mxu0 %v4462
    %4910 = vmatprep.subr.bf16.mxu0 %v4467
    %4911 = vmatpush1.bf16.msra.mxu0 %v4466
    %4912 = vmatprep.subr.bf16.mxu0 %v4471
    %4913 = vmatpush1.bf16.msra.mxu0 %v4470
    %4914 = vmatprep.subr.bf16.mxu0 %v4475
    %4915 = vmatpush1.bf16.msra.mxu0 %v4474
    %4916 = vmatprep.subr.bf16.mxu0 %v4479
    %4917 = vmatpush1.bf16.msra.mxu0 %v4478
    %4918 = vmatprep.subr.bf16.mxu0 %v4483
    %4919 = vmatpush1.bf16.msra.mxu0 %v4482
    %4920 = vmatprep.mubr.bf16.mxu0 %v3245
    %4921 = vmatmul.mubr.bf16.gmra.mrb[0].mxu0 %v3244
    %v4922 = vpop.f32.mrb[0].mxu0
    %v4923 = vadd.f32 %v4882, %v4922
    %v4924 = vpop.f32.mrb[0].mxu0
    %v4925 = vadd.f32 %v4884, %v4924
    %v4926 = vpop.f32.mrb[0].mxu0
    %v4927 = vpop.f32.mrb[0].mxu0
    %4928 = vdwg.mxu0
    %4929 = vmatprep.subr.bf16.mxu0 %v4487
    %4930 = vmatpush1.bf16.msra.mxu0 %v4486
    %4931 = vmatprep.subr.bf16.mxu0 %v4491
    %4932 = vmatpush1.bf16.msra.mxu0 %v4490
    %4933 = vmatprep.subr.bf16.mxu0 %v4495
    %4934 = vmatpush1.bf16.msra.mxu0 %v4494
    %4935 = vmatprep.subr.bf16.mxu0 %v4499
    %4936 = vmatpush1.bf16.msra.mxu0 %v4498
    %4937 = vmatprep.subr.bf16.mxu0 %v4503
    %4938 = vmatpush1.bf16.msra.mxu0 %v4502
    %4939 = vmatprep.subr.bf16.mxu0 %v4507
    %4940 = vmatpush1.bf16.msra.mxu0 %v4506
    %4941 = vmatprep.subr.bf16.mxu0 %v4511
    %4942 = vmatpush1.bf16.msra.mxu0 %v4510
    %4943 = vmatprep.subr.bf16.mxu0 %v4515
    %4944 = vmatpush1.bf16.msra.mxu0 %v4514
    %4945 = vmatprep.subr.bf16.mxu0 %v4519
    %4946 = vmatpush1.bf16.msra.mxu0 %v4518
    %4947 = vmatprep.subr.bf16.mxu0 %v4523
    %4948 = vmatpush1.bf16.msra.mxu0 %v4522
    %4949 = vmatprep.subr.bf16.mxu0 %v4527
    %4950 = vmatpush1.bf16.msra.mxu0 %v4526
    %4951 = vmatprep.subr.bf16.mxu0 %v4531
    %4952 = vmatpush1.bf16.msra.mxu0 %v4530
    %4953 = vmatprep.subr.bf16.mxu0 %v4535
    %4954 = vmatpush1.bf16.msra.mxu0 %v4534
    %4955 = vmatprep.subr.bf16.mxu0 %v4539
    %4956 = vmatpush1.bf16.msra.mxu0 %v4538
    %4957 = vmatprep.subr.bf16.mxu0 %v4543
    %4958 = vmatpush1.bf16.msra.mxu0 %v4542
    %4959 = vmatprep.subr.bf16.mxu0 %v4547
    %4960 = vmatpush1.bf16.msra.mxu0 %v4546
    %4961 = vmatprep.mubr.bf16.mxu0 %v3247
    %4962 = vmatmul.mubr.bf16.gmra.mrb[0].mxu0 %v3246
    %v4963 = vpop.f32.mrb[0].mxu0
    %v4964 = vadd.f32 %v4923, %v4963
    %v4965 = vpop.f32.mrb[0].mxu0
    %v4966 = vadd.f32 %v4925, %v4965
    %v4967 = vpop.f32.mrb[0].mxu0
    %v4968 = vpop.f32.mrb[0].mxu0
    %4969 = vdwg.mxu0
    %4970 = vmatprep.subr.bf16.mxu0 %v4297
    %4971 = vmatpush1.bf16.msra.mxu0 %v4296
    %4972 = vmatprep.subr.bf16.mxu0 %v4301
    %4973 = vmatpush1.bf16.msra.mxu0 %v4300
    %4974 = vmatprep.subr.bf16.mxu0 %v4305
    %4975 = vmatpush1.bf16.msra.mxu0 %v4304
    %4976 = vmatprep.subr.bf16.mxu0 %v4309
    %4977 = vmatpush1.bf16.msra.mxu0 %v4308
    %4978 = vmatprep.subr.bf16.mxu0 %v4313
    %4979 = vmatpush1.bf16.msra.mxu0 %v4312
    %4980 = vmatprep.subr.bf16.mxu0 %v4317
    %4981 = vmatpush1.bf16.msra.mxu0 %v4316
    %4982 = vmatprep.subr.bf16.mxu0 %v4321
    %4983 = vmatpush1.bf16.msra.mxu0 %v4320
    %4984 = vmatprep.subr.bf16.mxu0 %v4325
    %4985 = vmatpush1.bf16.msra.mxu0 %v4324
    %4986 = vmatprep.subr.bf16.mxu0 %v4329
    %4987 = vmatpush1.bf16.msra.mxu0 %v4328
    %4988 = vmatprep.subr.bf16.mxu0 %v4333
    %4989 = vmatpush1.bf16.msra.mxu0 %v4332
    %4990 = vmatprep.subr.bf16.mxu0 %v4337
    %4991 = vmatpush1.bf16.msra.mxu0 %v4336
    %4992 = vmatprep.subr.bf16.mxu0 %v4341
    %4993 = vmatpush1.bf16.msra.mxu0 %v4340
    %4994 = vmatprep.subr.bf16.mxu0 %v4345
    %4995 = vmatpush1.bf16.msra.mxu0 %v4344
    %4996 = vmatprep.subr.bf16.mxu0 %v4349
    %4997 = vmatpush1.bf16.msra.mxu0 %v4348
    %4998 = vmatprep.subr.bf16.mxu0 %v4353
    %4999 = vmatpush1.bf16.msra.mxu0 %v4352
    %5000 = vmatprep.subr.bf16.mxu0 %v4357
    %5001 = vmatpush1.bf16.msra.mxu0 %v4356
    %5002 = vmatprep.mubr.bf16.mxu0 %v3241
    %5003 = vmatmul.mubr.bf16.gmra.mrb[0].mxu0 %v3240
    %v5004 = vpop.f32.mrb[0].mxu0
    %v5005 = vadd.f32 %v3517, %v5004
    %v5006 = vpop.f32.mrb[0].mxu0
    %v5007 = vadd.f32 %v3521, %v5006
    %v5008 = vpop.f32.mrb[0].mxu0
    %v5009 = vpop.f32.mrb[0].mxu0
    %5010 = vdwg.mxu0
    %5011 = vmatprep.subr.bf16.mxu0 %v4361
    %5012 = vmatpush1.bf16.msra.mxu0 %v4360
    %5013 = vmatprep.subr.bf16.mxu0 %v4365
    %5014 = vmatpush1.bf16.msra.mxu0 %v4364
    %5015 = vmatprep.subr.bf16.mxu0 %v4369
    %5016 = vmatpush1.bf16.msra.mxu0 %v4368
    %5017 = vmatprep.subr.bf16.mxu0 %v4373
    %5018 = vmatpush1.bf16.msra.mxu0 %v4372
    %5019 = vmatprep.subr.bf16.mxu0 %v4377
    %5020 = vmatpush1.bf16.msra.mxu0 %v4376
    %5021 = vmatprep.subr.bf16.mxu0 %v4381
    %5022 = vmatpush1.bf16.msra.mxu0 %v4380
    %5023 = vmatprep.subr.bf16.mxu0 %v4385
    %5024 = vmatpush1.bf16.msra.mxu0 %v4384
    %5025 = vmatprep.subr.bf16.mxu0 %v4389
    %5026 = vmatpush1.bf16.msra.mxu0 %v4388
    %5027 = vmatprep.subr.bf16.mxu0 %v4393
    %5028 = vmatpush1.bf16.msra.mxu0 %v4392
    %5029 = vmatprep.subr.bf16.mxu0 %v4397
    %5030 = vmatpush1.bf16.msra.mxu0 %v4396
    %5031 = vmatprep.subr.bf16.mxu0 %v4401
    %5032 = vmatpush1.bf16.msra.mxu0 %v4400
    %5033 = vmatprep.subr.bf16.mxu0 %v4405
    %5034 = vmatpush1.bf16.msra.mxu0 %v4404
    %5035 = vmatprep.subr.bf16.mxu0 %v4409
    %5036 = vmatpush1.bf16.msra.mxu0 %v4408
    %5037 = vmatprep.subr.bf16.mxu0 %v4413
    %5038 = vmatpush1.bf16.msra.mxu0 %v4412
    %5039 = vmatprep.subr.bf16.mxu0 %v4417
    %5040 = vmatpush1.bf16.msra.mxu0 %v4416
    %5041 = vmatprep.subr.bf16.mxu0 %v4421
    %5042 = vmatpush1.bf16.msra.mxu0 %v4420
    %5043 = vmatprep.mubr.bf16.mxu0 %v3243
    %5044 = vmatmul.mubr.bf16.gmra.mrb[0].mxu0 %v3242
    %v5045 = vpop.f32.mrb[0].mxu0
    %v5046 = vadd.f32 %v5005, %v5045
    %v5047 = vpop.f32.mrb[0].mxu0
    %v5048 = vadd.f32 %v5007, %v5047
    %v5049 = vpop.f32.mrb[0].mxu0
    %v5050 = vpop.f32.mrb[0].mxu0
    %5051 = vdwg.mxu0
    %5052 = vmatprep.subr.bf16.mxu0 %v4425
    %5053 = vmatpush1.bf16.msra.mxu0 %v4424
    %5054 = vmatprep.subr.bf16.mxu0 %v4429
    %5055 = vmatpush1.bf16.msra.mxu0 %v4428
    %5056 = vmatprep.subr.bf16.mxu0 %v4433
    %5057 = vmatpush1.bf16.msra.mxu0 %v4432
    %5058 = vmatprep.subr.bf16.mxu0 %v4437
    %5059 = vmatpush1.bf16.msra.mxu0 %v4436
    %5060 = vmatprep.subr.bf16.mxu0 %v4441
    %5061 = vmatpush1.bf16.msra.mxu0 %v4440
    %5062 = vmatprep.subr.bf16.mxu0 %v4445
    %5063 = vmatpush1.bf16.msra.mxu0 %v4444
    %5064 = vmatprep.subr.bf16.mxu0 %v4449
    %5065 = vmatpush1.bf16.msra.mxu0 %v4448
    %5066 = vmatprep.subr.bf16.mxu0 %v4453
    %5067 = vmatpush1.bf16.msra.mxu0 %v4452
    %5068 = vmatprep.subr.bf16.mxu0 %v4457
    %5069 = vmatpush1.bf16.msra.mxu0 %v4456
    %5070 = vmatprep.subr.bf16.mxu0 %v4461
    %5071 = vmatpush1.bf16.msra.mxu0 %v4460
    %5072 = vmatprep.subr.bf16.mxu0 %v4465
    %5073 = vmatpush1.bf16.msra.mxu0 %v4464
    %5074 = vmatprep.subr.bf16.mxu0 %v4469
    %5075 = vmatpush1.bf16.msra.mxu0 %v4468
    %5076 = vmatprep.subr.bf16.mxu0 %v4473
    %5077 = vmatpush1.bf16.msra.mxu0 %v4472
    %5078 = vmatprep.subr.bf16.mxu0 %v4477
    %5079 = vmatpush1.bf16.msra.mxu0 %v4476
    %5080 = vmatprep.subr.bf16.mxu0 %v4481
    %5081 = vmatpush1.bf16.msra.mxu0 %v4480
    %5082 = vmatprep.subr.bf16.mxu0 %v4485
    %5083 = vmatpush1.bf16.msra.mxu0 %v4484
    %5084 = vmatprep.mubr.bf16.mxu0 %v3245
    %5085 = vmatmul.mubr.bf16.gmra.mrb[0].mxu0 %v3244
    %v5086 = vpop.f32.mrb[0].mxu0
    %v5087 = vadd.f32 %v5046, %v5086
    %v5088 = vpop.f32.mrb[0].mxu0
    %v5089 = vadd.f32 %v5048, %v5088
    %v5090 = vpop.f32.mrb[0].mxu0
    %v5091 = vpop.f32.mrb[0].mxu0
    %5092 = vdwg.mxu0
    %5093 = vmatprep.subr.bf16.mxu0 %v4489
    %5094 = vmatpush1.bf16.msra.mxu0 %v4488
    %5095 = vmatprep.subr.bf16.mxu0 %v4493
    %5096 = vmatpush1.bf16.msra.mxu0 %v4492
    %5097 = vmatprep.subr.bf16.mxu0 %v4497
    %5098 = vmatpush1.bf16.msra.mxu0 %v4496
    %5099 = vmatprep.subr.bf16.mxu0 %v4501
    %5100 = vmatpush1.bf16.msra.mxu0 %v4500
    %5101 = vmatprep.subr.bf16.mxu0 %v4505
    %5102 = vmatpush1.bf16.msra.mxu0 %v4504
    %5103 = vmatprep.subr.bf16.mxu0 %v4509
    %5104 = vmatpush1.bf16.msra.mxu0 %v4508
    %5105 = vmatprep.subr.bf16.mxu0 %v4513
    %5106 = vmatpush1.bf16.msra.mxu0 %v4512
    %5107 = vmatprep.subr.bf16.mxu0 %v4517
    %5108 = vmatpush1.bf16.msra.mxu0 %v4516
    %5109 = vmatprep.subr.bf16.mxu0 %v4521
    %5110 = vmatpush1.bf16.msra.mxu0 %v4520
    %5111 = vmatprep.subr.bf16.mxu0 %v4525
    %5112 = vmatpush1.bf16.msra.mxu0 %v4524
    %5113 = vmatprep.subr.bf16.mxu0 %v4529
    %5114 = vmatpush1.bf16.msra.mxu0 %v4528
    %5115 = vmatprep.subr.bf16.mxu0 %v4533
    %5116 = vmatpush1.bf16.msra.mxu0 %v4532
    %5117 = vmatprep.subr.bf16.mxu0 %v4537
    %5118 = vmatpush1.bf16.msra.mxu0 %v4536
    %5119 = vmatprep.subr.bf16.mxu0 %v4541
    %5120 = vmatpush1.bf16.msra.mxu0 %v4540
    %5121 = vmatprep.subr.bf16.mxu0 %v4545
    %5122 = vmatpush1.bf16.msra.mxu0 %v4544
    %5123 = vmatprep.subr.bf16.mxu0 %v4549
    %5124 = vmatpush1.bf16.msra.mxu0 %v4548
    %5125 = vmatprep.mubr.bf16.mxu0 %v3247
    %5126 = vmatmul.mubr.bf16.gmra.mrb[0].mxu0 %v3246
    %v5127 = vpop.f32.mrb[0].mxu0
    %v5128 = vadd.f32 %v5087, %v5127
    %v5129 = vpop.f32.mrb[0].mxu0
    %v5130 = vadd.f32 %v5089, %v5129
    %v5131 = vpop.f32.mrb[0].mxu0
    %v5132 = vpop.f32.mrb[0].mxu0
    %5133 = vdwg.mxu0
    %vm5134 = vcmp.ge.f32.partialorder %v4964, 0.0
    %vm5135 = vcmp.ge.f32.partialorder %v4966, 0.0
    %vm5136 = vcmp.ge.f32.partialorder %v5128, 0.0
    %vm5137 = vcmp.ge.f32.partialorder %v5130, 0.0
    %v5138 = vmul.f32 %v4964, 0.01
    %v5139 = vmul.f32 %v4966, 0.01
    %v5140 = vmul.f32 %v5128, 0.01
    %v5141 = vmul.f32 %v5130, 0.01
    %v5142 = vsel %vm5134, %v4964, %v5138
    %v5143 = vsel %vm5135, %v4966, %v5139
    %v5144 = vsel %vm5136, %v5128, %v5140
    %v5145 = vsel %vm5137, %v5130, %v5141
    %v5146 = vpack.c.bf16 %v5142, %v5142
    %v5147 = vpack.c.bf16 %v5143, %v5143
    %v5148 = vpack.c.bf16 %v5144, %v5144
    %v5149 = vpack.c.bf16 %v5145, %v5145
    %v5150 = vld [vmem:[#allocation9] sm:$0xff]
    %v5151 = vld [vmem:[#allocation9 + $0x8] sm:$0xff]
    %v5152 = vld [vmem:[#allocation9 + $0x10] sm:$0xff]
    %v5153 = vld [vmem:[#allocation9 + $0x18] sm:$0xff]
    %v5154 = vld [vmem:[#allocation9 + $0x20] sm:$0xff]
    %v5155 = vld [vmem:[#allocation9 + $0x28] sm:$0xff]
    %v5156 = vld [vmem:[#allocation9 + $0x30] sm:$0xff]
    %v5157 = vld [vmem:[#allocation9 + $0x38] sm:$0xff]
    %v5158 = vld [vmem:[#allocation9 + $0x40] sm:$0xff]
    %v5159 = vld [vmem:[#allocation9 + $0x48] sm:$0xff]
    %v5160 = vld [vmem:[#allocation9 + $0x50] sm:$0xff]
    %v5161 = vld [vmem:[#allocation9 + $0x58] sm:$0xff]
    %v5162 = vld [vmem:[#allocation9 + $0x60] sm:$0xff]
    %v5163 = vld [vmem:[#allocation9 + $0x68] sm:$0xff]
    %v5164 = vld [vmem:[#allocation9 + $0x70] sm:$0xff]
    %v5165 = vld [vmem:[#allocation9 + $0x78] sm:$0xff]
    %v5166 = vld [vmem:[#allocation9 + $0x80] sm:$0xff]
    %v5167 = vld [vmem:[#allocation9 + $0x88] sm:$0xff]
    %v5168 = vld [vmem:[#allocation9 + $0x90] sm:$0xff]
    %v5169 = vld [vmem:[#allocation9 + $0x98] sm:$0xff]
    %v5170 = vld [vmem:[#allocation9 + $0xa0] sm:$0xff]
    %v5171 = vld [vmem:[#allocation9 + $0xa8] sm:$0xff]
    %v5172 = vld [vmem:[#allocation9 + $0xb0] sm:$0xff]
    %v5173 = vld [vmem:[#allocation9 + $0xb8] sm:$0xff]
    %v5174 = vld [vmem:[#allocation9 + $0xc0] sm:$0xff]
    %v5175 = vld [vmem:[#allocation9 + $0xc8] sm:$0xff]
    %v5176 = vld [vmem:[#allocation9 + $0xd0] sm:$0xff]
    %v5177 = vld [vmem:[#allocation9 + $0xd8] sm:$0xff]
    %v5178 = vld [vmem:[#allocation9 + $0xe0] sm:$0xff]
    %v5179 = vld [vmem:[#allocation9 + $0xe8] sm:$0xff]
    %v5180 = vld [vmem:[#allocation9 + $0xf0] sm:$0xff]
    %v5181 = vld [vmem:[#allocation9 + $0xf8] sm:$0xff]
    %v5182 = vld [vmem:[#allocation9 + $0x100] sm:$0xff]
    %v5183 = vld [vmem:[#allocation9 + $0x108] sm:$0xff]
    %v5184 = vld [vmem:[#allocation9 + $0x110] sm:$0xff]
    %v5185 = vld [vmem:[#allocation9 + $0x118] sm:$0xff]
    %v5186 = vld [vmem:[#allocation9 + $0x120] sm:$0xff]
    %v5187 = vld [vmem:[#allocation9 + $0x128] sm:$0xff]
    %v5188 = vld [vmem:[#allocation9 + $0x130] sm:$0xff]
    %v5189 = vld [vmem:[#allocation9 + $0x138] sm:$0xff]
    %v5190 = vld [vmem:[#allocation9 + $0x140] sm:$0xff]
    %v5191 = vld [vmem:[#allocation9 + $0x148] sm:$0xff]
    %v5192 = vld [vmem:[#allocation9 + $0x150] sm:$0xff]
    %v5193 = vld [vmem:[#allocation9 + $0x158] sm:$0xff]
    %v5194 = vld [vmem:[#allocation9 + $0x160] sm:$0xff]
    %v5195 = vld [vmem:[#allocation9 + $0x168] sm:$0xff]
    %v5196 = vld [vmem:[#allocation9 + $0x170] sm:$0xff]
    %v5197 = vld [vmem:[#allocation9 + $0x178] sm:$0xff]
    %v5198 = vld [vmem:[#allocation9 + $0x180] sm:$0xff]
    %v5199 = vld [vmem:[#allocation9 + $0x188] sm:$0xff]
    %v5200 = vld [vmem:[#allocation9 + $0x190] sm:$0xff]
    %v5201 = vld [vmem:[#allocation9 + $0x198] sm:$0xff]
    %v5202 = vld [vmem:[#allocation9 + $0x1a0] sm:$0xff]
    %v5203 = vld [vmem:[#allocation9 + $0x1a8] sm:$0xff]
    %v5204 = vld [vmem:[#allocation9 + $0x1b0] sm:$0xff]
    %v5205 = vld [vmem:[#allocation9 + $0x1b8] sm:$0xff]
    %v5206 = vld [vmem:[#allocation9 + $0x1c0] sm:$0xff]
    %v5207 = vld [vmem:[#allocation9 + $0x1c8] sm:$0xff]
    %v5208 = vld [vmem:[#allocation9 + $0x1d0] sm:$0xff]
    %v5209 = vld [vmem:[#allocation9 + $0x1d8] sm:$0xff]
    %v5210 = vld [vmem:[#allocation9 + $0x1e0] sm:$0xff]
    %v5211 = vld [vmem:[#allocation9 + $0x1e8] sm:$0xff]
    %v5212 = vld [vmem:[#allocation9 + $0x1f0] sm:$0xff]
    %v5213 = vld [vmem:[#allocation9 + $0x1f8] sm:$0xff]
    %v5214 = vld [vmem:[#allocation10] sm:$0x3]
    %v5216 = vlaneseq
    %v5217 = vshrl.u32 %v5216, 7
    %v5218 = vsub.s32 0, %v5217
    %v5219 = vrot.slane %v5214, %v5218
    %v5220 = vlaneseq
    %v5221 = vshrl.u32 %v5220, 7
    %v5222 = vsub.s32 1, %v5221
    %v5223 = vrot.slane %v5214, %v5222
    %v5290 = vunpack.c.l.b16 %v5150
    %v5291 = vunpack.c.h.b16 %v5150
    %v5292 = vunpack.c.l.b16 %v5151
    %v5293 = vunpack.c.h.b16 %v5151
    %v5294 = vunpack.c.l.b16 %v5152
    %v5295 = vunpack.c.h.b16 %v5152
    %v5296 = vunpack.c.l.b16 %v5153
    %v5297 = vunpack.c.h.b16 %v5153
    %v5298 = vunpack.c.l.b16 %v5154
    %v5299 = vunpack.c.h.b16 %v5154
    %v5300 = vunpack.c.l.b16 %v5155
    %v5301 = vunpack.c.h.b16 %v5155
    %v5302 = vunpack.c.l.b16 %v5156
    %v5303 = vunpack.c.h.b16 %v5156
    %v5304 = vunpack.c.l.b16 %v5157
    %v5305 = vunpack.c.h.b16 %v5157
    %v5306 = vunpack.c.l.b16 %v5158
    %v5307 = vunpack.c.h.b16 %v5158
    %v5308 = vunpack.c.l.b16 %v5159
    %v5309 = vunpack.c.h.b16 %v5159
    %v5310 = vunpack.c.l.b16 %v5160
    %v5311 = vunpack.c.h.b16 %v5160
    %v5312 = vunpack.c.l.b16 %v5161
    %v5313 = vunpack.c.h.b16 %v5161
    %v5314 = vunpack.c.l.b16 %v5162
    %v5315 = vunpack.c.h.b16 %v5162
    %v5316 = vunpack.c.l.b16 %v5163
    %v5317 = vunpack.c.h.b16 %v5163
    %v5318 = vunpack.c.l.b16 %v5164
    %v5319 = vunpack.c.h.b16 %v5164
    %v5320 = vunpack.c.l.b16 %v5165
    %v5321 = vunpack.c.h.b16 %v5165
    %v5322 = vunpack.c.l.b16 %v5166
    %v5323 = vunpack.c.h.b16 %v5166
    %v5324 = vunpack.c.l.b16 %v5167
    %v5325 = vunpack.c.h.b16 %v5167
    %v5326 = vunpack.c.l.b16 %v5168
    %v5327 = vunpack.c.h.b16 %v5168
    %v5328 = vunpack.c.l.b16 %v5169
    %v5329 = vunpack.c.h.b16 %v5169
    %v5330 = vunpack.c.l.b16 %v5170
    %v5331 = vunpack.c.h.b16 %v5170
    %v5332 = vunpack.c.l.b16 %v5171
    %v5333 = vunpack.c.h.b16 %v5171
    %v5334 = vunpack.c.l.b16 %v5172
    %v5335 = vunpack.c.h.b16 %v5172
    %v5336 = vunpack.c.l.b16 %v5173
    %v5337 = vunpack.c.h.b16 %v5173
    %v5338 = vunpack.c.l.b16 %v5174
    %v5339 = vunpack.c.h.b16 %v5174
    %v5340 = vunpack.c.l.b16 %v5175
    %v5341 = vunpack.c.h.b16 %v5175
    %v5342 = vunpack.c.l.b16 %v5176
    %v5343 = vunpack.c.h.b16 %v5176
    %v5344 = vunpack.c.l.b16 %v5177
    %v5345 = vunpack.c.h.b16 %v5177
    %v5346 = vunpack.c.l.b16 %v5178
    %v5347 = vunpack.c.h.b16 %v5178
    %v5348 = vunpack.c.l.b16 %v5179
    %v5349 = vunpack.c.h.b16 %v5179
    %v5350 = vunpack.c.l.b16 %v5180
    %v5351 = vunpack.c.h.b16 %v5180
    %v5352 = vunpack.c.l.b16 %v5181
    %v5353 = vunpack.c.h.b16 %v5181
    %v5354 = vunpack.c.l.b16 %v5182
    %v5355 = vunpack.c.h.b16 %v5182
    %v5356 = vunpack.c.l.b16 %v5183
    %v5357 = vunpack.c.h.b16 %v5183
    %v5358 = vunpack.c.l.b16 %v5184
    %v5359 = vunpack.c.h.b16 %v5184
    %v5360 = vunpack.c.l.b16 %v5185
    %v5361 = vunpack.c.h.b16 %v5185
    %v5362 = vunpack.c.l.b16 %v5186
    %v5363 = vunpack.c.h.b16 %v5186
    %v5364 = vunpack.c.l.b16 %v5187
    %v5365 = vunpack.c.h.b16 %v5187
    %v5366 = vunpack.c.l.b16 %v5188
    %v5367 = vunpack.c.h.b16 %v5188
    %v5368 = vunpack.c.l.b16 %v5189
    %v5369 = vunpack.c.h.b16 %v5189
    %v5370 = vunpack.c.l.b16 %v5190
    %v5371 = vunpack.c.h.b16 %v5190
    %v5372 = vunpack.c.l.b16 %v5191
    %v5373 = vunpack.c.h.b16 %v5191
    %v5374 = vunpack.c.l.b16 %v5192
    %v5375 = vunpack.c.h.b16 %v5192
    %v5376 = vunpack.c.l.b16 %v5193
    %v5377 = vunpack.c.h.b16 %v5193
    %v5378 = vunpack.c.l.b16 %v5194
    %v5379 = vunpack.c.h.b16 %v5194
    %v5380 = vunpack.c.l.b16 %v5195
    %v5381 = vunpack.c.h.b16 %v5195
    %v5382 = vunpack.c.l.b16 %v5196
    %v5383 = vunpack.c.h.b16 %v5196
    %v5384 = vunpack.c.l.b16 %v5197
    %v5385 = vunpack.c.h.b16 %v5197
    %v5386 = vunpack.c.l.b16 %v5198
    %v5387 = vunpack.c.h.b16 %v5198
    %v5388 = vunpack.c.l.b16 %v5199
    %v5389 = vunpack.c.h.b16 %v5199
    %v5390 = vunpack.c.l.b16 %v5200
    %v5391 = vunpack.c.h.b16 %v5200
    %v5392 = vunpack.c.l.b16 %v5201
    %v5393 = vunpack.c.h.b16 %v5201
    %v5394 = vunpack.c.l.b16 %v5202
    %v5395 = vunpack.c.h.b16 %v5202
    %v5396 = vunpack.c.l.b16 %v5203
    %v5397 = vunpack.c.h.b16 %v5203
    %v5398 = vunpack.c.l.b16 %v5204
    %v5399 = vunpack.c.h.b16 %v5204
    %v5400 = vunpack.c.l.b16 %v5205
    %v5401 = vunpack.c.h.b16 %v5205
    %v5402 = vunpack.c.l.b16 %v5206
    %v5403 = vunpack.c.h.b16 %v5206
    %v5404 = vunpack.c.l.b16 %v5207
    %v5405 = vunpack.c.h.b16 %v5207
    %v5406 = vunpack.c.l.b16 %v5208
    %v5407 = vunpack.c.h.b16 %v5208
    %v5408 = vunpack.c.l.b16 %v5209
    %v5409 = vunpack.c.h.b16 %v5209
    %v5410 = vunpack.c.l.b16 %v5210
    %v5411 = vunpack.c.h.b16 %v5210
    %v5412 = vunpack.c.l.b16 %v5211
    %v5413 = vunpack.c.h.b16 %v5211
    %v5414 = vunpack.c.l.b16 %v5212
    %v5415 = vunpack.c.h.b16 %v5212
    %v5416 = vunpack.c.l.b16 %v5213
    %v5417 = vunpack.c.h.b16 %v5213
    %v5418 = vpack.c.b16 %v5292, %v5290
    %v5419 = vpack.c.b16 %v5293, %v5291
    %v5420 = vpack.c.b16 %v5296, %v5294
    %v5421 = vpack.c.b16 %v5297, %v5295
    %v5422 = vpack.c.b16 %v5300, %v5298
    %v5423 = vpack.c.b16 %v5301, %v5299
    %v5424 = vpack.c.b16 %v5304, %v5302
    %v5425 = vpack.c.b16 %v5305, %v5303
    %v5426 = vpack.c.b16 %v5308, %v5306
    %v5427 = vpack.c.b16 %v5309, %v5307
    %v5428 = vpack.c.b16 %v5312, %v5310
    %v5429 = vpack.c.b16 %v5313, %v5311
    %v5430 = vpack.c.b16 %v5316, %v5314
    %v5431 = vpack.c.b16 %v5317, %v5315
    %v5432 = vpack.c.b16 %v5320, %v5318
    %v5433 = vpack.c.b16 %v5321, %v5319
    %v5434 = vpack.c.b16 %v5324, %v5322
    %v5435 = vpack.c.b16 %v5325, %v5323
    %v5436 = vpack.c.b16 %v5328, %v5326
    %v5437 = vpack.c.b16 %v5329, %v5327
    %v5438 = vpack.c.b16 %v5332, %v5330
    %v5439 = vpack.c.b16 %v5333, %v5331
    %v5440 = vpack.c.b16 %v5336, %v5334
    %v5441 = vpack.c.b16 %v5337, %v5335
    %v5442 = vpack.c.b16 %v5340, %v5338
    %v5443 = vpack.c.b16 %v5341, %v5339
    %v5444 = vpack.c.b16 %v5344, %v5342
    %v5445 = vpack.c.b16 %v5345, %v5343
    %v5446 = vpack.c.b16 %v5348, %v5346
    %v5447 = vpack.c.b16 %v5349, %v5347
    %v5448 = vpack.c.b16 %v5352, %v5350
    %v5449 = vpack.c.b16 %v5353, %v5351
    %v5450 = vpack.c.b16 %v5356, %v5354
    %v5451 = vpack.c.b16 %v5357, %v5355
    %v5452 = vpack.c.b16 %v5360, %v5358
    %v5453 = vpack.c.b16 %v5361, %v5359
    %v5454 = vpack.c.b16 %v5364, %v5362
    %v5455 = vpack.c.b16 %v5365, %v5363
    %v5456 = vpack.c.b16 %v5368, %v5366
    %v5457 = vpack.c.b16 %v5369, %v5367
    %v5458 = vpack.c.b16 %v5372, %v5370
    %v5459 = vpack.c.b16 %v5373, %v5371
    %v5460 = vpack.c.b16 %v5376, %v5374
    %v5461 = vpack.c.b16 %v5377, %v5375
    %v5462 = vpack.c.b16 %v5380, %v5378
    %v5463 = vpack.c.b16 %v5381, %v5379
    %v5464 = vpack.c.b16 %v5384, %v5382
    %v5465 = vpack.c.b16 %v5385, %v5383
    %v5466 = vpack.c.b16 %v5388, %v5386
    %v5467 = vpack.c.b16 %v5389, %v5387
    %v5468 = vpack.c.b16 %v5392, %v5390
    %v5469 = vpack.c.b16 %v5393, %v5391
    %v5470 = vpack.c.b16 %v5396, %v5394
    %v5471 = vpack.c.b16 %v5397, %v5395
    %v5472 = vpack.c.b16 %v5400, %v5398
    %v5473 = vpack.c.b16 %v5401, %v5399
    %v5474 = vpack.c.b16 %v5404, %v5402
    %v5475 = vpack.c.b16 %v5405, %v5403
    %v5476 = vpack.c.b16 %v5408, %v5406
    %v5477 = vpack.c.b16 %v5409, %v5407
    %v5478 = vpack.c.b16 %v5412, %v5410
    %v5479 = vpack.c.b16 %v5413, %v5411
    %v5480 = vpack.c.b16 %v5416, %v5414
    %v5481 = vpack.c.b16 %v5417, %v5415
    %5546 = vmatprep.subr.bf16.mxu0 %v5419
    %5547 = vmatpush1.bf16.msra.mxu0 %v5418
    %5548 = vmatprep.subr.bf16.mxu0 %v5421
    %5549 = vmatpush1.bf16.msra.mxu0 %v5420
    %5550 = vmatprep.subr.bf16.mxu0 %v5423
    %5551 = vmatpush1.bf16.msra.mxu0 %v5422
    %5552 = vmatprep.subr.bf16.mxu0 %v5425
    %5553 = vmatpush1.bf16.msra.mxu0 %v5424
    %5554 = vmatprep.subr.bf16.mxu0 %v5427
    %5555 = vmatpush1.bf16.msra.mxu0 %v5426
    %5556 = vmatprep.subr.bf16.mxu0 %v5429
    %5557 = vmatpush1.bf16.msra.mxu0 %v5428
    %5558 = vmatprep.subr.bf16.mxu0 %v5431
    %5559 = vmatpush1.bf16.msra.mxu0 %v5430
    %5560 = vmatprep.subr.bf16.mxu0 %v5433
    %5561 = vmatpush1.bf16.msra.mxu0 %v5432
    %5562 = vmatprep.subr.bf16.mxu0 %v5435
    %5563 = vmatpush1.bf16.msra.mxu0 %v5434
    %5564 = vmatprep.subr.bf16.mxu0 %v5437
    %5565 = vmatpush1.bf16.msra.mxu0 %v5436
    %5566 = vmatprep.subr.bf16.mxu0 %v5439
    %5567 = vmatpush1.bf16.msra.mxu0 %v5438
    %5568 = vmatprep.subr.bf16.mxu0 %v5441
    %5569 = vmatpush1.bf16.msra.mxu0 %v5440
    %5570 = vmatprep.subr.bf16.mxu0 %v5443
    %5571 = vmatpush1.bf16.msra.mxu0 %v5442
    %5572 = vmatprep.subr.bf16.mxu0 %v5445
    %5573 = vmatpush1.bf16.msra.mxu0 %v5444
    %5574 = vmatprep.subr.bf16.mxu0 %v5447
    %5575 = vmatpush1.bf16.msra.mxu0 %v5446
    %5576 = vmatprep.subr.bf16.mxu0 %v5449
    %5577 = vmatpush1.bf16.msra.mxu0 %v5448
    %5578 = vmatprep.mubr.bf16.mxu0 %v5147
    %5579 = vmatmul.mubr.bf16.gmra.mrb[0].mxu0 %v5146
    %v5580 = vpop.f32.mrb[0].mxu0
    %v5581 = vadd.f32 %v5219, %v5580
    %v5582 = vpop.f32.mrb[0].mxu0
    %v5583 = vadd.f32 %v5223, %v5582
    %v5584 = vpop.f32.mrb[0].mxu0
    %v5585 = vpop.f32.mrb[0].mxu0
    %5586 = vdwg.mxu0
    %5587 = vmatprep.subr.bf16.mxu0 %v5451
    %5588 = vmatpush1.bf16.msra.mxu0 %v5450
    %5589 = vmatprep.subr.bf16.mxu0 %v5453
    %5590 = vmatpush1.bf16.msra.mxu0 %v5452
    %5591 = vmatprep.subr.bf16.mxu0 %v5455
    %5592 = vmatpush1.bf16.msra.mxu0 %v5454
    %5593 = vmatprep.subr.bf16.mxu0 %v5457
    %5594 = vmatpush1.bf16.msra.mxu0 %v5456
    %5595 = vmatprep.subr.bf16.mxu0 %v5459
    %5596 = vmatpush1.bf16.msra.mxu0 %v5458
    %5597 = vmatprep.subr.bf16.mxu0 %v5461
    %5598 = vmatpush1.bf16.msra.mxu0 %v5460
    %5599 = vmatprep.subr.bf16.mxu0 %v5463
    %5600 = vmatpush1.bf16.msra.mxu0 %v5462
    %5601 = vmatprep.subr.bf16.mxu0 %v5465
    %5602 = vmatpush1.bf16.msra.mxu0 %v5464
    %5603 = vmatprep.subr.bf16.mxu0 %v5467
    %5604 = vmatpush1.bf16.msra.mxu0 %v5466
    %5605 = vmatprep.subr.bf16.mxu0 %v5469
    %5606 = vmatpush1.bf16.msra.mxu0 %v5468
    %5607 = vmatprep.subr.bf16.mxu0 %v5471
    %5608 = vmatpush1.bf16.msra.mxu0 %v5470
    %5609 = vmatprep.subr.bf16.mxu0 %v5473
    %5610 = vmatpush1.bf16.msra.mxu0 %v5472
    %5611 = vmatprep.subr.bf16.mxu0 %v5475
    %5612 = vmatpush1.bf16.msra.mxu0 %v5474
    %5613 = vmatprep.subr.bf16.mxu0 %v5477
    %5614 = vmatpush1.bf16.msra.mxu0 %v5476
    %5615 = vmatprep.subr.bf16.mxu0 %v5479
    %5616 = vmatpush1.bf16.msra.mxu0 %v5478
    %5617 = vmatprep.subr.bf16.mxu0 %v5481
    %5618 = vmatpush1.bf16.msra.mxu0 %v5480
    %5619 = vmatprep.mubr.bf16.mxu0 %v5149
    %5620 = vmatmul.mubr.bf16.gmra.mrb[0].mxu0 %v5148
    %v5621 = vpop.f32.mrb[0].mxu0
    %v5622 = vadd.f32 %v5581, %v5621
    %v5623 = vpop.f32.mrb[0].mxu0
    %v5624 = vadd.f32 %v5583, %v5623
    %v5625 = vpop.f32.mrb[0].mxu0
    %v5626 = vpop.f32.mrb[0].mxu0
    %5627 = vdwg.mxu0
    %vm5628 = vcmp.ge.f32.partialorder %v5622, 0.0
    %vm5629 = vcmp.ge.f32.partialorder %v5624, 0.0
    %v5630 = vmul.f32 %v5622, 0.01
    %v5631 = vmul.f32 %v5624, 0.01
    %v5632 = vsel %vm5628, %v5622, %v5630
    %v5633 = vsel %vm5629, %v5624, %v5631
    %v5634 = vpack.c.bf16 %v5632, %v5632
    %v5635 = vpack.c.bf16 %v5633, %v5633
    %v5636 = vld [vmem:[#allocation12] sm:$0xf]
    %v5637 = vld [vmem:[#allocation12 + $0x4] sm:$0xf]
    %v5638 = vld [vmem:[#allocation12 + $0x8] sm:$0xf]
    %v5639 = vld [vmem:[#allocation12 + $0xc] sm:$0xf]
    %v5640 = vld [vmem:[#allocation12 + $0x10] sm:$0xf]
    %v5641 = vld [vmem:[#allocation12 + $0x14] sm:$0xf]
    %v5642 = vld [vmem:[#allocation12 + $0x18] sm:$0xf]
    %v5643 = vld [vmem:[#allocation12 + $0x1c] sm:$0xf]
    %v5644 = vld [vmem:[#allocation12 + $0x20] sm:$0xf]
    %v5645 = vld [vmem:[#allocation12 + $0x24] sm:$0xf]
    %v5646 = vld [vmem:[#allocation12 + $0x28] sm:$0xf]
    %v5647 = vld [vmem:[#allocation12 + $0x2c] sm:$0xf]
    %v5648 = vld [vmem:[#allocation12 + $0x30] sm:$0xf]
    %v5649 = vld [vmem:[#allocation12 + $0x34] sm:$0xf]
    %v5650 = vld [vmem:[#allocation12 + $0x38] sm:$0xf]
    %v5651 = vld [vmem:[#allocation12 + $0x3c] sm:$0xf]
    %v5652 = vld [vmem:[#allocation12 + $0x40] sm:$0xf]
    %v5653 = vld [vmem:[#allocation12 + $0x44] sm:$0xf]
    %v5654 = vld [vmem:[#allocation12 + $0x48] sm:$0xf]
    %v5655 = vld [vmem:[#allocation12 + $0x4c] sm:$0xf]
    %v5656 = vld [vmem:[#allocation12 + $0x50] sm:$0xf]
    %v5657 = vld [vmem:[#allocation12 + $0x54] sm:$0xf]
    %v5658 = vld [vmem:[#allocation12 + $0x58] sm:$0xf]
    %v5659 = vld [vmem:[#allocation12 + $0x5c] sm:$0xf]
    %v5660 = vld [vmem:[#allocation12 + $0x60] sm:$0xf]
    %v5661 = vld [vmem:[#allocation12 + $0x64] sm:$0xf]
    %v5662 = vld [vmem:[#allocation12 + $0x68] sm:$0xf]
    %v5663 = vld [vmem:[#allocation12 + $0x6c] sm:$0xf]
    %v5664 = vld [vmem:[#allocation12 + $0x70] sm:$0xf]
    %v5665 = vld [vmem:[#allocation12 + $0x74] sm:$0xf]
    %v5666 = vld [vmem:[#allocation12 + $0x78] sm:$0xf]
    %v5667 = vld [vmem:[#allocation12 + $0x7c] sm:$0xf]
    %v5668 = vld [vmem:[#allocation13] sm:$0x1]
    %v5670 = vlaneseq
    %v5671 = vshrl.u32 %v5670, 7
    %v5672 = vsub.s32 0, %v5671
    %v5673 = vrot.slane %v5668, %v5672
    %v5707 = vunpack.c.l.b16 %v5636
    %v5708 = vunpack.c.l.b16 %v5637
    %v5709 = vunpack.c.l.b16 %v5638
    %v5710 = vunpack.c.l.b16 %v5639
    %v5711 = vunpack.c.l.b16 %v5640
    %v5712 = vunpack.c.l.b16 %v5641
    %v5713 = vunpack.c.l.b16 %v5642
    %v5714 = vunpack.c.l.b16 %v5643
    %v5715 = vunpack.c.l.b16 %v5644
    %v5716 = vunpack.c.l.b16 %v5645
    %v5717 = vunpack.c.l.b16 %v5646
    %v5718 = vunpack.c.l.b16 %v5647
    %v5719 = vunpack.c.l.b16 %v5648
    %v5720 = vunpack.c.l.b16 %v5649
    %v5721 = vunpack.c.l.b16 %v5650
    %v5722 = vunpack.c.l.b16 %v5651
    %v5723 = vunpack.c.l.b16 %v5652
    %v5724 = vunpack.c.l.b16 %v5653
    %v5725 = vunpack.c.l.b16 %v5654
    %v5726 = vunpack.c.l.b16 %v5655
    %v5727 = vunpack.c.l.b16 %v5656
    %v5728 = vunpack.c.l.b16 %v5657
    %v5729 = vunpack.c.l.b16 %v5658
    %v5730 = vunpack.c.l.b16 %v5659
    %v5731 = vunpack.c.l.b16 %v5660
    %v5732 = vunpack.c.l.b16 %v5661
    %v5733 = vunpack.c.l.b16 %v5662
    %v5734 = vunpack.c.l.b16 %v5663
    %v5735 = vunpack.c.l.b16 %v5664
    %v5736 = vunpack.c.l.b16 %v5665
    %v5737 = vunpack.c.l.b16 %v5666
    %v5738 = vunpack.c.l.b16 %v5667
    %v5739 = vpack.c.b16 %v5708, %v5707
    %v5740 = vpack.c.b16 %v5710, %v5709
    %v5741 = vpack.c.b16 %v5712, %v5711
    %v5742 = vpack.c.b16 %v5714, %v5713
    %v5743 = vpack.c.b16 %v5716, %v5715
    %v5744 = vpack.c.b16 %v5718, %v5717
    %v5745 = vpack.c.b16 %v5720, %v5719
    %v5746 = vpack.c.b16 %v5722, %v5721
    %v5747 = vpack.c.b16 %v5724, %v5723
    %v5748 = vpack.c.b16 %v5726, %v5725
    %v5749 = vpack.c.b16 %v5728, %v5727
    %v5750 = vpack.c.b16 %v5730, %v5729
    %v5751 = vpack.c.b16 %v5732, %v5731
    %v5752 = vpack.c.b16 %v5734, %v5733
    %v5753 = vpack.c.b16 %v5736, %v5735
    %v5754 = vpack.c.b16 %v5738, %v5737
    %5771 = vmatprep.subr.bf16.mxu0 0
    %5772 = vmatpush1.bf16.msra.mxu0 %v5739
    %5773 = vmatprep.subr.bf16.mxu0 0
    %5774 = vmatpush1.bf16.msra.mxu0 %v5740
    %5775 = vmatprep.subr.bf16.mxu0 0
    %5776 = vmatpush1.bf16.msra.mxu0 %v5741
    %5777 = vmatprep.subr.bf16.mxu0 0
    %5778 = vmatpush1.bf16.msra.mxu0 %v5742
    %5779 = vmatprep.subr.bf16.mxu0 0
    %5780 = vmatpush1.bf16.msra.mxu0 %v5743
    %5781 = vmatprep.subr.bf16.mxu0 0
    %5782 = vmatpush1.bf16.msra.mxu0 %v5744
    %5783 = vmatprep.subr.bf16.mxu0 0
    %5784 = vmatpush1.bf16.msra.mxu0 %v5745
    %5785 = vmatprep.subr.bf16.mxu0 0
    %5786 = vmatpush1.bf16.msra.mxu0 %v5746
    %5787 = vmatprep.subr.bf16.mxu0 0
    %5788 = vmatpush1.bf16.msra.mxu0 %v5747
    %5789 = vmatprep.subr.bf16.mxu0 0
    %5790 = vmatpush1.bf16.msra.mxu0 %v5748
    %5791 = vmatprep.subr.bf16.mxu0 0
    %5792 = vmatpush1.bf16.msra.mxu0 %v5749
    %5793 = vmatprep.subr.bf16.mxu0 0
    %5794 = vmatpush1.bf16.msra.mxu0 %v5750
    %5795 = vmatprep.subr.bf16.mxu0 0
    %5796 = vmatpush1.bf16.msra.mxu0 %v5751
    %5797 = vmatprep.subr.bf16.mxu0 0
    %5798 = vmatpush1.bf16.msra.mxu0 %v5752
    %5799 = vmatprep.subr.bf16.mxu0 0
    %5800 = vmatpush1.bf16.msra.mxu0 %v5753
    %5801 = vmatprep.subr.bf16.mxu0 0
    %5802 = vmatpush1.bf16.msra.mxu0 %v5754
    %5803 = vmatprep.mubr.bf16.mxu0 %v5635
    %5804 = vmatmul.mubr.bf16.gmra.mrb[0].mxu0 %v5634
    %v5805 = vpop.f32.mrb[0].mxu0
    %v5806 = vadd.f32 %v5673, %v5805
    %v5807 = vpop.f32.mrb[0].mxu0
    %v5808 = vpop.f32.mrb[0].mxu0
    %v5809 = vpop.f32.mrb[0].mxu0
    %5810 = vdwg.mxu0
    %5811 = vst [vmem:[%s9] sm:$0xff] %v5806
    // Predicated region
    $region70: #{discriminator_forward.1} parent=1 // pred_check
      _
    $region71: #{discriminator_forward.1} parent=1 // pred_check_branch
      %5813 = sbr.rel (0) target = $region73
    $region72: #{discriminator_forward.1} parent=1 // pred_region
      _
    $region73: #{discriminator_forward.1} parent=1 // pred_fallthru
      _
    // Predicated region
    $region74: #{discriminator_forward.1} parent=1 // pred_check
      _
    $region75: #{discriminator_forward.1} parent=1 // pred_check_branch
      %5815 = sbr.rel (0) target = $region77
    $region76: #{discriminator_forward.1} parent=1 // pred_region
      _
    $region77: #{discriminator_forward.1} parent=1 // pred_fallthru
      _
    %5816 = vsyncpa [#allocation3], 1
    %5817 = vsyncpa [#allocation5], 1
    %5818 = vsyncpa [#allocation8], 1
    %5819 = vsyncpa [#allocation11], 1
    %5820 = vsyncpa [#allocation14], 1

</llo_original>
